<compile_context>
chip_gen: v7x
topology: tpu7x:2x2x1
jax: 0.10.0
libtpu: 0.0.40
codegen_flags: <defaults>
</compile_context>

<pallas_src>
import jax
import jax.numpy as jnp
from jax.experimental import pallas as pl
from jax.experimental.pallas import tpu as pltpu

f32 = jnp.float32
bf16 = jnp.bfloat16


def _round_up(x, m):
    return (x + m - 1) // m * m


# ----------------------------------------------------------------------------
# Kernel A: full decoder step for one batch tile + online softmax stats over
# the vocab-tile sweep.  Grid = (batch_tiles, vocab_tiles), vocab innermost.
# ----------------------------------------------------------------------------
def decoder_stats_kernel(
    # activations (blocked on the batch tile, reused across vocab tiles)
    yemb_ref,    # (TB, E)    f32
    ct1_ref,     # (TB, R)    f32
    st1_ref,     # (TB, R)    f32
    enc_ref,     # (TB, S, R) f32
    emask_ref,   # (TB, S)    f32
    qmem_ref,    # (TB, N, R) f32
    qmask_ref,   # (TB, N)    f32
    # weights (resident; constant index map)
    wx_c_ref, wx_y_ref, bx_ref,            # (R,R) (E,R) bf16, (1,R) f32
    wih_ref, whh_ref, bih_ref, bhh_ref,    # (R,3R) (R,3R) bf16, (1,3R) f32 x2
    wq_ref, wsrc_ref,                      # (R,R) bf16  (PyTorch (trg,enc) layout)
    wo1_s_ref, wo1_c_ref, bo1_ref,         # (R,R) (R,R) bf16, (1,R) f32
    # vocab-tiled out2
    wo2_ref,     # (R, TV) bf16
    bo2_ref,     # (1, TV) f32  (-1e30 on copy-only / padding lanes)
    # output: lane-dense packed per-row results [s_t | c_t | o1 | attn | m | l | 0]
    packed_ref,  # (TB, PACK) f32
    # scratch (persists across the vocab-tile sweep)
    st_s, ct_s, o1_s, attn_s, m_s, l_s,
):
    vt = pl.program_id(1)
    n_vt = pl.num_programs(1)
    R = st1_ref.shape[-1]

    @pl.when(vt == 0)
    def _decoder_core():
        def gru_cell(x, h):
            # PyTorch GRU gate order [r, z, n]; gate math kept in f32.
            gi = jnp.dot(x.astype(bf16), wih_ref[...],
                         preferred_element_type=f32) + bih_ref[...]
            gh = jnp.dot(h.astype(bf16), whh_ref[...],
                         preferred_element_type=f32) + bhh_ref[...]
            r = jax.nn.sigmoid(gi[:, 0:R] + gh[:, 0:R])
            z = jax.nn.sigmoid(gi[:, R:2 * R] + gh[:, R:2 * R])
            n = jnp.tanh(gi[:, 2 * R:3 * R] + r * gh[:, 2 * R:3 * R])
            return (1.0 - z) * n + z * h

        def attend(q, kv_ref, mask, w_ref):
            # Attention(method='general'), re-associated: scores = (q @ W) . K
            kv = kv_ref[...].astype(bf16)                                  # (TB,L,R)
            qw = jnp.dot(q.astype(bf16), w_ref[...], preferred_element_type=f32)
            sc = jnp.einsum('bqr,blr->bql', qw.astype(bf16)[:, None, :], kv,
                            preferred_element_type=f32)[:, 0, :]           # (TB,L)
            # masked_softmax (binary mask; single application is equivalent)
            xm = sc * mask
            ex = jnp.exp(xm - jnp.max(xm, axis=-1, keepdims=True)) * mask
            w = ex / (jnp.sum(ex, axis=-1, keepdims=True) + 1e-6)
            ctx = jnp.einsum('bql,blr->bqr', w.astype(bf16)[:, None, :], kv,
                             preferred_element_type=f32)[:, 0, :]          # (TB,R)
            return ctx, w

        # x = x_context(cat(c_t_1, y_embd))   (weight split to avoid the concat)
        x = (jnp.dot(ct1_ref[...].astype(bf16), wx_c_ref[...],
                     preferred_element_type=f32)
             + jnp.dot(yemb_ref[...].astype(bf16), wx_y_ref[...],
                       preferred_element_type=f32)
             + bx_ref[...])
        h1 = gru_cell(x, st1_ref[...])                                 # gru(x, s_t_1)
        c_mem, _ = attend(h1, qmem_ref, qmask_ref[...], wq_ref)        # ntm.Read(s_t)
        h2 = gru_cell(c_mem, h1)                                       # gru(c_t, s_t)
        c_t, attn_w = attend(h2, enc_ref, emask_ref[...], wsrc_ref)    # read_src
        o1 = (jnp.dot(h2.astype(bf16), wo1_s_ref[...], preferred_element_type=f32)
              + jnp.dot(c_t.astype(bf16), wo1_c_ref[...], preferred_element_type=f32)
              + bo1_ref[...])
        st_s[...] = h2
        ct_s[...] = c_t
        o1_s[...] = o1
        attn_s[...] = attn_w
        m_s[...] = jnp.full(m_s.shape, -1e37, f32)
        l_s[...] = jnp.zeros(l_s.shape, f32)

    # online softmax statistics for this vocab tile
    logits = (jnp.dot(o1_s[...].astype(bf16), wo2_ref[...],
                      preferred_element_type=f32) + bo2_ref[...])          # (TB,TV)
    m_prev = m_s[...]
    m_new = jnp.maximum(m_prev, jnp.max(logits, axis=-1, keepdims=True))
    l_s[...] = (jnp.exp(m_prev - m_new) * l_s[...]
                + jnp.sum(jnp.exp(logits - m_new), axis=-1, keepdims=True))
    m_s[...] = m_new

    @pl.when(vt == n_vt - 1)
    def _write_packed():
        S = attn_s.shape[-1]
        used = 3 * R + S + 2
        packed_ref[:, 0:R] = st_s[...]
        packed_ref[:, R:2 * R] = ct_s[...]
        packed_ref[:, 2 * R:3 * R] = o1_s[...]
        packed_ref[:, 3 * R:3 * R + S] = attn_s[...]
        packed_ref[:, 3 * R + S:3 * R + S + 1] = m_s[...]
        packed_ref[:, 3 * R + S + 1:used] = l_s[...]
        pad = packed_ref.shape[-1] - used
        if pad:  # static
            packed_ref[:, used:] = jnp.zeros((packed_ref.shape[0], pad), f32)


# ----------------------------------------------------------------------------
# Kernel B: second pass over the vocab tiles -> final distribution
#   final = 0.5 * softmax(out2(out1)) + 0.5 * scatter_add(attn, ext ids)
# ----------------------------------------------------------------------------
def final_dist_kernel(packed_ref, idx_ref, wo2_ref, bo2_ref, final_ref):
    TB, TV = final_ref.shape
    R = wo2_ref.shape[0]
    S = idx_ref.shape[-1]
    vt = pl.program_id(1)

    o1 = packed_ref[:, 2 * R:3 * R]                        # (TB, R)
    attn = packed_ref[:, 3 * R:3 * R + S]                  # (TB, S)
    m = packed_ref[:, 3 * R + S:3 * R + S + 1]             # (TB, 1)
    l = packed_ref[:, 3 * R + S + 1:3 * R + S + 2]         # (TB, 1)

    logits = (jnp.dot(o1.astype(bf16), wo2_ref[...],
                      preferred_element_type=f32) + bo2_ref[...])          # (TB,TV)
    final = (0.5 * jnp.exp(logits - m)) / l                # 0.5 * softmax tile

    # copy mechanism restricted to this vocab tile: compare+select accumulation
    # over source positions (no (S, EXTV) one-hot is ever materialized).
    idx = idx_ref[...]                                     # (TB, S) int32
    lane_ids = vt * TV + jax.lax.broadcasted_iota(jnp.int32, (TB, TV), 1)
    # TODO(synk): replace the static unroll with lax.fori_loop for long sources.
    for s in range(S):
        final = final + jnp.where(idx[:, s:s + 1] == lane_ids,
                                  0.5 * attn[:, s:s + 1], 0.0)
    final_ref[...] = final


# ----------------------------------------------------------------------------
# Wrapper / glue
# ----------------------------------------------------------------------------
def mem_decoder_step(params, y_t_1, s_t_1, encoder_outputs, enc_padding_mask,
                     c_t_1, extra_zeros, enc_batch_extend_vocab,
                     query_memory, query_mask,
                     *, batch_tile=256, vocab_tile=512):
    B, S, R = encoder_outputs.shape
    N = query_memory.shape[1]
    V = params["wo2"].shape[1]
    n_extra = extra_zeros.shape[-1]
    EXTV = V + n_extra

    TB = min(batch_tile, _round_up(B, 8))
    B_pad = _round_up(B, TB)
    TV = min(vocab_tile, _round_up(EXTV, 128))
    EXTV_pad = _round_up(EXTV, TV)
    PACK = _round_up(3 * R + S + 2, 128)
    n_bt, n_vt = B_pad // TB, EXTV_pad // TV

    def pad_rows(x):
        return jnp.pad(x, ((0, B_pad - x.shape[0]),) + ((0, 0),) * (x.ndim - 1))

    # --- glue: embedding gather, reshapes, batch/vocab padding, dtype prep ---
    # TODO(synk): the embedding lookup (a gather) stays in JAX glue.
    y_ids = pad_rows(y_t_1.astype(jnp.int32).reshape(B, 1)).reshape(B_pad)
    y_embd = jnp.take(params["embedding"], y_ids, axis=0).astype(f32)    # (B_pad,E)
    st1 = pad_rows(s_t_1.reshape(B, R).astype(f32))                      # (1,B,R)->(B_pad,R)
    ct1 = pad_rows(c_t_1.reshape(B, R).astype(f32))
    enc = pad_rows(encoder_outputs.astype(f32))
    qmem = pad_rows(query_memory.astype(f32))
    emask = pad_rows(enc_padding_mask.reshape(B, S).astype(f32))
    qmask = pad_rows(query_mask.reshape(B, N).astype(f32))
    idx = pad_rows(enc_batch_extend_vocab.astype(jnp.int32).reshape(B, S))

    # out2 extended over the padded vocab: zero weight columns + -1e30 bias on
    # the copy-only / padding lanes, so softmax(ext) == cat([softmax(V), 0]).
    # extra_zeros is identically zero in the PyTorch call path -> folded away.
    wo2_p = jnp.pad(params["wo2"], ((0, 0), (0, EXTV_pad - V))).astype(bf16)
    bo2_p = jnp.concatenate(
        [params["bo2"].astype(f32), jnp.full((1, EXTV_pad - V), -1e30, f32)],
        axis=-1)

    act_args = [y_embd, ct1, st1, enc, emask, qmem, qmask]
    w_args = [params["wx_c"].astype(bf16), params["wx_y"].astype(bf16),
              params["bx"].astype(f32),
              params["wih"].astype(bf16), params["whh"].astype(bf16),
              params["bih"].astype(f32), params["bhh"].astype(f32),
              params["wq"].astype(bf16), params["wsrc"].astype(bf16),
              params["wo1_s"].astype(bf16), params["wo1_c"].astype(bf16),
              params["bo1"].astype(f32)]

    def bt_spec(shape):   # activations: blocked on batch tile, reused across vt
        nd = len(shape)
        return pl.BlockSpec((TB,) + tuple(shape[1:]),
                            lambda bt, vt, _nd=nd: (bt,) + (0,) * (_nd - 1))

    def w_spec(shape):    # resident weights (constant index map -> fetched once)
        nd = len(shape)
        return pl.BlockSpec(tuple(shape), lambda bt, vt, _nd=nd: (0,) * _nd)

    # TODO(synk): on v7x also single-buffer the resident weight specs
    # (pipeline_mode) to halve their VMEM footprint.
    wo2_spec = pl.BlockSpec((R, TV), lambda bt, vt: (0, vt))
    bo2_spec = pl.BlockSpec((1, TV), lambda bt, vt: (0, vt))

    packed = pl.pallas_call(
        decoder_stats_kernel,
        grid=(n_bt, n_vt),
        in_specs=([bt_spec(a.shape) for a in act_args]
                  + [w_spec(a.shape) for a in w_args]
                  + [wo2_spec, bo2_spec]),
        out_specs=pl.BlockSpec((TB, PACK), lambda bt, vt: (bt, 0)),
        out_shape=jax.ShapeDtypeStruct((B_pad, PACK), f32),
        scratch_shapes=[pltpu.VMEM((TB, R), f32),    # s_t
                        pltpu.VMEM((TB, R), f32),    # c_t
                        pltpu.VMEM((TB, R), f32),    # o1
                        pltpu.VMEM((TB, S), f32),    # attn
                        pltpu.VMEM((TB, 1), f32),    # running max
                        pltpu.VMEM((TB, 1), f32)],   # running sum-exp
        compiler_params=pltpu.CompilerParams(
            dimension_semantics=("parallel", "arbitrary"),
            vmem_limit_bytes=48 * 1024 * 1024),
    )(*act_args, *w_args, wo2_p, bo2_p)

    final_pad = pl.pallas_call(
        final_dist_kernel,
        grid=(n_bt, n_vt),
        in_specs=[pl.BlockSpec((TB, PACK), lambda bt, vt: (bt, 0)),
                  pl.BlockSpec((TB, S), lambda bt, vt: (bt, 0)),
                  wo2_spec, bo2_spec],
        out_specs=pl.BlockSpec((TB, TV), lambda bt, vt: (bt, vt)),
        out_shape=jax.ShapeDtypeStruct((B_pad, EXTV_pad), f32),
        compiler_params=pltpu.CompilerParams(
            dimension_semantics=("parallel", "parallel"),
            vmem_limit_bytes=48 * 1024 * 1024),
    )(packed, idx, wo2_p, bo2_p)

    final_dist = final_pad[:B, :EXTV]
    s_t = packed[:B, 0:R].reshape(1, B, R)              # (1, B, R) like PyTorch
    c_t = packed[:B, R:2 * R].reshape(B, 1, R)
    attn_dist = packed[:B, 3 * R:3 * R + S].reshape(B, 1, S)
    return final_dist, s_t, c_t, attn_dist


# ----------------------------------------------------------------------------
# Pure-JAX f32 reference (mirrors the PyTorch forward exactly)
# ----------------------------------------------------------------------------
def mem_decoder_reference(params, y_t_1, s_t_1, encoder_outputs, enc_padding_mask,
                          c_t_1, extra_zeros, enc_batch_extend_vocab,
                          query_memory, query_mask):
    B, S, R = encoder_outputs.shape
    y_embd = jnp.take(params["embedding"], y_t_1, axis=0)

    def gru(x, h):
        gi = x @ params["wih"] + params["bih"]
        gh = h @ params["whh"] + params["bhh"]
        r = jax.nn.sigmoid(gi[:, :R] + gh[:, :R])
        z = jax.nn.sigmoid(gi[:, R:2 * R] + gh[:, R:2 * R])
        n = jnp.tanh(gi[:, 2 * R:] + r * gh[:, 2 * R:])
        return (1.0 - z) * n + z * h

    def attend(q, kv, mask, w_attn):
        e = jnp.einsum('ble,te->blt', kv, w_attn) * mask[:, :, None]
        sc = jnp.einsum('bt,blt->bl', q, e) * mask
        xm = sc * mask
        ex = jnp.exp(xm - jnp.max(xm, axis=-1, keepdims=True)) * mask
        w = ex / (jnp.sum(ex, axis=-1, keepdims=True) + 1e-6)
        return jnp.einsum('bl,blr->br', w, kv), w

    x = c_t_1.reshape(B, R) @ params["wx_c"] + y_embd @ params["wx_y"] + params["bx"]
    h1 = gru(x, s_t_1.reshape(B, R))
    c_mem, _ = attend(h1, query_memory, query_mask, params["wq"])
    h2 = gru(c_mem, h1)
    c_t, attn_w = attend(h2, encoder_outputs, enc_padding_mask, params["wsrc"])
    o1 = h2 @ params["wo1_s"] + c_t @ params["wo1_c"] + params["bo1"]
    vocab = jax.nn.softmax(o1 @ params["wo2"] + params["bo2"], axis=-1)
    final = jnp.concatenate([0.5 * vocab, extra_zeros], axis=-1)
    onehot = (enc_batch_extend_vocab[:, :, None]
              == jnp.arange(final.shape[-1])[None, None, :]).astype(f32)
    final = final + jnp.einsum('bs,bsv->bv', 0.5 * attn_w, onehot)
    return (final, h2.reshape(1, B, R), c_t.reshape(B, 1, R),
            attn_w.reshape(B, 1, S))


def init_params(key, R, E, V):
    ks = jax.random.split(key, 13)

    def u(k, shape, s=0.1):
        return jax.random.uniform(k, shape, f32, -s, s)

    # init_weights(gru): weights ~ U(-0.1, 0.1); bias zero except [n//4:n//2] = 1
    n = 3 * R
    bias3 = jnp.zeros((1, n), f32).at[0, n // 4: n // 2].set(1.0)
    return dict(
        embedding=u(ks[0], (V, E)),
        wx_c=u(ks[1], (R, R)), wx_y=u(ks[2], (E, R)), bx=u(ks[3], (1, R)),
        wih=u(ks[4], (R, 3 * R)), whh=u(ks[5], (R, 3 * R)),
        bih=bias3, bhh=bias3,
        wq=u(ks[6], (R, R)),      # ntm.read_q.W  (general attention, no bias)
        wsrc=u(ks[7], (R, R)),    # read_src.W
        wo1_s=u(ks[8], (R, R)), wo1_c=u(ks[9], (R, R)), bo1=u(ks[10], (1, R)),
        wo2=u(ks[11], (R, V)), bo2=u(ks[12], (1, V)),
    )


if __name__ == "__main__":
    B, R, E, S, N, V, EXTRA = 2, 32, 32, 8, 8, 64, 4
    key = jax.random.PRNGKey(0)
    kp, k1, k2, k3, k4, k5, k6 = jax.random.split(key, 7)
    params = init_params(kp, R, E, V)

    y_t_1 = jax.random.randint(k1, (B,), 0, V)                      # prev tokens
    s_t_1 = jax.random.normal(k2, (1, B, R), f32)                   # GRU hidden
    encoder_outputs = jax.random.normal(k3, (B, S, R), f32)
    enc_padding_mask = jnp.ones((B, S), f32).at[1, S - 2:].set(0.0)
    c_t_1 = jax.random.normal(k4, (B, 1, R), f32)
    extra_zeros = jnp.zeros((B, EXTRA), f32)
    enc_batch_extend_vocab = jax.random.randint(k5, (B, S), 0, V + EXTRA)
    query_memory = jax.random.normal(k6, (B, N, R), f32)            # ntm.set_memory
    query_mask = jnp.ones((B, N), f32)

    args = (y_t_1, s_t_1, encoder_outputs, enc_padding_mask, c_t_1,
            extra_zeros, enc_batch_extend_vocab, query_memory, query_mask)
    outs = jax.block_until_ready(mem_decoder_step(params, *args))
    final_dist, s_t, c_t, attn_dist = outs

    assert final_dist.shape == (B, V + EXTRA)
    assert s_t.shape == (1, B, R)
    assert c_t.shape == (B, 1, R)
    assert attn_dist.shape == (B, 1, S)
    assert bool(jnp.all(jnp.isfinite(final_dist)))
    # 0.5 * vocab softmax mass + 0.5 * copy-attention mass ~= 1 per row
    assert bool(jnp.allclose(jnp.sum(final_dist, axis=-1), 1.0, atol=1e-2))

    # pure-JAX f32 reference (kernel uses bf16 matmul operands, f32 accumulate)
    rf, rs, rc, ra = mem_decoder_reference(params, *args)
    assert bool(jnp.allclose(final_dist, rf, atol=4e-2))
    assert bool(jnp.allclose(s_t, rs, atol=4e-2))
    assert bool(jnp.allclose(c_t, rc, atol=4e-2))
    assert bool(jnp.allclose(attn_dist, ra, atol=4e-2))
    print("KERNEL_OK")
</pallas_src>

<mosaic_0001>
module attributes {stable_mosaic.version = 11 : i64} {
  func.func @decoder_stats_kernel(%arg0: i32, %arg1: i32, %arg2: memref<8x32xf32, #tpu.memory_space<vmem>>, %arg3: memref<8x32xf32, #tpu.memory_space<vmem>>, %arg4: memref<8x32xf32, #tpu.memory_space<vmem>>, %arg5: memref<8x8x32xf32, #tpu.memory_space<vmem>>, %arg6: memref<8x8xf32, #tpu.memory_space<vmem>>, %arg7: memref<8x8x32xf32, #tpu.memory_space<vmem>>, %arg8: memref<8x8xf32, #tpu.memory_space<vmem>>, %arg9: memref<32x32xbf16, #tpu.memory_space<vmem>>, %arg10: memref<32x32xbf16, #tpu.memory_space<vmem>>, %arg11: memref<1x32xf32, #tpu.memory_space<vmem>>, %arg12: memref<32x96xbf16, #tpu.memory_space<vmem>>, %arg13: memref<32x96xbf16, #tpu.memory_space<vmem>>, %arg14: memref<1x96xf32, #tpu.memory_space<vmem>>, %arg15: memref<1x96xf32, #tpu.memory_space<vmem>>, %arg16: memref<32x32xbf16, #tpu.memory_space<vmem>>, %arg17: memref<32x32xbf16, #tpu.memory_space<vmem>>, %arg18: memref<32x32xbf16, #tpu.memory_space<vmem>>, %arg19: memref<32x32xbf16, #tpu.memory_space<vmem>>, %arg20: memref<1x32xf32, #tpu.memory_space<vmem>>, %arg21: memref<32x128xbf16, #tpu.memory_space<vmem>>, %arg22: memref<1x128xf32, #tpu.memory_space<vmem>>, %arg23: memref<8x128xf32, #tpu.memory_space<vmem>>, %arg24: memref<8x32xf32, #tpu.memory_space<vmem>>, %arg25: memref<8x32xf32, #tpu.memory_space<vmem>>, %arg26: memref<8x32xf32, #tpu.memory_space<vmem>>, %arg27: memref<8x8xf32, #tpu.memory_space<vmem>>, %arg28: memref<8x1xf32, #tpu.memory_space<vmem>>, %arg29: memref<8x1xf32, #tpu.memory_space<vmem>>) attributes {dimension_semantics = [#tpu.dimension_semantics<parallel>, #tpu.dimension_semantics<arbitrary>], iteration_bounds = array<i64: 1, 1>, scalar_prefetch = 0 : i64, scratch_operands = 6 : i64, tpu.core_type = #tpu.core_type<tc>, window_params = [{transform_indices = @transform_0, window_bounds = array<i64: 8, 32>}, {transform_indices = @transform_1, window_bounds = array<i64: 8, 32>}, {transform_indices = @transform_2, window_bounds = array<i64: 8, 32>}, {transform_indices = @transform_3, window_bounds = array<i64: 8, 8, 32>}, {transform_indices = @transform_4, window_bounds = array<i64: 8, 8>}, {transform_indices = @transform_5, window_bounds = array<i64: 8, 8, 32>}, {transform_indices = @transform_6, window_bounds = array<i64: 8, 8>}, {pipeline_mode = #tpu.pipeline_mode<synchronous>, transform_indices = @transform_7, window_bounds = array<i64: 32, 32>}, {pipeline_mode = #tpu.pipeline_mode<synchronous>, transform_indices = @transform_8, window_bounds = array<i64: 32, 32>}, {pipeline_mode = #tpu.pipeline_mode<synchronous>, transform_indices = @transform_9, window_bounds = array<i64: 1, 32>}, {pipeline_mode = #tpu.pipeline_mode<synchronous>, transform_indices = @transform_10, window_bounds = array<i64: 32, 96>}, {pipeline_mode = #tpu.pipeline_mode<synchronous>, transform_indices = @transform_11, window_bounds = array<i64: 32, 96>}, {pipeline_mode = #tpu.pipeline_mode<synchronous>, transform_indices = @transform_12, window_bounds = array<i64: 1, 96>}, {pipeline_mode = #tpu.pipeline_mode<synchronous>, transform_indices = @transform_13, window_bounds = array<i64: 1, 96>}, {pipeline_mode = #tpu.pipeline_mode<synchronous>, transform_indices = @transform_14, window_bounds = array<i64: 32, 32>}, {pipeline_mode = #tpu.pipeline_mode<synchronous>, transform_indices = @transform_15, window_bounds = array<i64: 32, 32>}, {pipeline_mode = #tpu.pipeline_mode<synchronous>, transform_indices = @transform_16, window_bounds = array<i64: 32, 32>}, {pipeline_mode = #tpu.pipeline_mode<synchronous>, transform_indices = @transform_17, window_bounds = array<i64: 32, 32>}, {pipeline_mode = #tpu.pipeline_mode<synchronous>, transform_indices = @transform_18, window_bounds = array<i64: 1, 32>}, {transform_indices = @transform_19, window_bounds = array<i64: 32, 128>}, {transform_indices = @transform_20, window_bounds = array<i64: 1, 128>}, {transform_indices = @transform_21, window_bounds = array<i64: 8, 128>}]} {
    %c0_i32 = arith.constant 0 : i32
    %0 = arith.cmpi eq, %arg1, %c0_i32 : i32
    %1 = arith.extui %0 : i1 to i32
    %c0_i32_0 = arith.constant 0 : i32
    %2 = arith.cmpi ne, %1, %c0_i32_0 : i32
    scf.if %2 {
      %c0_18 = arith.constant 0 : index
      %c0_19 = arith.constant 0 : index
      %29 = vector.load %arg3[%c0_18, %c0_19] : memref<8x32xf32, #tpu.memory_space<vmem>>, vector<8x32xf32>
      %30 = arith.truncf %29 : vector<8x32xf32> to vector<8x32xbf16>
      %c0_20 = arith.constant 0 : index
      %c0_21 = arith.constant 0 : index
      %31 = vector.load %arg9[%c0_20, %c0_21] : memref<32x32xbf16, #tpu.memory_space<vmem>>, vector<32x32xbf16>
      %cst_22 = arith.constant dense<0.000000e+00> : vector<8x32xf32>
      %32 = tpu.matmul %30, %31, %cst_22 {dimension_numbers = #tpu.dot_dimension_numbers<[1], [0], [0], [1], [0, 0, 1, 1], [], []>} : vector<8x32xbf16>, vector<32x32xbf16>, vector<8x32xf32> -> vector<8x32xf32>
      %c0_23 = arith.constant 0 : index
      %c0_24 = arith.constant 0 : index
      %33 = vector.load %arg2[%c0_23, %c0_24] : memref<8x32xf32, #tpu.memory_space<vmem>>, vector<8x32xf32>
      %34 = arith.truncf %33 : vector<8x32xf32> to vector<8x32xbf16>
      %c0_25 = arith.constant 0 : index
      %c0_26 = arith.constant 0 : index
      %35 = vector.load %arg10[%c0_25, %c0_26] : memref<32x32xbf16, #tpu.memory_space<vmem>>, vector<32x32xbf16>
      %cst_27 = arith.constant dense<0.000000e+00> : vector<8x32xf32>
      %36 = tpu.matmul %34, %35, %cst_27 {dimension_numbers = #tpu.dot_dimension_numbers<[1], [0], [0], [1], [0, 0, 1, 1], [], []>} : vector<8x32xbf16>, vector<32x32xbf16>, vector<8x32xf32> -> vector<8x32xf32>
      %37 = arith.addf %32, %36 : vector<8x32xf32>
      %c0_28 = arith.constant 0 : index
      %c0_29 = arith.constant 0 : index
      %38 = vector.load %arg11[%c0_28, %c0_29] : memref<1x32xf32, #tpu.memory_space<vmem>>, vector<1x32xf32>
      %39 = vector.broadcast %38 : vector<1x32xf32> to vector<8x32xf32>
      %40 = arith.addf %37, %39 : vector<8x32xf32>
      %c0_30 = arith.constant 0 : index
      %c0_31 = arith.constant 0 : index
      %41 = vector.load %arg4[%c0_30, %c0_31] : memref<8x32xf32, #tpu.memory_space<vmem>>, vector<8x32xf32>
      %42 = arith.truncf %40 : vector<8x32xf32> to vector<8x32xbf16>
      %c0_32 = arith.constant 0 : index
      %c0_33 = arith.constant 0 : index
      %43 = vector.load %arg12[%c0_32, %c0_33] : memref<32x96xbf16, #tpu.memory_space<vmem>>, vector<32x96xbf16>
      %cst_34 = arith.constant dense<0.000000e+00> : vector<8x96xf32>
      %44 = tpu.matmul %42, %43, %cst_34 {dimension_numbers = #tpu.dot_dimension_numbers<[1], [0], [0], [1], [0, 0, 1, 1], [], []>} : vector<8x32xbf16>, vector<32x96xbf16>, vector<8x96xf32> -> vector<8x96xf32>
      %c0_35 = arith.constant 0 : index
      %c0_36 = arith.constant 0 : index
      %45 = vector.load %arg14[%c0_35, %c0_36] : memref<1x96xf32, #tpu.memory_space<vmem>>, vector<1x96xf32>
      %46 = vector.broadcast %45 : vector<1x96xf32> to vector<8x96xf32>
      %47 = arith.addf %44, %46 : vector<8x96xf32>
      %48 = arith.truncf %41 : vector<8x32xf32> to vector<8x32xbf16>
      %c0_37 = arith.constant 0 : index
      %c0_38 = arith.constant 0 : index
      %49 = vector.load %arg13[%c0_37, %c0_38] : memref<32x96xbf16, #tpu.memory_space<vmem>>, vector<32x96xbf16>
      %cst_39 = arith.constant dense<0.000000e+00> : vector<8x96xf32>
      %50 = tpu.matmul %48, %49, %cst_39 {dimension_numbers = #tpu.dot_dimension_numbers<[1], [0], [0], [1], [0, 0, 1, 1], [], []>} : vector<8x32xbf16>, vector<32x96xbf16>, vector<8x96xf32> -> vector<8x96xf32>
      %c0_40 = arith.constant 0 : index
      %c0_41 = arith.constant 0 : index
      %51 = vector.load %arg15[%c0_40, %c0_41] : memref<1x96xf32, #tpu.memory_space<vmem>>, vector<1x96xf32>
      %52 = vector.broadcast %51 : vector<1x96xf32> to vector<8x96xf32>
      %53 = arith.addf %50, %52 : vector<8x96xf32>
      %54 = vector.extract_strided_slice %47 {offsets = [0, 0], sizes = [8, 32], strides = [1, 1]} : vector<8x96xf32> to vector<8x32xf32>
      %55 = vector.extract_strided_slice %53 {offsets = [0, 0], sizes = [8, 32], strides = [1, 1]} : vector<8x96xf32> to vector<8x32xf32>
      %56 = arith.addf %54, %55 : vector<8x32xf32>
      %57 = arith.negf %56 : vector<8x32xf32>
      %58 = math.exp %57 : vector<8x32xf32>
      %cst_42 = arith.constant 1.000000e+00 : f32
      %59 = vector.broadcast %cst_42 : f32 to vector<8x32xf32>
      %60 = arith.addf %59, %58 : vector<8x32xf32>
      %61 = arith.divf %59, %60 : vector<8x32xf32>
      %62 = vector.extract_strided_slice %47 {offsets = [0, 32], sizes = [8, 32], strides = [1, 1]} : vector<8x96xf32> to vector<8x32xf32>
      %63 = vector.extract_strided_slice %53 {offsets = [0, 32], sizes = [8, 32], strides = [1, 1]} : vector<8x96xf32> to vector<8x32xf32>
      %64 = arith.addf %62, %63 : vector<8x32xf32>
      %65 = arith.negf %64 : vector<8x32xf32>
      %66 = math.exp %65 : vector<8x32xf32>
      %cst_43 = arith.constant 1.000000e+00 : f32
      %67 = vector.broadcast %cst_43 : f32 to vector<8x32xf32>
      %68 = arith.addf %67, %66 : vector<8x32xf32>
      %69 = arith.divf %67, %68 : vector<8x32xf32>
      %70 = vector.extract_strided_slice %47 {offsets = [0, 64], sizes = [8, 32], strides = [1, 1]} : vector<8x96xf32> to vector<8x32xf32>
      %71 = vector.extract_strided_slice %53 {offsets = [0, 64], sizes = [8, 32], strides = [1, 1]} : vector<8x96xf32> to vector<8x32xf32>
      %72 = arith.mulf %61, %71 : vector<8x32xf32>
      %73 = arith.addf %70, %72 : vector<8x32xf32>
      %74 = math.tanh %73 : vector<8x32xf32>
      %cst_44 = arith.constant 1.000000e+00 : f32
      %75 = vector.broadcast %cst_44 : f32 to vector<8x32xf32>
      %76 = arith.subf %75, %69 : vector<8x32xf32>
      %77 = arith.mulf %76, %74 : vector<8x32xf32>
      %78 = arith.mulf %69, %41 : vector<8x32xf32>
      %79 = arith.addf %77, %78 : vector<8x32xf32>
      %c0_45 = arith.constant 0 : index
      %c0_46 = arith.constant 0 : index
      %80 = vector.load %arg8[%c0_45, %c0_46] : memref<8x8xf32, #tpu.memory_space<vmem>>, vector<8x8xf32>
      %c0_47 = arith.constant 0 : index
      %c0_48 = arith.constant 0 : index
      %c0_49 = arith.constant 0 : index
      %81 = vector.load %arg7[%c0_47, %c0_48, %c0_49] : memref<8x8x32xf32, #tpu.memory_space<vmem>>, vector<8x8x32xf32>
      %82 = arith.truncf %81 : vector<8x8x32xf32> to vector<8x8x32xbf16>
      %83 = arith.truncf %79 : vector<8x32xf32> to vector<8x32xbf16>
      %c0_50 = arith.constant 0 : index
      %c0_51 = arith.constant 0 : index
      %84 = vector.load %arg16[%c0_50, %c0_51] : memref<32x32xbf16, #tpu.memory_space<vmem>>, vector<32x32xbf16>
      %cst_52 = arith.constant dense<0.000000e+00> : vector<8x32xf32>
      %85 = tpu.matmul %83, %84, %cst_52 {dimension_numbers = #tpu.dot_dimension_numbers<[1], [0], [0], [1], [0, 0, 1, 1], [], []>} : vector<8x32xbf16>, vector<32x32xbf16>, vector<8x32xf32> -> vector<8x32xf32>
      %86 = arith.truncf %85 : vector<8x32xf32> to vector<8x32xbf16>
      %87 = vector.shape_cast %86 : vector<8x32xbf16> to vector<8x1x32xbf16>
      "tpu.trace_start"() <{level = 10 : i32, message = "bqr,blr->bql"}> : () -> ()
      %cst_53 = arith.constant dense<0.000000e+00> : vector<8x1x8xf32>
      %88 = tpu.matmul %87, %82, %cst_53 {dimension_numbers = #tpu.dot_dimension_numbers<[2], [2], [1], [1], [0, 0, 0, 1, 1, 1], [0], [0]>} : vector<8x1x32xbf16>, vector<8x8x32xbf16>, vector<8x1x8xf32> -> vector<8x1x8xf32>
      "tpu.trace_stop"() : () -> ()
      %89 = vector.shape_cast %88 : vector<8x1x8xf32> to vector<8x8xf32>
      %90 = arith.mulf %89, %80 : vector<8x8xf32>
      %cst_54 = arith.constant dense<0xFF800000> : vector<8xf32>
      %91 = vector.multi_reduction <maximumf>, %90, %cst_54 [1] : vector<8x8xf32> to vector<8xf32>
      %92 = vector.shape_cast %91 : vector<8xf32> to vector<8x1xf32>
      %93 = vector.broadcast %92 : vector<8x1xf32> to vector<8x8xf32>
      %94 = arith.subf %90, %93 : vector<8x8xf32>
      %95 = math.exp %94 : vector<8x8xf32>
      %96 = arith.mulf %95, %80 : vector<8x8xf32>
      %cst_55 = arith.constant dense<0.000000e+00> : vector<8xf32>
      %97 = vector.multi_reduction <add>, %96, %cst_55 [1] : vector<8x8xf32> to vector<8xf32>
      %98 = vector.shape_cast %97 : vector<8xf32> to vector<8x1xf32>
      %cst_56 = arith.constant 9.99999997E-7 : f32
      %99 = vector.broadcast %cst_56 : f32 to vector<8x1xf32>
      %100 = arith.addf %98, %99 : vector<8x1xf32>
      %101 = vector.broadcast %100 : vector<8x1xf32> to vector<8x8xf32>
      %102 = arith.divf %96, %101 : vector<8x8xf32>
      %103 = arith.truncf %102 : vector<8x8xf32> to vector<8x8xbf16>
      %104 = vector.shape_cast %103 : vector<8x8xbf16> to vector<8x1x8xbf16>
      "tpu.trace_start"() <{level = 10 : i32, message = "bql,blr->bqr"}> : () -> ()
      %cst_57 = arith.constant dense<0.000000e+00> : vector<8x1x32xf32>
      %105 = tpu.matmul %104, %82, %cst_57 {dimension_numbers = #tpu.dot_dimension_numbers<[2], [1], [1], [2], [0, 0, 0, 1, 1, 2], [0], [0]>} : vector<8x1x8xbf16>, vector<8x8x32xbf16>, vector<8x1x32xf32> -> vector<8x1x32xf32>
      "tpu.trace_stop"() : () -> ()
      %106 = vector.shape_cast %105 : vector<8x1x32xf32> to vector<8x32xf32>
      %107 = arith.truncf %106 : vector<8x32xf32> to vector<8x32xbf16>
      %c0_58 = arith.constant 0 : index
      %c0_59 = arith.constant 0 : index
      %108 = vector.load %arg12[%c0_58, %c0_59] : memref<32x96xbf16, #tpu.memory_space<vmem>>, vector<32x96xbf16>
      %cst_60 = arith.constant dense<0.000000e+00> : vector<8x96xf32>
      %109 = tpu.matmul %107, %108, %cst_60 {dimension_numbers = #tpu.dot_dimension_numbers<[1], [0], [0], [1], [0, 0, 1, 1], [], []>} : vector<8x32xbf16>, vector<32x96xbf16>, vector<8x96xf32> -> vector<8x96xf32>
      %c0_61 = arith.constant 0 : index
      %c0_62 = arith.constant 0 : index
      %110 = vector.load %arg14[%c0_61, %c0_62] : memref<1x96xf32, #tpu.memory_space<vmem>>, vector<1x96xf32>
      %111 = vector.broadcast %110 : vector<1x96xf32> to vector<8x96xf32>
      %112 = arith.addf %109, %111 : vector<8x96xf32>
      %113 = arith.truncf %79 : vector<8x32xf32> to vector<8x32xbf16>
      %c0_63 = arith.constant 0 : index
      %c0_64 = arith.constant 0 : index
      %114 = vector.load %arg13[%c0_63, %c0_64] : memref<32x96xbf16, #tpu.memory_space<vmem>>, vector<32x96xbf16>
      %cst_65 = arith.constant dense<0.000000e+00> : vector<8x96xf32>
      %115 = tpu.matmul %113, %114, %cst_65 {dimension_numbers = #tpu.dot_dimension_numbers<[1], [0], [0], [1], [0, 0, 1, 1], [], []>} : vector<8x32xbf16>, vector<32x96xbf16>, vector<8x96xf32> -> vector<8x96xf32>
      %c0_66 = arith.constant 0 : index
      %c0_67 = arith.constant 0 : index
      %116 = vector.load %arg15[%c0_66, %c0_67] : memref<1x96xf32, #tpu.memory_space<vmem>>, vector<1x96xf32>
      %117 = vector.broadcast %116 : vector<1x96xf32> to vector<8x96xf32>
      %118 = arith.addf %115, %117 : vector<8x96xf32>
      %119 = vector.extract_strided_slice %112 {offsets = [0, 0], sizes = [8, 32], strides = [1, 1]} : vector<8x96xf32> to vector<8x32xf32>
      %120 = vector.extract_strided_slice %118 {offsets = [0, 0], sizes = [8, 32], strides = [1, 1]} : vector<8x96xf32> to vector<8x32xf32>
      %121 = arith.addf %119, %120 : vector<8x32xf32>
      %122 = arith.negf %121 : vector<8x32xf32>
      %123 = math.exp %122 : vector<8x32xf32>
      %cst_68 = arith.constant 1.000000e+00 : f32
      %124 = vector.broadcast %cst_68 : f32 to vector<8x32xf32>
      %125 = arith.addf %124, %123 : vector<8x32xf32>
      %126 = arith.divf %124, %125 : vector<8x32xf32>
      %127 = vector.extract_strided_slice %112 {offsets = [0, 32], sizes = [8, 32], strides = [1, 1]} : vector<8x96xf32> to vector<8x32xf32>
      %128 = vector.extract_strided_slice %118 {offsets = [0, 32], sizes = [8, 32], strides = [1, 1]} : vector<8x96xf32> to vector<8x32xf32>
      %129 = arith.addf %127, %128 : vector<8x32xf32>
      %130 = arith.negf %129 : vector<8x32xf32>
      %131 = math.exp %130 : vector<8x32xf32>
      %cst_69 = arith.constant 1.000000e+00 : f32
      %132 = vector.broadcast %cst_69 : f32 to vector<8x32xf32>
      %133 = arith.addf %132, %131 : vector<8x32xf32>
      %134 = arith.divf %132, %133 : vector<8x32xf32>
      %135 = vector.extract_strided_slice %112 {offsets = [0, 64], sizes = [8, 32], strides = [1, 1]} : vector<8x96xf32> to vector<8x32xf32>
      %136 = vector.extract_strided_slice %118 {offsets = [0, 64], sizes = [8, 32], strides = [1, 1]} : vector<8x96xf32> to vector<8x32xf32>
      %137 = arith.mulf %126, %136 : vector<8x32xf32>
      %138 = arith.addf %135, %137 : vector<8x32xf32>
      %139 = math.tanh %138 : vector<8x32xf32>
      %cst_70 = arith.constant 1.000000e+00 : f32
      %140 = vector.broadcast %cst_70 : f32 to vector<8x32xf32>
      %141 = arith.subf %140, %134 : vector<8x32xf32>
      %142 = arith.mulf %141, %139 : vector<8x32xf32>
      %143 = arith.mulf %134, %79 : vector<8x32xf32>
      %144 = arith.addf %142, %143 : vector<8x32xf32>
      %c0_71 = arith.constant 0 : index
      %c0_72 = arith.constant 0 : index
      %145 = vector.load %arg6[%c0_71, %c0_72] : memref<8x8xf32, #tpu.memory_space<vmem>>, vector<8x8xf32>
      %c0_73 = arith.constant 0 : index
      %c0_74 = arith.constant 0 : index
      %c0_75 = arith.constant 0 : index
      %146 = vector.load %arg5[%c0_73, %c0_74, %c0_75] : memref<8x8x32xf32, #tpu.memory_space<vmem>>, vector<8x8x32xf32>
      %147 = arith.truncf %146 : vector<8x8x32xf32> to vector<8x8x32xbf16>
      %148 = arith.truncf %144 : vector<8x32xf32> to vector<8x32xbf16>
      %c0_76 = arith.constant 0 : index
      %c0_77 = arith.constant 0 : index
      %149 = vector.load %arg17[%c0_76, %c0_77] : memref<32x32xbf16, #tpu.memory_space<vmem>>, vector<32x32xbf16>
      %cst_78 = arith.constant dense<0.000000e+00> : vector<8x32xf32>
      %150 = tpu.matmul %148, %149, %cst_78 {dimension_numbers = #tpu.dot_dimension_numbers<[1], [0], [0], [1], [0, 0, 1, 1], [], []>} : vector<8x32xbf16>, vector<32x32xbf16>, vector<8x32xf32> -> vector<8x32xf32>
      %151 = arith.truncf %150 : vector<8x32xf32> to vector<8x32xbf16>
      %152 = vector.shape_cast %151 : vector<8x32xbf16> to vector<8x1x32xbf16>
      "tpu.trace_start"() <{level = 10 : i32, message = "bqr,blr->bql"}> : () -> ()
      %cst_79 = arith.constant dense<0.000000e+00> : vector<8x1x8xf32>
      %153 = tpu.matmul %152, %147, %cst_79 {dimension_numbers = #tpu.dot_dimension_numbers<[2], [2], [1], [1], [0, 0, 0, 1, 1, 1], [0], [0]>} : vector<8x1x32xbf16>, vector<8x8x32xbf16>, vector<8x1x8xf32> -> vector<8x1x8xf32>
      "tpu.trace_stop"() : () -> ()
      %154 = vector.shape_cast %153 : vector<8x1x8xf32> to vector<8x8xf32>
      %155 = arith.mulf %154, %145 : vector<8x8xf32>
      %cst_80 = arith.constant dense<0xFF800000> : vector<8xf32>
      %156 = vector.multi_reduction <maximumf>, %155, %cst_80 [1] : vector<8x8xf32> to vector<8xf32>
      %157 = vector.shape_cast %156 : vector<8xf32> to vector<8x1xf32>
      %158 = vector.broadcast %157 : vector<8x1xf32> to vector<8x8xf32>
      %159 = arith.subf %155, %158 : vector<8x8xf32>
      %160 = math.exp %159 : vector<8x8xf32>
      %161 = arith.mulf %160, %145 : vector<8x8xf32>
      %cst_81 = arith.constant dense<0.000000e+00> : vector<8xf32>
      %162 = vector.multi_reduction <add>, %161, %cst_81 [1] : vector<8x8xf32> to vector<8xf32>
      %163 = vector.shape_cast %162 : vector<8xf32> to vector<8x1xf32>
      %cst_82 = arith.constant 9.99999997E-7 : f32
      %164 = vector.broadcast %cst_82 : f32 to vector<8x1xf32>
      %165 = arith.addf %163, %164 : vector<8x1xf32>
      %166 = vector.broadcast %165 : vector<8x1xf32> to vector<8x8xf32>
      %167 = arith.divf %161, %166 : vector<8x8xf32>
      %168 = arith.truncf %167 : vector<8x8xf32> to vector<8x8xbf16>
      %169 = vector.shape_cast %168 : vector<8x8xbf16> to vector<8x1x8xbf16>
      "tpu.trace_start"() <{level = 10 : i32, message = "bql,blr->bqr"}> : () -> ()
      %cst_83 = arith.constant dense<0.000000e+00> : vector<8x1x32xf32>
      %170 = tpu.matmul %169, %147, %cst_83 {dimension_numbers = #tpu.dot_dimension_numbers<[2], [1], [1], [2], [0, 0, 0, 1, 1, 2], [0], [0]>} : vector<8x1x8xbf16>, vector<8x8x32xbf16>, vector<8x1x32xf32> -> vector<8x1x32xf32>
      "tpu.trace_stop"() : () -> ()
      %171 = vector.shape_cast %170 : vector<8x1x32xf32> to vector<8x32xf32>
      %172 = arith.truncf %144 : vector<8x32xf32> to vector<8x32xbf16>
      %c0_84 = arith.constant 0 : index
      %c0_85 = arith.constant 0 : index
      %173 = vector.load %arg18[%c0_84, %c0_85] : memref<32x32xbf16, #tpu.memory_space<vmem>>, vector<32x32xbf16>
      %cst_86 = arith.constant dense<0.000000e+00> : vector<8x32xf32>
      %174 = tpu.matmul %172, %173, %cst_86 {dimension_numbers = #tpu.dot_dimension_numbers<[1], [0], [0], [1], [0, 0, 1, 1], [], []>} : vector<8x32xbf16>, vector<32x32xbf16>, vector<8x32xf32> -> vector<8x32xf32>
      %175 = arith.truncf %171 : vector<8x32xf32> to vector<8x32xbf16>
      %c0_87 = arith.constant 0 : index
      %c0_88 = arith.constant 0 : index
      %176 = vector.load %arg19[%c0_87, %c0_88] : memref<32x32xbf16, #tpu.memory_space<vmem>>, vector<32x32xbf16>
      %cst_89 = arith.constant dense<0.000000e+00> : vector<8x32xf32>
      %177 = tpu.matmul %175, %176, %cst_89 {dimension_numbers = #tpu.dot_dimension_numbers<[1], [0], [0], [1], [0, 0, 1, 1], [], []>} : vector<8x32xbf16>, vector<32x32xbf16>, vector<8x32xf32> -> vector<8x32xf32>
      %178 = arith.addf %174, %177 : vector<8x32xf32>
      %c0_90 = arith.constant 0 : index
      %c0_91 = arith.constant 0 : index
      %179 = vector.load %arg20[%c0_90, %c0_91] : memref<1x32xf32, #tpu.memory_space<vmem>>, vector<1x32xf32>
      %180 = vector.broadcast %179 : vector<1x32xf32> to vector<8x32xf32>
      %181 = arith.addf %178, %180 : vector<8x32xf32>
      %c0_92 = arith.constant 0 : index
      %c0_93 = arith.constant 0 : index
      %182 = vector.load %arg24[%c0_92, %c0_93] : memref<8x32xf32, #tpu.memory_space<vmem>>, vector<8x32xf32>
      tpu.vector_store %arg24[%c0_92, %c0_93], %144 {strides = array<i32>} : memref<8x32xf32, #tpu.memory_space<vmem>>, vector<8x32xf32>,
      %c0_94 = arith.constant 0 : index
      %c0_95 = arith.constant 0 : index
      %183 = vector.load %arg25[%c0_94, %c0_95] : memref<8x32xf32, #tpu.memory_space<vmem>>, vector<8x32xf32>
      tpu.vector_store %arg25[%c0_94, %c0_95], %171 {strides = array<i32>} : memref<8x32xf32, #tpu.memory_space<vmem>>, vector<8x32xf32>,
      %c0_96 = arith.constant 0 : index
      %c0_97 = arith.constant 0 : index
      %184 = vector.load %arg26[%c0_96, %c0_97] : memref<8x32xf32, #tpu.memory_space<vmem>>, vector<8x32xf32>
      tpu.vector_store %arg26[%c0_96, %c0_97], %181 {strides = array<i32>} : memref<8x32xf32, #tpu.memory_space<vmem>>, vector<8x32xf32>,
      %c0_98 = arith.constant 0 : index
      %c0_99 = arith.constant 0 : index
      %185 = vector.load %arg27[%c0_98, %c0_99] : memref<8x8xf32, #tpu.memory_space<vmem>>, vector<8x8xf32>
      tpu.vector_store %arg27[%c0_98, %c0_99], %167 {strides = array<i32>} : memref<8x8xf32, #tpu.memory_space<vmem>>, vector<8x8xf32>,
      %cst_100 = arith.constant -9.99999993E+36 : f32
      %186 = vector.broadcast %cst_100 : f32 to vector<8x1xf32>
      %c0_101 = arith.constant 0 : index
      %c0_102 = arith.constant 0 : index
      %187 = vector.load %arg28[%c0_101, %c0_102] : memref<8x1xf32, #tpu.memory_space<vmem>>, vector<8x1xf32>
      tpu.vector_store %arg28[%c0_101, %c0_102], %186 {strides = array<i32>} : memref<8x1xf32, #tpu.memory_space<vmem>>, vector<8x1xf32>,
      %cst_103 = arith.constant 0.000000e+00 : f32
      %188 = vector.broadcast %cst_103 : f32 to vector<8x1xf32>
      %c0_104 = arith.constant 0 : index
      %c0_105 = arith.constant 0 : index
      %189 = vector.load %arg29[%c0_104, %c0_105] : memref<8x1xf32, #tpu.memory_space<vmem>>, vector<8x1xf32>
      tpu.vector_store %arg29[%c0_104, %c0_105], %188 {strides = array<i32>} : memref<8x1xf32, #tpu.memory_space<vmem>>, vector<8x1xf32>,
    } else {
    }
    %c0 = arith.constant 0 : index
    %c0_1 = arith.constant 0 : index
    %3 = vector.load %arg26[%c0, %c0_1] : memref<8x32xf32, #tpu.memory_space<vmem>>, vector<8x32xf32>
    %4 = arith.truncf %3 : vector<8x32xf32> to vector<8x32xbf16>
    %c0_2 = arith.constant 0 : index
    %c0_3 = arith.constant 0 : index
    %5 = vector.load %arg21[%c0_2, %c0_3] : memref<32x128xbf16, #tpu.memory_space<vmem>>, vector<32x128xbf16>
    %cst = arith.constant dense<0.000000e+00> : vector<8x128xf32>
    %6 = tpu.matmul %4, %5, %cst {dimension_numbers = #tpu.dot_dimension_numbers<[1], [0], [0], [1], [0, 0, 1, 1], [], []>} : vector<8x32xbf16>, vector<32x128xbf16>, vector<8x128xf32> -> vector<8x128xf32>
    %c0_4 = arith.constant 0 : index
    %c0_5 = arith.constant 0 : index
    %7 = vector.load %arg22[%c0_4, %c0_5] : memref<1x128xf32, #tpu.memory_space<vmem>>, vector<1x128xf32>
    %8 = vector.broadcast %7 : vector<1x128xf32> to vector<8x128xf32>
    %9 = arith.addf %6, %8 : vector<8x128xf32>
    %c0_6 = arith.constant 0 : index
    %c0_7 = arith.constant 0 : index
    %10 = vector.load %arg28[%c0_6, %c0_7] : memref<8x1xf32, #tpu.memory_space<vmem>>, vector<8x1xf32>
    %cst_8 = arith.constant dense<0xFF800000> : vector<8xf32>
    %11 = vector.multi_reduction <maximumf>, %9, %cst_8 [1] : vector<8x128xf32> to vector<8xf32>
    %12 = vector.shape_cast %11 : vector<8xf32> to vector<8x1xf32>
    %13 = arith.maximumf %10, %12 : vector<8x1xf32>
    %14 = arith.subf %10, %13 : vector<8x1xf32>
    %15 = math.exp %14 : vector<8x1xf32>
    %c0_9 = arith.constant 0 : index
    %c0_10 = arith.constant 0 : index
    %16 = vector.load %arg29[%c0_9, %c0_10] : memref<8x1xf32, #tpu.memory_space<vmem>>, vector<8x1xf32>
    %17 = arith.mulf %15, %16 : vector<8x1xf32>
    %18 = vector.broadcast %13 : vector<8x1xf32> to vector<8x128xf32>
    %19 = arith.subf %9, %18 : vector<8x128xf32>
    %20 = math.exp %19 : vector<8x128xf32>
    %cst_11 = arith.constant dense<0.000000e+00> : vector<8xf32>
    %21 = vector.multi_reduction <add>, %20, %cst_11 [1] : vector<8x128xf32> to vector<8xf32>
    %22 = vector.shape_cast %21 : vector<8xf32> to vector<8x1xf32>
    %23 = arith.addf %17, %22 : vector<8x1xf32>
    %c0_12 = arith.constant 0 : index
    %c0_13 = arith.constant 0 : index
    %24 = vector.load %arg29[%c0_12, %c0_13] : memref<8x1xf32, #tpu.memory_space<vmem>>, vector<8x1xf32>
    tpu.vector_store %arg29[%c0_12, %c0_13], %23 {strides = array<i32>} : memref<8x1xf32, #tpu.memory_space<vmem>>, vector<8x1xf32>,
    %c0_14 = arith.constant 0 : index
    %c0_15 = arith.constant 0 : index
    %25 = vector.load %arg28[%c0_14, %c0_15] : memref<8x1xf32, #tpu.memory_space<vmem>>, vector<8x1xf32>
    tpu.vector_store %arg28[%c0_14, %c0_15], %13 {strides = array<i32>} : memref<8x1xf32, #tpu.memory_space<vmem>>, vector<8x1xf32>,
    %c0_i32_16 = arith.constant 0 : i32
    %26 = arith.cmpi eq, %arg1, %c0_i32_16 : i32
    %27 = arith.extui %26 : i1 to i32
    %c0_i32_17 = arith.constant 0 : i32
    %28 = arith.cmpi ne, %27, %c0_i32_17 : i32
    scf.if %28 {
      %c0_18 = arith.constant 0 : index
      %c0_19 = arith.constant 0 : index
      %29 = vector.load %arg24[%c0_18, %c0_19] : memref<8x32xf32, #tpu.memory_space<vmem>>, vector<8x32xf32>
      %c0_20 = arith.constant 0 : index
      %c0_21 = arith.constant 0 : index
      %30 = vector.load %arg23[%c0_20, %c0_21] : memref<8x128xf32, #tpu.memory_space<vmem>>, vector<8x32xf32>
      tpu.vector_store %arg23[%c0_20, %c0_21], %29 {strides = array<i32>} : memref<8x128xf32, #tpu.memory_space<vmem>>, vector<8x32xf32>,
      %c0_22 = arith.constant 0 : index
      %c0_23 = arith.constant 0 : index
      %31 = vector.load %arg25[%c0_22, %c0_23] : memref<8x32xf32, #tpu.memory_space<vmem>>, vector<8x32xf32>
      %c0_24 = arith.constant 0 : index
      %c32 = arith.constant 32 : index
      %32 = vector.load %arg23[%c0_24, %c32] : memref<8x128xf32, #tpu.memory_space<vmem>>, vector<8x32xf32>
      tpu.vector_store %arg23[%c0_24, %c32], %31 {strides = array<i32>} : memref<8x128xf32, #tpu.memory_space<vmem>>, vector<8x32xf32>,
      %c0_25 = arith.constant 0 : index
      %c0_26 = arith.constant 0 : index
      %33 = vector.load %arg26[%c0_25, %c0_26] : memref<8x32xf32, #tpu.memory_space<vmem>>, vector<8x32xf32>
      %c0_27 = arith.constant 0 : index
      %c64 = arith.constant 64 : index
      %34 = vector.load %arg23[%c0_27, %c64] : memref<8x128xf32, #tpu.memory_space<vmem>>, vector<8x32xf32>
      tpu.vector_store %arg23[%c0_27, %c64], %33 {strides = array<i32>} : memref<8x128xf32, #tpu.memory_space<vmem>>, vector<8x32xf32>,
      %c0_28 = arith.constant 0 : index
      %c0_29 = arith.constant 0 : index
      %35 = vector.load %arg27[%c0_28, %c0_29] : memref<8x8xf32, #tpu.memory_space<vmem>>, vector<8x8xf32>
      %c0_30 = arith.constant 0 : index
      %c96 = arith.constant 96 : index
      %36 = vector.load %arg23[%c0_30, %c96] : memref<8x128xf32, #tpu.memory_space<vmem>>, vector<8x8xf32>
      tpu.vector_store %arg23[%c0_30, %c96], %35 {strides = array<i32>} : memref<8x128xf32, #tpu.memory_space<vmem>>, vector<8x8xf32>,
      %c0_31 = arith.constant 0 : index
      %c0_32 = arith.constant 0 : index
      %37 = vector.load %arg28[%c0_31, %c0_32] : memref<8x1xf32, #tpu.memory_space<vmem>>, vector<8x1xf32>
      %c0_33 = arith.constant 0 : index
      %c104 = arith.constant 104 : index
      %38 = vector.load %arg23[%c0_33, %c104] : memref<8x128xf32, #tpu.memory_space<vmem>>, vector<8x1xf32>
      tpu.vector_store %arg23[%c0_33, %c104], %37 {strides = array<i32>} : memref<8x128xf32, #tpu.memory_space<vmem>>, vector<8x1xf32>,
      %c0_34 = arith.constant 0 : index
      %c0_35 = arith.constant 0 : index
      %39 = vector.load %arg29[%c0_34, %c0_35] : memref<8x1xf32, #tpu.memory_space<vmem>>, vector<8x1xf32>
      %c0_36 = arith.constant 0 : index
      %c105 = arith.constant 105 : index
      %40 = vector.load %arg23[%c0_36, %c105] : memref<8x128xf32, #tpu.memory_space<vmem>>, vector<8x1xf32>
      tpu.vector_store %arg23[%c0_36, %c105], %39 {strides = array<i32>} : memref<8x128xf32, #tpu.memory_space<vmem>>, vector<8x1xf32>,
      %cst_37 = arith.constant 0.000000e+00 : f32
      %41 = vector.broadcast %cst_37 : f32 to vector<8x22xf32>
      %c0_38 = arith.constant 0 : index
      %c106 = arith.constant 106 : index
      %42 = vector.load %arg23[%c0_38, %c106] : memref<8x128xf32, #tpu.memory_space<vmem>>, vector<8x22xf32>
      tpu.vector_store %arg23[%c0_38, %c106], %41 {strides = array<i32>} : memref<8x128xf32, #tpu.memory_space<vmem>>, vector<8x22xf32>,
    } else {
    }
    return
  }
  func.func @transform_0(%arg0: i32, %arg1: i32) -> (i32, i32) {
    %c0_i32 = arith.constant 0 : i32
    %c0_i32_0 = arith.constant 0 : i32
    return %arg0, %c0_i32 : i32, i32
  }
  func.func @transform_1(%arg0: i32, %arg1: i32) -> (i32, i32) {
    %c0_i32 = arith.constant 0 : i32
    %c0_i32_0 = arith.constant 0 : i32
    return %arg0, %c0_i32 : i32, i32
  }
  func.func @transform_2(%arg0: i32, %arg1: i32) -> (i32, i32) {
    %c0_i32 = arith.constant 0 : i32
    %c0_i32_0 = arith.constant 0 : i32
    return %arg0, %c0_i32 : i32, i32
  }
  func.func @transform_3(%arg0: i32, %arg1: i32) -> (i32, i32, i32) {
    %c0_i32 = arith.constant 0 : i32
    %c0_i32_0 = arith.constant 0 : i32
    %c0_i32_1 = arith.constant 0 : i32
    return %arg0, %c0_i32, %c0_i32_0 : i32, i32, i32
  }
  func.func @transform_4(%arg0: i32, %arg1: i32) -> (i32, i32) {
    %c0_i32 = arith.constant 0 : i32
    %c0_i32_0 = arith.constant 0 : i32
    return %arg0, %c0_i32 : i32, i32
  }
  func.func @transform_5(%arg0: i32, %arg1: i32) -> (i32, i32, i32) {
    %c0_i32 = arith.constant 0 : i32
    %c0_i32_0 = arith.constant 0 : i32
    %c0_i32_1 = arith.constant 0 : i32
    return %arg0, %c0_i32, %c0_i32_0 : i32, i32, i32
  }
  func.func @transform_6(%arg0: i32, %arg1: i32) -> (i32, i32) {
    %c0_i32 = arith.constant 0 : i32
    %c0_i32_0 = arith.constant 0 : i32
    return %arg0, %c0_i32 : i32, i32
  }
  func.func @transform_7(%arg0: i32, %arg1: i32) -> (i32, i32) {
    %c0_i32 = arith.constant 0 : i32
    %c0_i32_0 = arith.constant 0 : i32
    %c0_i32_1 = arith.constant 0 : i32
    return %c0_i32, %c0_i32_0 : i32, i32
  }
  func.func @transform_8(%arg0: i32, %arg1: i32) -> (i32, i32) {
    %c0_i32 = arith.constant 0 : i32
    %c0_i32_0 = arith.constant 0 : i32
    %c0_i32_1 = arith.constant 0 : i32
    return %c0_i32, %c0_i32_0 : i32, i32
  }
  func.func @transform_9(%arg0: i32, %arg1: i32) -> (i32, i32) {
    %c0_i32 = arith.constant 0 : i32
    %c0_i32_0 = arith.constant 0 : i32
    %c0_i32_1 = arith.constant 0 : i32
    return %c0_i32, %c0_i32_0 : i32, i32
  }
  func.func @transform_10(%arg0: i32, %arg1: i32) -> (i32, i32) {
    %c0_i32 = arith.constant 0 : i32
    %c0_i32_0 = arith.constant 0 : i32
    %c0_i32_1 = arith.constant 0 : i32
    return %c0_i32, %c0_i32_0 : i32, i32
  }
  func.func @transform_11(%arg0: i32, %arg1: i32) -> (i32, i32) {
    %c0_i32 = arith.constant 0 : i32
    %c0_i32_0 = arith.constant 0 : i32
    %c0_i32_1 = arith.constant 0 : i32
    return %c0_i32, %c0_i32_0 : i32, i32
  }
  func.func @transform_12(%arg0: i32, %arg1: i32) -> (i32, i32) {
    %c0_i32 = arith.constant 0 : i32
    %c0_i32_0 = arith.constant 0 : i32
    %c0_i32_1 = arith.constant 0 : i32
    return %c0_i32, %c0_i32_0 : i32, i32
  }
  func.func @transform_13(%arg0: i32, %arg1: i32) -> (i32, i32) {
    %c0_i32 = arith.constant 0 : i32
    %c0_i32_0 = arith.constant 0 : i32
    %c0_i32_1 = arith.constant 0 : i32
    return %c0_i32, %c0_i32_0 : i32, i32
  }
  func.func @transform_14(%arg0: i32, %arg1: i32) -> (i32, i32) {
    %c0_i32 = arith.constant 0 : i32
    %c0_i32_0 = arith.constant 0 : i32
    %c0_i32_1 = arith.constant 0 : i32
    return %c0_i32, %c0_i32_0 : i32, i32
  }
  func.func @transform_15(%arg0: i32, %arg1: i32) -> (i32, i32) {
    %c0_i32 = arith.constant 0 : i32
    %c0_i32_0 = arith.constant 0 : i32
    %c0_i32_1 = arith.constant 0 : i32
    return %c0_i32, %c0_i32_0 : i32, i32
  }
  func.func @transform_16(%arg0: i32, %arg1: i32) -> (i32, i32) {
    %c0_i32 = arith.constant 0 : i32
    %c0_i32_0 = arith.constant 0 : i32
    %c0_i32_1 = arith.constant 0 : i32
    return %c0_i32, %c0_i32_0 : i32, i32
  }
  func.func @transform_17(%arg0: i32, %arg1: i32) -> (i32, i32) {
    %c0_i32 = arith.constant 0 : i32
    %c0_i32_0 = arith.constant 0 : i32
    %c0_i32_1 = arith.constant 0 : i32
    return %c0_i32, %c0_i32_0 : i32, i32
  }
  func.func @transform_18(%arg0: i32, %arg1: i32) -> (i32, i32) {
    %c0_i32 = arith.constant 0 : i32
    %c0_i32_0 = arith.constant 0 : i32
    %c0_i32_1 = arith.constant 0 : i32
    return %c0_i32, %c0_i32_0 : i32, i32
  }
  func.func @transform_19(%arg0: i32, %arg1: i32) -> (i32, i32) {
    %c0_i32 = arith.constant 0 : i32
    %c0_i32_0 = arith.constant 0 : i32
    return %c0_i32, %arg1 : i32, i32
  }
  func.func @transform_20(%arg0: i32, %arg1: i32) -> (i32, i32) {
    %c0_i32 = arith.constant 0 : i32
    %c0_i32_0 = arith.constant 0 : i32
    return %c0_i32, %arg1 : i32, i32
  }
  func.func @transform_21(%arg0: i32, %arg1: i32) -> (i32, i32) {
    %c0_i32 = arith.constant 0 : i32
    %c0_i32_0 = arith.constant 0 : i32
    return %arg0, %c0_i32 : i32, i32
  }
}

</mosaic_0001>

<llo_original>
// kernel: tpu_custom_call.1
$region0: #{tpu_custom_call.1}
  #allocation0 [shape = 'u32[]', space=smem, size = 0x4, offset = 0x4, fixed_abs, tag = 'smem constant byte address 0x4 - core index']
  #allocation1 [shape = 'u32[144,128]{1,0:T(1,128)}', space=vmem, size = 0x12000, scoped, tag = 'internal scratch']
  #allocation2 [shape = 'f32[8,32]{1,0:T(8,128)}', space=vmem, size = 0x1000, scoped, tag = 'scratch operand']
  #allocation3 [shape = 'f32[8,32]{1,0:T(8,128)}', space=vmem, size = 0x1000, scoped, tag = 'scratch operand']
  #allocation4 [shape = 'f32[8,32]{1,0:T(8,128)}', space=vmem, size = 0x1000, scoped, tag = 'scratch operand']
  #allocation5 [shape = 'f32[8,8]{1,0:T(8,128)}', space=vmem, size = 0x1000, scoped, tag = 'scratch operand']
  #allocation6 [shape = 'f32[8,1]{1,0:T(8,128)}', space=vmem, size = 0x1000, scoped, tag = 'scratch operand']
  #allocation7 [shape = 'f32[8,1]{1,0:T(8,128)}', space=vmem, size = 0x1000, scoped, tag = 'scratch operand']
  %s0 = inlined_call_operand.hbm [shape: f32[8,32], index: 0, kind: input, shape index: {}]
  %s1 = inlined_call_operand.hbm [shape: f32[8,32], index: 1, kind: input, shape index: {}]
  %s2 = inlined_call_operand.hbm [shape: f32[8,32], index: 2, kind: input, shape index: {}]
  %s3 = inlined_call_operand.hbm [shape: f32[8,8,32], index: 3, kind: input, shape index: {}]
  %s4 = inlined_call_operand.hbm [shape: f32[8,8], index: 4, kind: input, shape index: {}]
  %s5 = inlined_call_operand.hbm [shape: f32[8,8,32], index: 5, kind: input, shape index: {}]
  %s6 = inlined_call_operand.hbm [shape: f32[8,8], index: 6, kind: input, shape index: {}]
  %s7 = inlined_call_operand.vmem [shape: bf16[32,32], index: 7, kind: input, shape index: {}]
  %s8 = inlined_call_operand.hbm [shape: bf16[32,32], index: 8, kind: input, shape index: {}]
  %s9 = inlined_call_operand.hbm [shape: f32[1,32], index: 9, kind: input, shape index: {}]
  %s10 = inlined_call_operand.vmem [shape: bf16[32,96], index: 10, kind: input, shape index: {}]
  %s11 = inlined_call_operand.hbm [shape: bf16[32,96], index: 11, kind: input, shape index: {}]
  %s12 = inlined_call_operand.hbm [shape: f32[1,96], index: 12, kind: input, shape index: {}]
  %s13 = inlined_call_operand.hbm [shape: f32[1,96], index: 13, kind: input, shape index: {}]
  %s14 = inlined_call_operand.vmem [shape: bf16[32,32], index: 14, kind: input, shape index: {}]
  %s15 = inlined_call_operand.hbm [shape: bf16[32,32], index: 15, kind: input, shape index: {}]
  %s16 = inlined_call_operand.hbm [shape: bf16[32,32], index: 16, kind: input, shape index: {}]
  %s17 = inlined_call_operand.vmem [shape: bf16[32,32], index: 17, kind: input, shape index: {}]
  %s18 = inlined_call_operand.vmem [shape: f32[1,32], index: 18, kind: input, shape index: {}]
  %s19 = inlined_call_operand.hbm [shape: bf16[32,128], index: 19, kind: input, shape index: {}]
  %s20 = inlined_call_operand.vmem [shape: f32[1,128], index: 20, kind: input, shape index: {}]
  %s21 = inlined_call_operand.hbm [shape: f32[8,128], index: 21, kind: output, shape index: {}]
  %s22 = sld [smem:[#allocation0]]
  $region162: #{tpu_custom_call.1} parent=0
    _
  %s24 = ssub.s32 1, %s22
  %s25 = scalar_select 0, %s24, %s22
  $region1: #{tpu_custom_call.1} parent=0
    #allocation8 [shape = 'u8[4096]{0}', space=vmem, size = 0x1000, scoped, tag = 'input window, operand 0, single buffered']
    #allocation9 [shape = 's32[1]{0}', space=sflag, size = 0x4, scoped, tag = 'scoped memory for tpu_custom_call.1']
    #allocation10 [shape = 's32[1]{0}', space=sflag, size = 0x4, scoped, tag = 'scoped memory for tpu_custom_call.1']
    #allocation11 [shape = 'u8[4096]{0}', space=vmem, size = 0x1000, scoped, tag = 'input window, operand 1, single buffered']
    #allocation12 [shape = 's32[1]{0}', space=sflag, size = 0x4, scoped, tag = 'scoped memory for tpu_custom_call.1']
    #allocation13 [shape = 'u8[4096]{0}', space=vmem, size = 0x1000, scoped, tag = 'input window, operand 2, single buffered']
    #allocation14 [shape = 'u8[32768]{0}', space=vmem, size = 0x8000, scoped, tag = 'input window, operand 3, single buffered']
    #allocation15 [shape = 's32[1]{0}', space=sflag, size = 0x4, scoped, tag = 'scoped memory for tpu_custom_call.1']
    #allocation16 [shape = 'u8[4096]{0}', space=vmem, size = 0x1000, scoped, tag = 'input window, operand 4, single buffered']
    #allocation17 [shape = 'u8[32768]{0}', space=vmem, size = 0x8000, scoped, tag = 'input window, operand 5, single buffered']
    #allocation18 [shape = 's32[1]{0}', space=sflag, size = 0x4, scoped, tag = 'scoped memory for tpu_custom_call.1']
    #allocation19 [shape = 'u8[4096]{0}', space=vmem, size = 0x1000, scoped, tag = 'input window, operand 6, single buffered']
    #allocation20 [shape = 'u8[8192]{0}', space=vmem, size = 0x2000, scoped, tag = 'input window, operand 8, single buffered']
    #allocation21 [shape = 's32[1]{0}', space=sflag, size = 0x4, scoped, tag = 'scoped memory for tpu_custom_call.1']
    #allocation22 [shape = 'u8[512]{0}', space=vmem, size = 0x400, scoped, tag = 'input window, operand 9, single buffered']
    #allocation23 [shape = 'u8[8192]{0}', space=vmem, size = 0x2000, scoped, tag = 'input window, operand 11, single buffered']
    #allocation24 [shape = 's32[1]{0}', space=sflag, size = 0x4, scoped, tag = 'scoped memory for tpu_custom_call.1']
    #allocation25 [shape = 'u8[512]{0}', space=vmem, size = 0x400, scoped, tag = 'input window, operand 12, single buffered']
    #allocation26 [shape = 'u8[512]{0}', space=vmem, size = 0x400, scoped, tag = 'input window, operand 13, single buffered']
    #allocation27 [shape = 's32[1]{0}', space=sflag, size = 0x4, scoped, tag = 'scoped memory for tpu_custom_call.1']
    #allocation28 [shape = 'u8[8192]{0}', space=vmem, size = 0x2000, scoped, tag = 'input window, operand 15, single buffered']
    #allocation29 [shape = 'u8[8192]{0}', space=vmem, size = 0x2000, scoped, tag = 'input window, operand 16, single buffered']
    #allocation30 [shape = 's32[1]{0}', space=sflag, size = 0x4, scoped, tag = 'scoped memory for tpu_custom_call.1']
    #allocation31 [shape = 'u8[8192]{0}', space=vmem, size = 0x2000, scoped, tag = 'input window, operand 19, single buffered']
    #allocation32 [shape = 'u8[4096]{0}', space=vmem, size = 0x1000, scoped, tag = 'output window, operand 0, single buffered']
    %26 = vsyncpa [#allocation9], 0
    %27 = vsyncpa [#allocation12], 0
    %28 = vsyncpa [#allocation15], 0
    %29 = vsyncpa [#allocation18], 0
    %30 = vsyncpa [#allocation21], 0
    %31 = vsyncpa [#allocation24], 0
    %32 = vsyncpa [#allocation27], 0
    %33 = vsyncpa [#allocation30], 0
    %34 = vsyncpa [#allocation10], 0
    // Predicated region
    $region2: #{tpu_custom_call.1} parent=1 // pred_check
      _
    $region3: #{tpu_custom_call.1} parent=1 // pred_check_branch
      %36 = sbr.rel (0) target = $region5
    $region4: #{tpu_custom_call.1} parent=1 // pred_region
      %s38 = ssub.s32 128, 128
      %39 = vsyncadd [#allocation9], %s38
      %s41 = sshll.u32 [#allocation8], 4
      %s42 = int_to_ptr.vmem [resolvable:$true] %s41
      %44 = dma.hbm_to_vmem [thread:$0]  %s0, 128, %s42, [#allocation9]
    $region5: #{tpu_custom_call.1} parent=1 // pred_fallthru
      _
    // Predicated region
    $region6: #{tpu_custom_call.1} parent=1 // pred_check
      _
    $region7: #{tpu_custom_call.1} parent=1 // pred_check_branch
      %46 = sbr.rel (0) target = $region9
    $region8: #{tpu_custom_call.1} parent=1 // pred_region
      %s48 = ssub.s32 128, 128
      %49 = vsyncadd [#allocation12], %s48
      %s51 = sshll.u32 [#allocation11], 4
      %s52 = int_to_ptr.vmem [resolvable:$true] %s51
      %54 = dma.hbm_to_vmem [thread:$0]  %s1, 128, %s52, [#allocation12]
    $region9: #{tpu_custom_call.1} parent=1 // pred_fallthru
      _
    // Predicated region
    $region10: #{tpu_custom_call.1} parent=1 // pred_check
      _
    $region11: #{tpu_custom_call.1} parent=1 // pred_check_branch
      %56 = sbr.rel (0) target = $region13
    $region12: #{tpu_custom_call.1} parent=1 // pred_region
      %s58 = ssub.s32 128, 128
      %59 = vsyncadd [#allocation12], %s58
      %s61 = sshll.u32 [#allocation13], 4
      %s62 = int_to_ptr.vmem [resolvable:$true] %s61
      %64 = dma.hbm_to_vmem [thread:$0]  %s2, 128, %s62, [#allocation12]
    $region13: #{tpu_custom_call.1} parent=1 // pred_fallthru
      _
    // Predicated region
    $region14: #{tpu_custom_call.1} parent=1 // pred_check
      _
    $region15: #{tpu_custom_call.1} parent=1 // pred_check_branch
      %66 = sbr.rel (0) target = $region17
    $region16: #{tpu_custom_call.1} parent=1 // pred_region
      %s68 = ssub.s32 1024, 1024
      %69 = vsyncadd [#allocation15], %s68
      %s70 = sshll.u32 [#allocation14], 4
      %s71 = int_to_ptr.vmem [resolvable:$true] %s70
      %76 = dma.hbm_to_vmem [thread:$0]  %s3, 1024, %s71, [#allocation15], 128, 128, 8
    $region17: #{tpu_custom_call.1} parent=1 // pred_fallthru
      _
    // Predicated region
    $region18: #{tpu_custom_call.1} parent=1 // pred_check
      _
    $region19: #{tpu_custom_call.1} parent=1 // pred_check_branch
      %78 = sbr.rel (0) target = $region21
    $region20: #{tpu_custom_call.1} parent=1 // pred_region
      %s80 = ssub.s32 128, 128
      %81 = vsyncadd [#allocation15], %s80
      %s83 = sshll.u32 [#allocation16], 4
      %s84 = int_to_ptr.vmem [resolvable:$true] %s83
      %86 = dma.hbm_to_vmem [thread:$0]  %s4, 128, %s84, [#allocation15]
    $region21: #{tpu_custom_call.1} parent=1 // pred_fallthru
      _
    // Predicated region
    $region22: #{tpu_custom_call.1} parent=1 // pred_check
      _
    $region23: #{tpu_custom_call.1} parent=1 // pred_check_branch
      %88 = sbr.rel (0) target = $region25
    $region24: #{tpu_custom_call.1} parent=1 // pred_region
      %s90 = ssub.s32 1024, 1024
      %91 = vsyncadd [#allocation18], %s90
      %s92 = sshll.u32 [#allocation17], 4
      %s93 = int_to_ptr.vmem [resolvable:$true] %s92
      %98 = dma.hbm_to_vmem [thread:$0]  %s5, 1024, %s93, [#allocation18], 128, 128, 8
    $region25: #{tpu_custom_call.1} parent=1 // pred_fallthru
      _
    // Predicated region
    $region26: #{tpu_custom_call.1} parent=1 // pred_check
      _
    $region27: #{tpu_custom_call.1} parent=1 // pred_check_branch
      %100 = sbr.rel (0) target = $region29
    $region28: #{tpu_custom_call.1} parent=1 // pred_region
      %s102 = ssub.s32 128, 128
      %103 = vsyncadd [#allocation18], %s102
      %s105 = sshll.u32 [#allocation19], 4
      %s106 = int_to_ptr.vmem [resolvable:$true] %s105
      %108 = dma.hbm_to_vmem [thread:$0]  %s6, 128, %s106, [#allocation18]
    $region29: #{tpu_custom_call.1} parent=1 // pred_fallthru
      _
    // Predicated region
    $region30: #{tpu_custom_call.1} parent=1 // pred_check
      _
    $region31: #{tpu_custom_call.1} parent=1 // pred_check_branch
      %110 = sbr.rel (0) target = $region33
    $region32: #{tpu_custom_call.1} parent=1 // pred_region
      _
    $region33: #{tpu_custom_call.1} parent=1 // pred_fallthru
      _
    // Predicated region
    $region34: #{tpu_custom_call.1} parent=1 // pred_check
      _
    $region35: #{tpu_custom_call.1} parent=1 // pred_check_branch
      %112 = sbr.rel (0) target = $region37
    $region36: #{tpu_custom_call.1} parent=1 // pred_region
      %s114 = ssub.s32 256, 256
      %115 = vsyncadd [#allocation21], %s114
      %s116 = sshll.u32 [#allocation20], 4
      %s117 = int_to_ptr.vmem [resolvable:$true] %s116
      %122 = dma.hbm_to_vmem [thread:$0]  %s8, 256, %s117, [#allocation21], 64, 64, 4
    $region37: #{tpu_custom_call.1} parent=1 // pred_fallthru
      _
    // Predicated region
    $region38: #{tpu_custom_call.1} parent=1 // pred_check
      _
    $region39: #{tpu_custom_call.1} parent=1 // pred_check_branch
      %124 = sbr.rel (0) target = $region41
    $region40: #{tpu_custom_call.1} parent=1 // pred_region
      %s126 = ssub.s32 16, 16
      %127 = vsyncadd [#allocation21], %s126
      %s129 = sshll.u32 [#allocation22], 4
      %s130 = int_to_ptr.vmem [resolvable:$true] %s129
      %132 = dma.hbm_to_vmem [thread:$0]  %s9, 16, %s130, [#allocation21]
    $region41: #{tpu_custom_call.1} parent=1 // pred_fallthru
      _
    // Predicated region
    $region42: #{tpu_custom_call.1} parent=1 // pred_check
      _
    $region43: #{tpu_custom_call.1} parent=1 // pred_check_branch
      %134 = sbr.rel (0) target = $region45
    $region44: #{tpu_custom_call.1} parent=1 // pred_region
      _
    $region45: #{tpu_custom_call.1} parent=1 // pred_fallthru
      _
    // Predicated region
    $region46: #{tpu_custom_call.1} parent=1 // pred_check
      _
    $region47: #{tpu_custom_call.1} parent=1 // pred_check_branch
      %136 = sbr.rel (0) target = $region49
    $region48: #{tpu_custom_call.1} parent=1 // pred_region
      %s138 = ssub.s32 256, 256
      %139 = vsyncadd [#allocation24], %s138
      %s140 = sshll.u32 [#allocation23], 4
      %s141 = int_to_ptr.vmem [resolvable:$true] %s140
      %146 = dma.hbm_to_vmem [thread:$0]  %s11, 256, %s141, [#allocation24], 64, 64, 4
    $region49: #{tpu_custom_call.1} parent=1 // pred_fallthru
      _
    // Predicated region
    $region50: #{tpu_custom_call.1} parent=1 // pred_check
      _
    $region51: #{tpu_custom_call.1} parent=1 // pred_check_branch
      %148 = sbr.rel (0) target = $region53
    $region52: #{tpu_custom_call.1} parent=1 // pred_region
      %s150 = ssub.s32 16, 16
      %151 = vsyncadd [#allocation24], %s150
      %s153 = sshll.u32 [#allocation25], 4
      %s154 = int_to_ptr.vmem [resolvable:$true] %s153
      %156 = dma.hbm_to_vmem [thread:$0]  %s12, 16, %s154, [#allocation24]
    $region53: #{tpu_custom_call.1} parent=1 // pred_fallthru
      _
    // Predicated region
    $region54: #{tpu_custom_call.1} parent=1 // pred_check
      _
    $region55: #{tpu_custom_call.1} parent=1 // pred_check_branch
      %158 = sbr.rel (0) target = $region57
    $region56: #{tpu_custom_call.1} parent=1 // pred_region
      %s160 = ssub.s32 16, 16
      %161 = vsyncadd [#allocation27], %s160
      %s163 = sshll.u32 [#allocation26], 4
      %s164 = int_to_ptr.vmem [resolvable:$true] %s163
      %166 = dma.hbm_to_vmem [thread:$0]  %s13, 16, %s164, [#allocation27]
    $region57: #{tpu_custom_call.1} parent=1 // pred_fallthru
      _
    // Predicated region
    $region58: #{tpu_custom_call.1} parent=1 // pred_check
      _
    $region59: #{tpu_custom_call.1} parent=1 // pred_check_branch
      %168 = sbr.rel (0) target = $region61
    $region60: #{tpu_custom_call.1} parent=1 // pred_region
      _
    $region61: #{tpu_custom_call.1} parent=1 // pred_fallthru
      _
    // Predicated region
    $region62: #{tpu_custom_call.1} parent=1 // pred_check
      _
    $region63: #{tpu_custom_call.1} parent=1 // pred_check_branch
      %170 = sbr.rel (0) target = $region65
    $region64: #{tpu_custom_call.1} parent=1 // pred_region
      %s172 = ssub.s32 256, 256
      %173 = vsyncadd [#allocation27], %s172
      %s174 = sshll.u32 [#allocation28], 4
      %s175 = int_to_ptr.vmem [resolvable:$true] %s174
      %180 = dma.hbm_to_vmem [thread:$0]  %s15, 256, %s175, [#allocation27], 64, 64, 4
    $region65: #{tpu_custom_call.1} parent=1 // pred_fallthru
      _
    // Predicated region
    $region66: #{tpu_custom_call.1} parent=1 // pred_check
      _
    $region67: #{tpu_custom_call.1} parent=1 // pred_check_branch
      %182 = sbr.rel (0) target = $region69
    $region68: #{tpu_custom_call.1} parent=1 // pred_region
      %s184 = ssub.s32 256, 256
      %185 = vsyncadd [#allocation30], %s184
      %s186 = sshll.u32 [#allocation29], 4
      %s187 = int_to_ptr.vmem [resolvable:$true] %s186
      %192 = dma.hbm_to_vmem [thread:$0]  %s16, 256, %s187, [#allocation30], 64, 64, 4
    $region69: #{tpu_custom_call.1} parent=1 // pred_fallthru
      _
    // Predicated region
    $region70: #{tpu_custom_call.1} parent=1 // pred_check
      _
    $region71: #{tpu_custom_call.1} parent=1 // pred_check_branch
      %194 = sbr.rel (0) target = $region73
    $region72: #{tpu_custom_call.1} parent=1 // pred_region
      _
    $region73: #{tpu_custom_call.1} parent=1 // pred_fallthru
      _
    // Predicated region
    $region74: #{tpu_custom_call.1} parent=1 // pred_check
      _
    $region75: #{tpu_custom_call.1} parent=1 // pred_check_branch
      %196 = sbr.rel (0) target = $region77
    $region76: #{tpu_custom_call.1} parent=1 // pred_region
      _
    $region77: #{tpu_custom_call.1} parent=1 // pred_fallthru
      _
    // Predicated region
    $region78: #{tpu_custom_call.1} parent=1 // pred_check
      _
    $region79: #{tpu_custom_call.1} parent=1 // pred_check_branch
      %198 = sbr.rel (0) target = $region81
    $region80: #{tpu_custom_call.1} parent=1 // pred_region
      %s200 = ssub.s32 256, 256
      %201 = vsyncadd [#allocation30], %s200
      %s202 = sshll.u32 [#allocation31], 4
      %s203 = int_to_ptr.vmem [resolvable:$true] %s202
      %208 = dma.hbm_to_vmem [thread:$0]  %s19, 256, %s203, [#allocation30], 64, 64, 4
    $region81: #{tpu_custom_call.1} parent=1 // pred_fallthru
      _
    // Predicated region
    $region82: #{tpu_custom_call.1} parent=1 // pred_check
      _
    $region83: #{tpu_custom_call.1} parent=1 // pred_check_branch
      %210 = sbr.rel (0) target = $region85
    $region84: #{tpu_custom_call.1} parent=1 // pred_region
      _
    $region85: #{tpu_custom_call.1} parent=1 // pred_fallthru
      _
    // Predicated region
    $region86: #{tpu_custom_call.1} parent=1 // pred_check
      _
    $region87: #{tpu_custom_call.1} parent=1 // pred_check_branch
      %212 = sbr.rel (0) target = $region89
    $region88: #{tpu_custom_call.1} parent=1 // pred_region
      %213 = dma.done [#allocation9], 128
    $region89: #{tpu_custom_call.1} parent=1 // pred_fallthru
      _
    // Predicated region
    $region90: #{tpu_custom_call.1} parent=1 // pred_check
      _
    $region91: #{tpu_custom_call.1} parent=1 // pred_check_branch
      %215 = sbr.rel (0) target = $region93
    $region92: #{tpu_custom_call.1} parent=1 // pred_region
      %216 = dma.done [#allocation12], 128
    $region93: #{tpu_custom_call.1} parent=1 // pred_fallthru
      _
    // Predicated region
    $region94: #{tpu_custom_call.1} parent=1 // pred_check
      _
    $region95: #{tpu_custom_call.1} parent=1 // pred_check_branch
      %218 = sbr.rel (0) target = $region97
    $region96: #{tpu_custom_call.1} parent=1 // pred_region
      %219 = dma.done [#allocation12], 128
    $region97: #{tpu_custom_call.1} parent=1 // pred_fallthru
      _
    // Predicated region
    $region98: #{tpu_custom_call.1} parent=1 // pred_check
      _
    $region99: #{tpu_custom_call.1} parent=1 // pred_check_branch
      %221 = sbr.rel (0) target = $region101
    $region100: #{tpu_custom_call.1} parent=1 // pred_region
      %222 = dma.done [#allocation15], 1024
    $region101: #{tpu_custom_call.1} parent=1 // pred_fallthru
      _
    // Predicated region
    $region102: #{tpu_custom_call.1} parent=1 // pred_check
      _
    $region103: #{tpu_custom_call.1} parent=1 // pred_check_branch
      %224 = sbr.rel (0) target = $region105
    $region104: #{tpu_custom_call.1} parent=1 // pred_region
      %225 = dma.done [#allocation15], 128
    $region105: #{tpu_custom_call.1} parent=1 // pred_fallthru
      _
    // Predicated region
    $region106: #{tpu_custom_call.1} parent=1 // pred_check
      _
    $region107: #{tpu_custom_call.1} parent=1 // pred_check_branch
      %227 = sbr.rel (0) target = $region109
    $region108: #{tpu_custom_call.1} parent=1 // pred_region
      %228 = dma.done [#allocation18], 1024
    $region109: #{tpu_custom_call.1} parent=1 // pred_fallthru
      _
    // Predicated region
    $region110: #{tpu_custom_call.1} parent=1 // pred_check
      _
    $region111: #{tpu_custom_call.1} parent=1 // pred_check_branch
      %230 = sbr.rel (0) target = $region113
    $region112: #{tpu_custom_call.1} parent=1 // pred_region
      %231 = dma.done [#allocation18], 128
    $region113: #{tpu_custom_call.1} parent=1 // pred_fallthru
      _
    // Predicated region
    $region114: #{tpu_custom_call.1} parent=1 // pred_check
      _
    $region115: #{tpu_custom_call.1} parent=1 // pred_check_branch
      %233 = sbr.rel (0) target = $region117
    $region116: #{tpu_custom_call.1} parent=1 // pred_region
      %234 = dma.done [#allocation21], 256
    $region117: #{tpu_custom_call.1} parent=1 // pred_fallthru
      _
    // Predicated region
    $region118: #{tpu_custom_call.1} parent=1 // pred_check
      _
    $region119: #{tpu_custom_call.1} parent=1 // pred_check_branch
      %236 = sbr.rel (0) target = $region121
    $region120: #{tpu_custom_call.1} parent=1 // pred_region
      %237 = dma.done [#allocation21], 16
    $region121: #{tpu_custom_call.1} parent=1 // pred_fallthru
      _
    // Predicated region
    $region122: #{tpu_custom_call.1} parent=1 // pred_check
      _
    $region123: #{tpu_custom_call.1} parent=1 // pred_check_branch
      %239 = sbr.rel (0) target = $region125
    $region124: #{tpu_custom_call.1} parent=1 // pred_region
      %240 = dma.done [#allocation24], 256
    $region125: #{tpu_custom_call.1} parent=1 // pred_fallthru
      _
    // Predicated region
    $region126: #{tpu_custom_call.1} parent=1 // pred_check
      _
    $region127: #{tpu_custom_call.1} parent=1 // pred_check_branch
      %242 = sbr.rel (0) target = $region129
    $region128: #{tpu_custom_call.1} parent=1 // pred_region
      %243 = dma.done [#allocation24], 16
    $region129: #{tpu_custom_call.1} parent=1 // pred_fallthru
      _
    // Predicated region
    $region130: #{tpu_custom_call.1} parent=1 // pred_check
      _
    $region131: #{tpu_custom_call.1} parent=1 // pred_check_branch
      %245 = sbr.rel (0) target = $region133
    $region132: #{tpu_custom_call.1} parent=1 // pred_region
      %246 = dma.done [#allocation27], 16
    $region133: #{tpu_custom_call.1} parent=1 // pred_fallthru
      _
    // Predicated region
    $region134: #{tpu_custom_call.1} parent=1 // pred_check
      _
    $region135: #{tpu_custom_call.1} parent=1 // pred_check_branch
      %248 = sbr.rel (0) target = $region137
    $region136: #{tpu_custom_call.1} parent=1 // pred_region
      %249 = dma.done [#allocation27], 256
    $region137: #{tpu_custom_call.1} parent=1 // pred_fallthru
      _
    // Predicated region
    $region138: #{tpu_custom_call.1} parent=1 // pred_check
      _
    $region139: #{tpu_custom_call.1} parent=1 // pred_check_branch
      %251 = sbr.rel (0) target = $region141
    $region140: #{tpu_custom_call.1} parent=1 // pred_region
      %252 = dma.done [#allocation30], 256
    $region141: #{tpu_custom_call.1} parent=1 // pred_fallthru
      _
    // Predicated region
    $region142: #{tpu_custom_call.1} parent=1 // pred_check
      _
    $region143: #{tpu_custom_call.1} parent=1 // pred_check_branch
      %254 = sbr.rel (0) target = $region145
    $region144: #{tpu_custom_call.1} parent=1 // pred_region
      %255 = dma.done [#allocation30], 256
    $region145: #{tpu_custom_call.1} parent=1 // pred_fallthru
      _
    %p257 = scmp.eq.s32.totalorder 0, 0
    // Predicated region
    $region146: #{tpu_custom_call.1} parent=1 // pred_check
      %p258 = pneg %p257
    $region147: #{tpu_custom_call.1} parent=1 // pred_check_branch
      %260 = sbr.rel (%p258) target = $region149
    $region148: #{tpu_custom_call.1} parent=1 // pred_region
      %v261 = vld [vmem:[#allocation11] sm:$0xff]
      %v262 = vpack.c.bf16 %v261, %v261
      %v263 = vld [vmem:[%s7] sm:$0xf]
      %v264 = vld [vmem:[%s7 + $0x4] sm:$0xf]
      %v265 = vld [vmem:[%s7 + $0x8] sm:$0xf]
      %v266 = vld [vmem:[%s7 + $0xc] sm:$0xf]
      %v267 = vld [vmem:[#allocation8] sm:$0xff]
      %v268 = vpack.c.bf16 %v267, %v267
      %v269 = vld [vmem:[#allocation20] sm:$0xf]
      %v270 = vld [vmem:[#allocation20 + $0x4] sm:$0xf]
      %v271 = vld [vmem:[#allocation20 + $0x8] sm:$0xf]
      %v272 = vld [vmem:[#allocation20 + $0xc] sm:$0xf]
      %v277 = vunpack.c.l.b16 %v269
      %v278 = vunpack.c.l.b16 %v270
      %v279 = vunpack.c.l.b16 %v271
      %v280 = vunpack.c.l.b16 %v272
      %v281 = vpack.c.b16 %v278, %v277
      %v282 = vpack.c.b16 %v280, %v279
      %vm285 = vcmask 261120
      %v287 = vsel %vm285, %v268, 0
      %289 = vmatprep.subr.bf16.mxu0 0
      %290 = vmatpush1.bf16.msra.mxu0 %v281
      %291 = vmatprep.subr.bf16.mxu0 0
      %292 = vmatpush1.bf16.msra.mxu0 %v282
      %293 = vmatprep.subr.bf16.mxu0 0
      %294 = vmatpush1.bf16.msra.mxu0 0
      %295 = vmatprep.subr.bf16.mxu0 0
      %296 = vmatpush1.bf16.msra.mxu0 0
      %297 = vmatprep.subr.bf16.mxu0 0
      %298 = vmatpush1.bf16.msra.mxu0 0
      %299 = vmatprep.subr.bf16.mxu0 0
      %300 = vmatpush1.bf16.msra.mxu0 0
      %301 = vmatprep.subr.bf16.mxu0 0
      %302 = vmatpush1.bf16.msra.mxu0 0
      %303 = vmatprep.subr.bf16.mxu0 0
      %304 = vmatpush1.bf16.msra.mxu0 0
      %305 = vmatprep.subr.bf16.mxu0 0
      %306 = vmatpush1.bf16.msra.mxu0 0
      %307 = vmatprep.subr.bf16.mxu0 0
      %308 = vmatpush1.bf16.msra.mxu0 0
      %309 = vmatprep.subr.bf16.mxu0 0
      %310 = vmatpush1.bf16.msra.mxu0 0
      %311 = vmatprep.subr.bf16.mxu0 0
      %312 = vmatpush1.bf16.msra.mxu0 0
      %313 = vmatprep.subr.bf16.mxu0 0
      %314 = vmatpush1.bf16.msra.mxu0 0
      %315 = vmatprep.subr.bf16.mxu0 0
      %316 = vmatpush1.bf16.msra.mxu0 0
      %317 = vmatprep.subr.bf16.mxu0 0
      %318 = vmatpush1.bf16.msra.mxu0 0
      %319 = vmatprep.subr.bf16.mxu0 0
      %320 = vmatpush1.bf16.msra.mxu0 0
      %321 = vmatprep.mubr.bf16.mxu0 0
      %322 = vmatmul.mubr.bf16.gmra.mrb[0].mxu0 %v287
      %v323 = vpop.f32.mrb[0].mxu0
      %v324 = vadd.f32 0.0, %v323
      %v325 = vpop.f32.mrb[0].mxu0
      %v326 = vpop.f32.mrb[0].mxu0
      %v327 = vpop.f32.mrb[0].mxu0
      %328 = vdwg.mxu0
      %v333 = vunpack.c.l.b16 %v263
      %v334 = vunpack.c.l.b16 %v264
      %v335 = vunpack.c.l.b16 %v265
      %v336 = vunpack.c.l.b16 %v266
      %v337 = vpack.c.b16 %v334, %v333
      %v338 = vpack.c.b16 %v336, %v335
      %v342 = vsel %vm285, %v262, 0
      %344 = vmatprep.subr.bf16.mxu0 0
      %345 = vmatpush1.bf16.msra.mxu0 %v337
      %346 = vmatprep.subr.bf16.mxu0 0
      %347 = vmatpush1.bf16.msra.mxu0 %v338
      %348 = vmatprep.subr.bf16.mxu0 0
      %349 = vmatpush1.bf16.msra.mxu0 0
      %350 = vmatprep.subr.bf16.mxu0 0
      %351 = vmatpush1.bf16.msra.mxu0 0
      %352 = vmatprep.subr.bf16.mxu0 0
      %353 = vmatpush1.bf16.msra.mxu0 0
      %354 = vmatprep.subr.bf16.mxu0 0
      %355 = vmatpush1.bf16.msra.mxu0 0
      %356 = vmatprep.subr.bf16.mxu0 0
      %357 = vmatpush1.bf16.msra.mxu0 0
      %358 = vmatprep.subr.bf16.mxu0 0
      %359 = vmatpush1.bf16.msra.mxu0 0
      %360 = vmatprep.subr.bf16.mxu0 0
      %361 = vmatpush1.bf16.msra.mxu0 0
      %362 = vmatprep.subr.bf16.mxu0 0
      %363 = vmatpush1.bf16.msra.mxu0 0
      %364 = vmatprep.subr.bf16.mxu0 0
      %365 = vmatpush1.bf16.msra.mxu0 0
      %366 = vmatprep.subr.bf16.mxu0 0
      %367 = vmatpush1.bf16.msra.mxu0 0
      %368 = vmatprep.subr.bf16.mxu0 0
      %369 = vmatpush1.bf16.msra.mxu0 0
      %370 = vmatprep.subr.bf16.mxu0 0
      %371 = vmatpush1.bf16.msra.mxu0 0
      %372 = vmatprep.subr.bf16.mxu0 0
      %373 = vmatpush1.bf16.msra.mxu0 0
      %374 = vmatprep.subr.bf16.mxu0 0
      %375 = vmatpush1.bf16.msra.mxu0 0
      %376 = vmatprep.mubr.bf16.mxu0 0
      %377 = vmatmul.mubr.bf16.gmra.mrb[0].mxu0 %v342
      %v378 = vpop.f32.mrb[0].mxu0
      %v379 = vadd.f32 %v324, %v378
      %v380 = vpop.f32.mrb[0].mxu0
      %v381 = vpop.f32.mrb[0].mxu0
      %v382 = vpop.f32.mrb[0].mxu0
      %383 = vdwg.mxu0
      %v384 = vld [vmem:[#allocation22] sm:$0x1]
      %v386 = vlaneseq
      %v387 = vshrl.u32 %v386, 7
      %v388 = vsub.s32 0, %v387
      %v389 = vrot.slane %v384, %v388
      %v391 = vadd.f32 %v379, %v389
      %v392 = vld [vmem:[#allocation13] sm:$0xff]
      %v393 = vpack.c.bf16 %v391, %v391
      %v394 = vld [vmem:[%s10] sm:$0xf]
      %v395 = vld [vmem:[%s10 + $0x4] sm:$0xf]
      %v396 = vld [vmem:[%s10 + $0x8] sm:$0xf]
      %v397 = vld [vmem:[%s10 + $0xc] sm:$0xf]
      %v398 = vld [vmem:[#allocation25] sm:$0x1]
      %v400 = vlaneseq
      %v401 = vshrl.u32 %v400, 7
      %v402 = vsub.s32 0, %v401
      %v403 = vrot.slane %v398, %v402
      %v409 = vunpack.c.l.b16 %v394
      %v410 = vunpack.c.l.b16 %v395
      %v411 = vunpack.c.l.b16 %v396
      %v412 = vunpack.c.l.b16 %v397
      %v413 = vpack.c.b16 %v410, %v409
      %v414 = vpack.c.b16 %v412, %v411
      %v418 = vsel %vm285, %v393, 0
      %420 = vmatprep.subr.bf16.mxu0 0
      %421 = vmatpush1.bf16.msra.mxu0 %v413
      %422 = vmatprep.subr.bf16.mxu0 0
      %423 = vmatpush1.bf16.msra.mxu0 %v414
      %424 = vmatprep.subr.bf16.mxu0 0
      %425 = vmatpush1.bf16.msra.mxu0 0
      %426 = vmatprep.subr.bf16.mxu0 0
      %427 = vmatpush1.bf16.msra.mxu0 0
      %428 = vmatprep.subr.bf16.mxu0 0
      %429 = vmatpush1.bf16.msra.mxu0 0
      %430 = vmatprep.subr.bf16.mxu0 0
      %431 = vmatpush1.bf16.msra.mxu0 0
      %432 = vmatprep.subr.bf16.mxu0 0
      %433 = vmatpush1.bf16.msra.mxu0 0
      %434 = vmatprep.subr.bf16.mxu0 0
      %435 = vmatpush1.bf16.msra.mxu0 0
      %436 = vmatprep.subr.bf16.mxu0 0
      %437 = vmatpush1.bf16.msra.mxu0 0
      %438 = vmatprep.subr.bf16.mxu0 0
      %439 = vmatpush1.bf16.msra.mxu0 0
      %440 = vmatprep.subr.bf16.mxu0 0
      %441 = vmatpush1.bf16.msra.mxu0 0
      %442 = vmatprep.subr.bf16.mxu0 0
      %443 = vmatpush1.bf16.msra.mxu0 0
      %444 = vmatprep.subr.bf16.mxu0 0
      %445 = vmatpush1.bf16.msra.mxu0 0
      %446 = vmatprep.subr.bf16.mxu0 0
      %447 = vmatpush1.bf16.msra.mxu0 0
      %448 = vmatprep.subr.bf16.mxu0 0
      %449 = vmatpush1.bf16.msra.mxu0 0
      %450 = vmatprep.subr.bf16.mxu0 0
      %451 = vmatpush1.bf16.msra.mxu0 0
      %452 = vmatprep.mubr.bf16.mxu0 0
      %453 = vmatmul.mubr.bf16.gmra.mrb[0].mxu0 %v418
      %v454 = vpop.f32.mrb[0].mxu0
      %v455 = vadd.f32 %v403, %v454
      %v456 = vpop.f32.mrb[0].mxu0
      %v457 = vpop.f32.mrb[0].mxu0
      %v458 = vpop.f32.mrb[0].mxu0
      %459 = vdwg.mxu0
      %v460 = vpack.c.bf16 %v392, %v392
      %v461 = vld [vmem:[#allocation23] sm:$0xf]
      %v462 = vld [vmem:[#allocation23 + $0x4] sm:$0xf]
      %v463 = vld [vmem:[#allocation23 + $0x8] sm:$0xf]
      %v464 = vld [vmem:[#allocation23 + $0xc] sm:$0xf]
      %v465 = vld [vmem:[#allocation26] sm:$0x1]
      %v467 = vlaneseq
      %v468 = vshrl.u32 %v467, 7
      %v469 = vsub.s32 0, %v468
      %v470 = vrot.slane %v465, %v469
      %v476 = vunpack.c.l.b16 %v461
      %v477 = vunpack.c.l.b16 %v462
      %v478 = vunpack.c.l.b16 %v463
      %v479 = vunpack.c.l.b16 %v464
      %v480 = vpack.c.b16 %v477, %v476
      %v481 = vpack.c.b16 %v479, %v478
      %v485 = vsel %vm285, %v460, 0
      %487 = vmatprep.subr.bf16.mxu0 0
      %488 = vmatpush1.bf16.msra.mxu0 %v480
      %489 = vmatprep.subr.bf16.mxu0 0
      %490 = vmatpush1.bf16.msra.mxu0 %v481
      %491 = vmatprep.subr.bf16.mxu0 0
      %492 = vmatpush1.bf16.msra.mxu0 0
      %493 = vmatprep.subr.bf16.mxu0 0
      %494 = vmatpush1.bf16.msra.mxu0 0
      %495 = vmatprep.subr.bf16.mxu0 0
      %496 = vmatpush1.bf16.msra.mxu0 0
      %497 = vmatprep.subr.bf16.mxu0 0
      %498 = vmatpush1.bf16.msra.mxu0 0
      %499 = vmatprep.subr.bf16.mxu0 0
      %500 = vmatpush1.bf16.msra.mxu0 0
      %501 = vmatprep.subr.bf16.mxu0 0
      %502 = vmatpush1.bf16.msra.mxu0 0
      %503 = vmatprep.subr.bf16.mxu0 0
      %504 = vmatpush1.bf16.msra.mxu0 0
      %505 = vmatprep.subr.bf16.mxu0 0
      %506 = vmatpush1.bf16.msra.mxu0 0
      %507 = vmatprep.subr.bf16.mxu0 0
      %508 = vmatpush1.bf16.msra.mxu0 0
      %509 = vmatprep.subr.bf16.mxu0 0
      %510 = vmatpush1.bf16.msra.mxu0 0
      %511 = vmatprep.subr.bf16.mxu0 0
      %512 = vmatpush1.bf16.msra.mxu0 0
      %513 = vmatprep.subr.bf16.mxu0 0
      %514 = vmatpush1.bf16.msra.mxu0 0
      %515 = vmatprep.subr.bf16.mxu0 0
      %516 = vmatpush1.bf16.msra.mxu0 0
      %517 = vmatprep.subr.bf16.mxu0 0
      %518 = vmatpush1.bf16.msra.mxu0 0
      %519 = vmatprep.mubr.bf16.mxu0 0
      %520 = vmatmul.mubr.bf16.gmra.mrb[0].mxu0 %v485
      %v521 = vpop.f32.mrb[0].mxu0
      %v522 = vadd.f32 %v470, %v521
      %v523 = vpop.f32.mrb[0].mxu0
      %v524 = vpop.f32.mrb[0].mxu0
      %v525 = vpop.f32.mrb[0].mxu0
      %526 = vdwg.mxu0
      %v527 = vadd.f32 %v455, %v522
      %v528 = vxor.u32 %v527, 2147483648
      %v529 = vmul.f32 %v528, 1.442695
      %v530 = vpow.pop %v529
      %v531 = vadd.f32 %v530, 1.0
      %v532 = vrcp.pop %v531
      %v533 = vmul.f32 1.0, %v532
      %535 = vrot.lane.b32.xlu0 %v522, 64
      %v536 = vpop.permute.xlu0 %535
      %v538 = vmul.f32 %v533, %v536
      %540 = vrot.lane.b32.xlu0 %v538, 64
      %v541 = vpop.permute.xlu0 %540
      %v543 = vadd.f32 %v455, %v541
      %v544 = vtanh.pop %v543
      %v545 = vsub.f32 1.0, %v533
      %547 = vrot.lane.b32.xlu0 %v544, 96
      %v548 = vpop.permute.xlu0 %547
      %v550 = vmul.f32 %v545, %v548
      %552 = vrot.lane.b32.xlu0 %v392, 32
      %v553 = vpop.permute.xlu0 %552
      %v555 = vmul.f32 %v533, %v553
      %v556 = vadd.f32 %v550, %v555
      %v557 = vld [vmem:[#allocation19] sm:$0xff]
      %v558 = vld [vmem:[#allocation17] sm:$0xff]
      %v559 = vld [vmem:[#allocation17 + $0x8] sm:$0xff]
      %v560 = vld [vmem:[#allocation17 + $0x10] sm:$0xff]
      %v561 = vld [vmem:[#allocation17 + $0x18] sm:$0xff]
      %v562 = vld [vmem:[#allocation17 + $0x20] sm:$0xff]
      %v563 = vld [vmem:[#allocation17 + $0x28] sm:$0xff]
      %v564 = vld [vmem:[#allocation17 + $0x30] sm:$0xff]
      %v565 = vld [vmem:[#allocation17 + $0x38] sm:$0xff]
      %v566 = vpack.c.bf16 %v558, %v558
      %v567 = vpack.c.bf16 %v559, %v559
      %v568 = vpack.c.bf16 %v560, %v560
      %v569 = vpack.c.bf16 %v561, %v561
      %v570 = vpack.c.bf16 %v562, %v562
      %v571 = vpack.c.bf16 %v563, %v563
      %v572 = vpack.c.bf16 %v564, %v564
      %v573 = vpack.c.bf16 %v565, %v565
      %v574 = vpack.c.bf16 %v556, %v556
      %v575 = vld [vmem:[%s14] sm:$0xf]
      %v576 = vld [vmem:[%s14 + $0x4] sm:$0xf]
      %v577 = vld [vmem:[%s14 + $0x8] sm:$0xf]
      %v578 = vld [vmem:[%s14 + $0xc] sm:$0xf]
      %580 = vrot.lane.b32.xlu0 %v574, 96
      %v581 = vpop.permute.xlu0 %580
      %v586 = vunpack.c.l.b16 %v575
      %v587 = vunpack.c.l.b16 %v576
      %v588 = vunpack.c.l.b16 %v577
      %v589 = vunpack.c.l.b16 %v578
      %v590 = vpack.c.b16 %v587, %v586
      %v591 = vpack.c.b16 %v589, %v588
      %v595 = vsel %vm285, %v581, 0
      %597 = vmatprep.subr.bf16.mxu0 0
      %598 = vmatpush1.bf16.msra.mxu0 %v590
      %599 = vmatprep.subr.bf16.mxu0 0
      %600 = vmatpush1.bf16.msra.mxu0 %v591
      %601 = vmatprep.subr.bf16.mxu0 0
      %602 = vmatpush1.bf16.msra.mxu0 0
      %603 = vmatprep.subr.bf16.mxu0 0
      %604 = vmatpush1.bf16.msra.mxu0 0
      %605 = vmatprep.subr.bf16.mxu0 0
      %606 = vmatpush1.bf16.msra.mxu0 0
      %607 = vmatprep.subr.bf16.mxu0 0
      %608 = vmatpush1.bf16.msra.mxu0 0
      %609 = vmatprep.subr.bf16.mxu0 0
      %610 = vmatpush1.bf16.msra.mxu0 0
      %611 = vmatprep.subr.bf16.mxu0 0
      %612 = vmatpush1.bf16.msra.mxu0 0
      %613 = vmatprep.subr.bf16.mxu0 0
      %614 = vmatpush1.bf16.msra.mxu0 0
      %615 = vmatprep.subr.bf16.mxu0 0
      %616 = vmatpush1.bf16.msra.mxu0 0
      %617 = vmatprep.subr.bf16.mxu0 0
      %618 = vmatpush1.bf16.msra.mxu0 0
      %619 = vmatprep.subr.bf16.mxu0 0
      %620 = vmatpush1.bf16.msra.mxu0 0
      %621 = vmatprep.subr.bf16.mxu0 0
      %622 = vmatpush1.bf16.msra.mxu0 0
      %623 = vmatprep.subr.bf16.mxu0 0
      %624 = vmatpush1.bf16.msra.mxu0 0
      %625 = vmatprep.subr.bf16.mxu0 0
      %626 = vmatpush1.bf16.msra.mxu0 0
      %627 = vmatprep.subr.bf16.mxu0 0
      %628 = vmatpush1.bf16.msra.mxu0 0
      %629 = vmatprep.mubr.bf16.mxu0 0
      %630 = vmatmul.mubr.bf16.gmra.mrb[0].mxu0 %v595
      %v631 = vpop.f32.mrb[0].mxu0
      %v632 = vadd.f32 0.0, %v631
      %v633 = vpop.f32.mrb[0].mxu0
      %v634 = vpop.f32.mrb[0].mxu0
      %v635 = vpop.f32.mrb[0].mxu0
      %636 = vdwg.mxu0
      %v637 = vpack.c.bf16 %v632, %v632
      %v640 = vunpack.c.l.s4 1966171168
      %v641 = vunpack.c.0.s8 %v640
      %v642 = vlaneseq
      %v643 = vshrl.u32 %v642, 7
      %v644 = vsub.s32 %v641, %v643
      %v645 = vrot.slane %v637, %v644
      %v646 = vcombine.high %v645, %v645
      %v648 = vunpack.c.l.s4 1966171168
      %v649 = vunpack.c.0.s8 %v648
      %v650 = vlaneseq
      %v651 = vshrl.u32 %v650, 7
      %v652 = vsub.s32 %v649, %v651
      %v653 = vrot.slane %v645, %v652
      %v655 = vunpack.c.l.s4 1966171168
      %v656 = vunpack.c.0.s8 %v655
      %v657 = vlaneseq
      %v658 = vshrl.u32 %v657, 7
      %v659 = vsub.s32 %v656, %v658
      %v660 = vrot.slane %v646, %v659
      %v661 = vcombine.high %v653, %v653
      %v662 = vcombine.high %v660, %v660
      %v663 = vunpack.i.l.s16 %v653
      %v664 = vunpack.i.h.s16 %v653
      %v665 = vunpack.i.l.s16 %v660
      %v666 = vunpack.i.h.s16 %v660
      %v667 = vunpack.i.l.s16 %v661
      %v668 = vunpack.i.h.s16 %v661
      %v669 = vunpack.i.l.s16 %v662
      %v670 = vunpack.i.h.s16 %v662
      %v671 = vpack.i.b16 %v663, %v663
      %v672 = vlaneseq
      %v673 = vshrl.u32 %v672, 7
      %v674 = vsub.s32 0, %v673
      %v675 = vrot.slane %v671, %v674
      %v677 = vsel %vm285, %v675, 0
      %v680 = vsel %vm285, %v566, 0
      %682 = vmatprep.subr.bf16.mxu0 0
      %683 = vmatpush1.bf16.xpose.msra.mxu0 %v680
      %684 = vmatprep.subr.bf16.mxu0 0
      %685 = vmatpush1.bf16.xpose.msra.mxu0 0
      %686 = vmatprep.subr.bf16.mxu0 0
      %687 = vmatpush1.bf16.xpose.msra.mxu0 0
      %688 = vmatprep.subr.bf16.mxu0 0
      %689 = vmatpush1.bf16.xpose.msra.mxu0 0
      %690 = vmatprep.subr.bf16.mxu0 0
      %691 = vmatpush1.bf16.xpose.msra.mxu0 0
      %692 = vmatprep.subr.bf16.mxu0 0
      %693 = vmatpush1.bf16.xpose.msra.mxu0 0
      %694 = vmatprep.subr.bf16.mxu0 0
      %695 = vmatpush1.bf16.xpose.msra.mxu0 0
      %696 = vmatprep.subr.bf16.mxu0 0
      %697 = vmatpush1.bf16.xpose.msra.mxu0 0
      %698 = vmatprep.subr.bf16.mxu0 0
      %699 = vmatpush1.bf16.xpose.msra.mxu0 0
      %700 = vmatprep.subr.bf16.mxu0 0
      %701 = vmatpush1.bf16.xpose.msra.mxu0 0
      %702 = vmatprep.subr.bf16.mxu0 0
      %703 = vmatpush1.bf16.xpose.msra.mxu0 0
      %704 = vmatprep.subr.bf16.mxu0 0
      %705 = vmatpush1.bf16.xpose.msra.mxu0 0
      %706 = vmatprep.subr.bf16.mxu0 0
      %707 = vmatpush1.bf16.xpose.msra.mxu0 0
      %708 = vmatprep.subr.bf16.mxu0 0
      %709 = vmatpush1.bf16.xpose.msra.mxu0 0
      %710 = vmatprep.subr.bf16.mxu0 0
      %711 = vmatpush1.bf16.xpose.msra.mxu0 0
      %712 = vmatprep.subr.bf16.mxu0 0
      %713 = vmatpush1.bf16.xpose.msra.mxu0 0
      %714 = vmatprep.mubr.bf16.mxu0 0
      %715 = vmatmul.mubr.bf16.gmra.mrb[0].mxu0 %v677
      %v716 = vpop.f32.mrb[0].mxu0
      %v717 = vadd.f32 0.0, %v716
      %v718 = vpop.f32.mrb[0].mxu0
      %v719 = vpop.f32.mrb[0].mxu0
      %v720 = vpop.f32.mrb[0].mxu0
      %721 = vdwg.mxu0
      %v722 = vpack.i.b16 %v664, %v664
      %v723 = vlaneseq
      %v724 = vshrl.u32 %v723, 7
      %v725 = vsub.s32 0, %v724
      %v726 = vrot.slane %v722, %v725
      %v728 = vsel %vm285, %v726, 0
      %v731 = vsel %vm285, %v567, 0
      %733 = vmatprep.subr.bf16.mxu0 0
      %734 = vmatpush1.bf16.xpose.msra.mxu0 %v731
      %735 = vmatprep.subr.bf16.mxu0 0
      %736 = vmatpush1.bf16.xpose.msra.mxu0 0
      %737 = vmatprep.subr.bf16.mxu0 0
      %738 = vmatpush1.bf16.xpose.msra.mxu0 0
      %739 = vmatprep.subr.bf16.mxu0 0
      %740 = vmatpush1.bf16.xpose.msra.mxu0 0
      %741 = vmatprep.subr.bf16.mxu0 0
      %742 = vmatpush1.bf16.xpose.msra.mxu0 0
      %743 = vmatprep.subr.bf16.mxu0 0
      %744 = vmatpush1.bf16.xpose.msra.mxu0 0
      %745 = vmatprep.subr.bf16.mxu0 0
      %746 = vmatpush1.bf16.xpose.msra.mxu0 0
      %747 = vmatprep.subr.bf16.mxu0 0
      %748 = vmatpush1.bf16.xpose.msra.mxu0 0
      %749 = vmatprep.subr.bf16.mxu0 0
      %750 = vmatpush1.bf16.xpose.msra.mxu0 0
      %751 = vmatprep.subr.bf16.mxu0 0
      %752 = vmatpush1.bf16.xpose.msra.mxu0 0
      %753 = vmatprep.subr.bf16.mxu0 0
      %754 = vmatpush1.bf16.xpose.msra.mxu0 0
      %755 = vmatprep.subr.bf16.mxu0 0
      %756 = vmatpush1.bf16.xpose.msra.mxu0 0
      %757 = vmatprep.subr.bf16.mxu0 0
      %758 = vmatpush1.bf16.xpose.msra.mxu0 0
      %759 = vmatprep.subr.bf16.mxu0 0
      %760 = vmatpush1.bf16.xpose.msra.mxu0 0
      %761 = vmatprep.subr.bf16.mxu0 0
      %762 = vmatpush1.bf16.xpose.msra.mxu0 0
      %763 = vmatprep.subr.bf16.mxu0 0
      %764 = vmatpush1.bf16.xpose.msra.mxu0 0
      %765 = vmatprep.mubr.bf16.mxu0 0
      %766 = vmatmul.mubr.bf16.gmra.mrb[0].mxu0 %v728
      %v767 = vpop.f32.mrb[0].mxu0
      %v768 = vadd.f32 0.0, %v767
      %v769 = vpop.f32.mrb[0].mxu0
      %v770 = vpop.f32.mrb[0].mxu0
      %v771 = vpop.f32.mrb[0].mxu0
      %772 = vdwg.mxu0
      %v773 = vpack.i.b16 %v665, %v665
      %v774 = vlaneseq
      %v775 = vshrl.u32 %v774, 7
      %v776 = vsub.s32 0, %v775
      %v777 = vrot.slane %v773, %v776
      %v779 = vsel %vm285, %v777, 0
      %v782 = vsel %vm285, %v568, 0
      %784 = vmatprep.subr.bf16.mxu0 0
      %785 = vmatpush1.bf16.xpose.msra.mxu0 %v782
      %786 = vmatprep.subr.bf16.mxu0 0
      %787 = vmatpush1.bf16.xpose.msra.mxu0 0
      %788 = vmatprep.subr.bf16.mxu0 0
      %789 = vmatpush1.bf16.xpose.msra.mxu0 0
      %790 = vmatprep.subr.bf16.mxu0 0
      %791 = vmatpush1.bf16.xpose.msra.mxu0 0
      %792 = vmatprep.subr.bf16.mxu0 0
      %793 = vmatpush1.bf16.xpose.msra.mxu0 0
      %794 = vmatprep.subr.bf16.mxu0 0
      %795 = vmatpush1.bf16.xpose.msra.mxu0 0
      %796 = vmatprep.subr.bf16.mxu0 0
      %797 = vmatpush1.bf16.xpose.msra.mxu0 0
      %798 = vmatprep.subr.bf16.mxu0 0
      %799 = vmatpush1.bf16.xpose.msra.mxu0 0
      %800 = vmatprep.subr.bf16.mxu0 0
      %801 = vmatpush1.bf16.xpose.msra.mxu0 0
      %802 = vmatprep.subr.bf16.mxu0 0
      %803 = vmatpush1.bf16.xpose.msra.mxu0 0
      %804 = vmatprep.subr.bf16.mxu0 0
      %805 = vmatpush1.bf16.xpose.msra.mxu0 0
      %806 = vmatprep.subr.bf16.mxu0 0
      %807 = vmatpush1.bf16.xpose.msra.mxu0 0
      %808 = vmatprep.subr.bf16.mxu0 0
      %809 = vmatpush1.bf16.xpose.msra.mxu0 0
      %810 = vmatprep.subr.bf16.mxu0 0
      %811 = vmatpush1.bf16.xpose.msra.mxu0 0
      %812 = vmatprep.subr.bf16.mxu0 0
      %813 = vmatpush1.bf16.xpose.msra.mxu0 0
      %814 = vmatprep.subr.bf16.mxu0 0
      %815 = vmatpush1.bf16.xpose.msra.mxu0 0
      %816 = vmatprep.mubr.bf16.mxu0 0
      %817 = vmatmul.mubr.bf16.gmra.mrb[0].mxu0 %v779
      %v818 = vpop.f32.mrb[0].mxu0
      %v819 = vadd.f32 0.0, %v818
      %v820 = vpop.f32.mrb[0].mxu0
      %v821 = vpop.f32.mrb[0].mxu0
      %v822 = vpop.f32.mrb[0].mxu0
      %823 = vdwg.mxu0
      %v824 = vpack.i.b16 %v666, %v666
      %v825 = vlaneseq
      %v826 = vshrl.u32 %v825, 7
      %v827 = vsub.s32 0, %v826
      %v828 = vrot.slane %v824, %v827
      %v830 = vsel %vm285, %v828, 0
      %v833 = vsel %vm285, %v569, 0
      %835 = vmatprep.subr.bf16.mxu0 0
      %836 = vmatpush1.bf16.xpose.msra.mxu0 %v833
      %837 = vmatprep.subr.bf16.mxu0 0
      %838 = vmatpush1.bf16.xpose.msra.mxu0 0
      %839 = vmatprep.subr.bf16.mxu0 0
      %840 = vmatpush1.bf16.xpose.msra.mxu0 0
      %841 = vmatprep.subr.bf16.mxu0 0
      %842 = vmatpush1.bf16.xpose.msra.mxu0 0
      %843 = vmatprep.subr.bf16.mxu0 0
      %844 = vmatpush1.bf16.xpose.msra.mxu0 0
      %845 = vmatprep.subr.bf16.mxu0 0
      %846 = vmatpush1.bf16.xpose.msra.mxu0 0
      %847 = vmatprep.subr.bf16.mxu0 0
      %848 = vmatpush1.bf16.xpose.msra.mxu0 0
      %849 = vmatprep.subr.bf16.mxu0 0
      %850 = vmatpush1.bf16.xpose.msra.mxu0 0
      %851 = vmatprep.subr.bf16.mxu0 0
      %852 = vmatpush1.bf16.xpose.msra.mxu0 0
      %853 = vmatprep.subr.bf16.mxu0 0
      %854 = vmatpush1.bf16.xpose.msra.mxu0 0
      %855 = vmatprep.subr.bf16.mxu0 0
      %856 = vmatpush1.bf16.xpose.msra.mxu0 0
      %857 = vmatprep.subr.bf16.mxu0 0
      %858 = vmatpush1.bf16.xpose.msra.mxu0 0
      %859 = vmatprep.subr.bf16.mxu0 0
      %860 = vmatpush1.bf16.xpose.msra.mxu0 0
      %861 = vmatprep.subr.bf16.mxu0 0
      %862 = vmatpush1.bf16.xpose.msra.mxu0 0
      %863 = vmatprep.subr.bf16.mxu0 0
      %864 = vmatpush1.bf16.xpose.msra.mxu0 0
      %865 = vmatprep.subr.bf16.mxu0 0
      %866 = vmatpush1.bf16.xpose.msra.mxu0 0
      %867 = vmatprep.mubr.bf16.mxu0 0
      %868 = vmatmul.mubr.bf16.gmra.mrb[0].mxu0 %v830
      %v869 = vpop.f32.mrb[0].mxu0
      %v870 = vadd.f32 0.0, %v869
      %v871 = vpop.f32.mrb[0].mxu0
      %v872 = vpop.f32.mrb[0].mxu0
      %v873 = vpop.f32.mrb[0].mxu0
      %874 = vdwg.mxu0
      %v875 = vpack.i.b16 %v667, %v667
      %v876 = vlaneseq
      %v877 = vshrl.u32 %v876, 7
      %v878 = vsub.s32 0, %v877
      %v879 = vrot.slane %v875, %v878
      %v881 = vsel %vm285, %v879, 0
      %v884 = vsel %vm285, %v570, 0
      %886 = vmatprep.subr.bf16.mxu0 0
      %887 = vmatpush1.bf16.xpose.msra.mxu0 %v884
      %888 = vmatprep.subr.bf16.mxu0 0
      %889 = vmatpush1.bf16.xpose.msra.mxu0 0
      %890 = vmatprep.subr.bf16.mxu0 0
      %891 = vmatpush1.bf16.xpose.msra.mxu0 0
      %892 = vmatprep.subr.bf16.mxu0 0
      %893 = vmatpush1.bf16.xpose.msra.mxu0 0
      %894 = vmatprep.subr.bf16.mxu0 0
      %895 = vmatpush1.bf16.xpose.msra.mxu0 0
      %896 = vmatprep.subr.bf16.mxu0 0
      %897 = vmatpush1.bf16.xpose.msra.mxu0 0
      %898 = vmatprep.subr.bf16.mxu0 0
      %899 = vmatpush1.bf16.xpose.msra.mxu0 0
      %900 = vmatprep.subr.bf16.mxu0 0
      %901 = vmatpush1.bf16.xpose.msra.mxu0 0
      %902 = vmatprep.subr.bf16.mxu0 0
      %903 = vmatpush1.bf16.xpose.msra.mxu0 0
      %904 = vmatprep.subr.bf16.mxu0 0
      %905 = vmatpush1.bf16.xpose.msra.mxu0 0
      %906 = vmatprep.subr.bf16.mxu0 0
      %907 = vmatpush1.bf16.xpose.msra.mxu0 0
      %908 = vmatprep.subr.bf16.mxu0 0
      %909 = vmatpush1.bf16.xpose.msra.mxu0 0
      %910 = vmatprep.subr.bf16.mxu0 0
      %911 = vmatpush1.bf16.xpose.msra.mxu0 0
      %912 = vmatprep.subr.bf16.mxu0 0
      %913 = vmatpush1.bf16.xpose.msra.mxu0 0
      %914 = vmatprep.subr.bf16.mxu0 0
      %915 = vmatpush1.bf16.xpose.msra.mxu0 0
      %916 = vmatprep.subr.bf16.mxu0 0
      %917 = vmatpush1.bf16.xpose.msra.mxu0 0
      %918 = vmatprep.mubr.bf16.mxu0 0
      %919 = vmatmul.mubr.bf16.gmra.mrb[0].mxu0 %v881
      %v920 = vpop.f32.mrb[0].mxu0
      %v921 = vadd.f32 0.0, %v920
      %v922 = vpop.f32.mrb[0].mxu0
      %v923 = vpop.f32.mrb[0].mxu0
      %v924 = vpop.f32.mrb[0].mxu0
      %925 = vdwg.mxu0
      %v926 = vpack.i.b16 %v668, %v668
      %v927 = vlaneseq
      %v928 = vshrl.u32 %v927, 7
      %v929 = vsub.s32 0, %v928
      %v930 = vrot.slane %v926, %v929
      %v932 = vsel %vm285, %v930, 0
      %v935 = vsel %vm285, %v571, 0
      %937 = vmatprep.subr.bf16.mxu0 0
      %938 = vmatpush1.bf16.xpose.msra.mxu0 %v935
      %939 = vmatprep.subr.bf16.mxu0 0
      %940 = vmatpush1.bf16.xpose.msra.mxu0 0
      %941 = vmatprep.subr.bf16.mxu0 0
      %942 = vmatpush1.bf16.xpose.msra.mxu0 0
      %943 = vmatprep.subr.bf16.mxu0 0
      %944 = vmatpush1.bf16.xpose.msra.mxu0 0
      %945 = vmatprep.subr.bf16.mxu0 0
      %946 = vmatpush1.bf16.xpose.msra.mxu0 0
      %947 = vmatprep.subr.bf16.mxu0 0
      %948 = vmatpush1.bf16.xpose.msra.mxu0 0
      %949 = vmatprep.subr.bf16.mxu0 0
      %950 = vmatpush1.bf16.xpose.msra.mxu0 0
      %951 = vmatprep.subr.bf16.mxu0 0
      %952 = vmatpush1.bf16.xpose.msra.mxu0 0
      %953 = vmatprep.subr.bf16.mxu0 0
      %954 = vmatpush1.bf16.xpose.msra.mxu0 0
      %955 = vmatprep.subr.bf16.mxu0 0
      %956 = vmatpush1.bf16.xpose.msra.mxu0 0
      %957 = vmatprep.subr.bf16.mxu0 0
      %958 = vmatpush1.bf16.xpose.msra.mxu0 0
      %959 = vmatprep.subr.bf16.mxu0 0
      %960 = vmatpush1.bf16.xpose.msra.mxu0 0
      %961 = vmatprep.subr.bf16.mxu0 0
      %962 = vmatpush1.bf16.xpose.msra.mxu0 0
      %963 = vmatprep.subr.bf16.mxu0 0
      %964 = vmatpush1.bf16.xpose.msra.mxu0 0
      %965 = vmatprep.subr.bf16.mxu0 0
      %966 = vmatpush1.bf16.xpose.msra.mxu0 0
      %967 = vmatprep.subr.bf16.mxu0 0
      %968 = vmatpush1.bf16.xpose.msra.mxu0 0
      %969 = vmatprep.mubr.bf16.mxu0 0
      %970 = vmatmul.mubr.bf16.gmra.mrb[0].mxu0 %v932
      %v971 = vpop.f32.mrb[0].mxu0
      %v972 = vadd.f32 0.0, %v971
      %v973 = vpop.f32.mrb[0].mxu0
      %v974 = vpop.f32.mrb[0].mxu0
      %v975 = vpop.f32.mrb[0].mxu0
      %976 = vdwg.mxu0
      %v977 = vpack.i.b16 %v669, %v669
      %v978 = vlaneseq
      %v979 = vshrl.u32 %v978, 7
      %v980 = vsub.s32 0, %v979
      %v981 = vrot.slane %v977, %v980
      %v983 = vsel %vm285, %v981, 0
      %v986 = vsel %vm285, %v572, 0
      %988 = vmatprep.subr.bf16.mxu0 0
      %989 = vmatpush1.bf16.xpose.msra.mxu0 %v986
      %990 = vmatprep.subr.bf16.mxu0 0
      %991 = vmatpush1.bf16.xpose.msra.mxu0 0
      %992 = vmatprep.subr.bf16.mxu0 0
      %993 = vmatpush1.bf16.xpose.msra.mxu0 0
      %994 = vmatprep.subr.bf16.mxu0 0
      %995 = vmatpush1.bf16.xpose.msra.mxu0 0
      %996 = vmatprep.subr.bf16.mxu0 0
      %997 = vmatpush1.bf16.xpose.msra.mxu0 0
      %998 = vmatprep.subr.bf16.mxu0 0
      %999 = vmatpush1.bf16.xpose.msra.mxu0 0
      %1000 = vmatprep.subr.bf16.mxu0 0
      %1001 = vmatpush1.bf16.xpose.msra.mxu0 0
      %1002 = vmatprep.subr.bf16.mxu0 0
      %1003 = vmatpush1.bf16.xpose.msra.mxu0 0
      %1004 = vmatprep.subr.bf16.mxu0 0
      %1005 = vmatpush1.bf16.xpose.msra.mxu0 0
      %1006 = vmatprep.subr.bf16.mxu0 0
      %1007 = vmatpush1.bf16.xpose.msra.mxu0 0
      %1008 = vmatprep.subr.bf16.mxu0 0
      %1009 = vmatpush1.bf16.xpose.msra.mxu0 0
      %1010 = vmatprep.subr.bf16.mxu0 0
      %1011 = vmatpush1.bf16.xpose.msra.mxu0 0
      %1012 = vmatprep.subr.bf16.mxu0 0
      %1013 = vmatpush1.bf16.xpose.msra.mxu0 0
      %1014 = vmatprep.subr.bf16.mxu0 0
      %1015 = vmatpush1.bf16.xpose.msra.mxu0 0
      %1016 = vmatprep.subr.bf16.mxu0 0
      %1017 = vmatpush1.bf16.xpose.msra.mxu0 0
      %1018 = vmatprep.subr.bf16.mxu0 0
      %1019 = vmatpush1.bf16.xpose.msra.mxu0 0
      %1020 = vmatprep.mubr.bf16.mxu0 0
      %1021 = vmatmul.mubr.bf16.gmra.mrb[0].mxu0 %v983
      %v1022 = vpop.f32.mrb[0].mxu0
      %v1023 = vadd.f32 0.0, %v1022
      %v1024 = vpop.f32.mrb[0].mxu0
      %v1025 = vpop.f32.mrb[0].mxu0
      %v1026 = vpop.f32.mrb[0].mxu0
      %1027 = vdwg.mxu0
      %v1028 = vpack.i.b16 %v670, %v670
      %v1029 = vlaneseq
      %v1030 = vshrl.u32 %v1029, 7
      %v1031 = vsub.s32 0, %v1030
      %v1032 = vrot.slane %v1028, %v1031
      %v1034 = vsel %vm285, %v1032, 0
      %v1037 = vsel %vm285, %v573, 0
      %1039 = vmatprep.subr.bf16.mxu0 0
      %1040 = vmatpush1.bf16.xpose.msra.mxu0 %v1037
      %1041 = vmatprep.subr.bf16.mxu0 0
      %1042 = vmatpush1.bf16.xpose.msra.mxu0 0
      %1043 = vmatprep.subr.bf16.mxu0 0
      %1044 = vmatpush1.bf16.xpose.msra.mxu0 0
      %1045 = vmatprep.subr.bf16.mxu0 0
      %1046 = vmatpush1.bf16.xpose.msra.mxu0 0
      %1047 = vmatprep.subr.bf16.mxu0 0
      %1048 = vmatpush1.bf16.xpose.msra.mxu0 0
      %1049 = vmatprep.subr.bf16.mxu0 0
      %1050 = vmatpush1.bf16.xpose.msra.mxu0 0
      %1051 = vmatprep.subr.bf16.mxu0 0
      %1052 = vmatpush1.bf16.xpose.msra.mxu0 0
      %1053 = vmatprep.subr.bf16.mxu0 0
      %1054 = vmatpush1.bf16.xpose.msra.mxu0 0
      %1055 = vmatprep.subr.bf16.mxu0 0
      %1056 = vmatpush1.bf16.xpose.msra.mxu0 0
      %1057 = vmatprep.subr.bf16.mxu0 0
      %1058 = vmatpush1.bf16.xpose.msra.mxu0 0
      %1059 = vmatprep.subr.bf16.mxu0 0
      %1060 = vmatpush1.bf16.xpose.msra.mxu0 0
      %1061 = vmatprep.subr.bf16.mxu0 0
      %1062 = vmatpush1.bf16.xpose.msra.mxu0 0
      %1063 = vmatprep.subr.bf16.mxu0 0
      %1064 = vmatpush1.bf16.xpose.msra.mxu0 0
      %1065 = vmatprep.subr.bf16.mxu0 0
      %1066 = vmatpush1.bf16.xpose.msra.mxu0 0
      %1067 = vmatprep.subr.bf16.mxu0 0
      %1068 = vmatpush1.bf16.xpose.msra.mxu0 0
      %1069 = vmatprep.subr.bf16.mxu0 0
      %1070 = vmatpush1.bf16.xpose.msra.mxu0 0
      %1071 = vmatprep.mubr.bf16.mxu0 0
      %1072 = vmatmul.mubr.bf16.gmra.mrb[0].mxu0 %v1034
      %v1073 = vpop.f32.mrb[0].mxu0
      %v1074 = vadd.f32 0.0, %v1073
      %v1075 = vpop.f32.mrb[0].mxu0
      %v1076 = vpop.f32.mrb[0].mxu0
      %v1077 = vpop.f32.mrb[0].mxu0
      %1078 = vdwg.mxu0
      %v1080 = vrot.slane %v557, 1
      %v1081 = vrot.slane %v557, 2
      %v1082 = vrot.slane %v557, 3
      %v1083 = vrot.slane %v557, 4
      %v1084 = vrot.slane %v557, 5
      %v1085 = vrot.slane %v557, 6
      %v1086 = vrot.slane %v557, 7
      %v1095 = vmul.f32 %v717, %v557
      %v1096 = vmul.f32 %v768, %v1080
      %v1097 = vmul.f32 %v819, %v1081
      %v1098 = vmul.f32 %v870, %v1082
      %v1099 = vmul.f32 %v921, %v1083
      %v1100 = vmul.f32 %v972, %v1084
      %v1101 = vmul.f32 %v1023, %v1085
      %v1102 = vmul.f32 %v1074, %v1086
      %v1111 = vrot.slane %v1096, 7
      %vm1112 = vcmask 1041409
      %v1113 = vsel %vm1112, %v1111, %v1095
      %v1114 = vrot.slane %v1097, 6
      %vm1115 = vcmask 1042434
      %v1116 = vsel %vm1115, %v1114, %v1113
      %v1117 = vrot.slane %v1098, 5
      %vm1118 = vcmask 1043459
      %v1119 = vsel %vm1118, %v1117, %v1116
      %v1120 = vrot.slane %v1099, 4
      %vm1121 = vcmask 1044484
      %v1122 = vsel %vm1121, %v1120, %v1119
      %v1123 = vrot.slane %v1100, 3
      %vm1124 = vcmask 1045509
      %v1125 = vsel %vm1124, %v1123, %v1122
      %v1126 = vrot.slane %v1101, 2
      %vm1127 = vcmask 1046534
      %v1128 = vsel %vm1127, %v1126, %v1125
      %v1129 = vrot.slane %v1102, 1
      %vm1130 = vcmask 1047559
      %v1131 = vsel %vm1130, %v1129, %v1128
      %vm1133 = vcmask 64512
      %v1134 = vsel %vm1133, %v1131, -inf
      %1135 = vmax.xlane.f32.xlu0 %v1134
      %v1136 = vpop.xlane.xlu0 %1135
      %v1138 = vrot.slane %v1136, 1
      %v1139 = vrot.slane %v1136, 2
      %v1140 = vrot.slane %v1136, 3
      %v1141 = vrot.slane %v1136, 4
      %v1142 = vrot.slane %v1136, 5
      %v1143 = vrot.slane %v1136, 6
      %v1144 = vrot.slane %v1136, 7
      %v1153 = vsub.f32 %v1095, %v1136
      %v1154 = vsub.f32 %v1096, %v1138
      %v1155 = vsub.f32 %v1097, %v1139
      %v1156 = vsub.f32 %v1098, %v1140
      %v1157 = vsub.f32 %v1099, %v1141
      %v1158 = vsub.f32 %v1100, %v1142
      %v1159 = vsub.f32 %v1101, %v1143
      %v1160 = vsub.f32 %v1102, %v1144
      %v1161 = vmul.f32 %v1153, 1.442695
      %v1162 = vpow.pop %v1161
      %v1163 = vmul.f32 %v1154, 1.442695
      %v1164 = vpow.pop %v1163
      %v1165 = vmul.f32 %v1155, 1.442695
      %v1166 = vpow.pop %v1165
      %v1167 = vmul.f32 %v1156, 1.442695
      %v1168 = vpow.pop %v1167
      %v1169 = vmul.f32 %v1157, 1.442695
      %v1170 = vpow.pop %v1169
      %v1171 = vmul.f32 %v1158, 1.442695
      %v1172 = vpow.pop %v1171
      %v1173 = vmul.f32 %v1159, 1.442695
      %v1174 = vpow.pop %v1173
      %v1175 = vmul.f32 %v1160, 1.442695
      %v1176 = vpow.pop %v1175
      %v1177 = vmul.f32 %v1162, %v557
      %v1178 = vmul.f32 %v1164, %v1080
      %v1179 = vmul.f32 %v1166, %v1081
      %v1180 = vmul.f32 %v1168, %v1082
      %v1181 = vmul.f32 %v1170, %v1083
      %v1182 = vmul.f32 %v1172, %v1084
      %v1183 = vmul.f32 %v1174, %v1085
      %v1184 = vmul.f32 %v1176, %v1086
      %v1193 = vrot.slane %v1178, 7
      %v1194 = vsel %vm1112, %v1193, %v1177
      %v1195 = vrot.slane %v1179, 6
      %v1196 = vsel %vm1115, %v1195, %v1194
      %v1197 = vrot.slane %v1180, 5
      %v1198 = vsel %vm1118, %v1197, %v1196
      %v1199 = vrot.slane %v1181, 4
      %v1200 = vsel %vm1121, %v1199, %v1198
      %v1201 = vrot.slane %v1182, 3
      %v1202 = vsel %vm1124, %v1201, %v1200
      %v1203 = vrot.slane %v1183, 2
      %v1204 = vsel %vm1127, %v1203, %v1202
      %v1205 = vrot.slane %v1184, 1
      %v1206 = vsel %vm1130, %v1205, %v1204
      %v1208 = vsel %vm1133, %v1206, 0.0
      %1209 = vadd.xlane.f32.xlu0 %v1208
      %v1210 = vpop.xlane.xlu0 %1209
      %v1211 = vadd.f32 %v1210, 1e-06
      %v1213 = vrot.slane %v1211, 1
      %v1214 = vrot.slane %v1211, 2
      %v1215 = vrot.slane %v1211, 3
      %v1216 = vrot.slane %v1211, 4
      %v1217 = vrot.slane %v1211, 5
      %v1218 = vrot.slane %v1211, 6
      %v1219 = vrot.slane %v1211, 7
      %v1228 = vrcp.pop %v1211
      %v1229 = vmul.f32 %v1177, %v1228
      %v1230 = vrcp.pop %v1213
      %v1231 = vmul.f32 %v1178, %v1230
      %v1232 = vrcp.pop %v1214
      %v1233 = vmul.f32 %v1179, %v1232
      %v1234 = vrcp.pop %v1215
      %v1235 = vmul.f32 %v1180, %v1234
      %v1236 = vrcp.pop %v1216
      %v1237 = vmul.f32 %v1181, %v1236
      %v1238 = vrcp.pop %v1217
      %v1239 = vmul.f32 %v1182, %v1238
      %v1240 = vrcp.pop %v1218
      %v1241 = vmul.f32 %v1183, %v1240
      %v1242 = vrcp.pop %v1219
      %v1243 = vmul.f32 %v1184, %v1242
      %v1244 = vpack.c.bf16 %v1229, %v1229
      %v1245 = vpack.c.bf16 %v1231, %v1231
      %v1246 = vpack.c.bf16 %v1233, %v1233
      %v1247 = vpack.c.bf16 %v1235, %v1235
      %v1248 = vpack.c.bf16 %v1237, %v1237
      %v1249 = vpack.c.bf16 %v1239, %v1239
      %v1250 = vpack.c.bf16 %v1241, %v1241
      %v1251 = vpack.c.bf16 %v1243, %v1243
      %v1253 = vsel %vm1133, %v1244, 0
      %vm1255 = vcmask 1043456
      %v1256 = vsel %vm1255, %v566, 0
      %1258 = vmatprep.subr.bf16.mxu0 0
      %1259 = vmatpush1.bf16.msra.mxu0 %v1256
      %1260 = vmatprep.subr.bf16.mxu0 0
      %1261 = vmatpush1.bf16.msra.mxu0 0
      %1262 = vmatprep.subr.bf16.mxu0 0
      %1263 = vmatpush1.bf16.msra.mxu0 0
      %1264 = vmatprep.subr.bf16.mxu0 0
      %1265 = vmatpush1.bf16.msra.mxu0 0
      %1266 = vmatprep.subr.bf16.mxu0 0
      %1267 = vmatpush1.bf16.msra.mxu0 0
      %1268 = vmatprep.subr.bf16.mxu0 0
      %1269 = vmatpush1.bf16.msra.mxu0 0
      %1270 = vmatprep.subr.bf16.mxu0 0
      %1271 = vmatpush1.bf16.msra.mxu0 0
      %1272 = vmatprep.subr.bf16.mxu0 0
      %1273 = vmatpush1.bf16.msra.mxu0 0
      %1274 = vmatprep.subr.bf16.mxu0 0
      %1275 = vmatpush1.bf16.msra.mxu0 0
      %1276 = vmatprep.subr.bf16.mxu0 0
      %1277 = vmatpush1.bf16.msra.mxu0 0
      %1278 = vmatprep.subr.bf16.mxu0 0
      %1279 = vmatpush1.bf16.msra.mxu0 0
      %1280 = vmatprep.subr.bf16.mxu0 0
      %1281 = vmatpush1.bf16.msra.mxu0 0
      %1282 = vmatprep.subr.bf16.mxu0 0
      %1283 = vmatpush1.bf16.msra.mxu0 0
      %1284 = vmatprep.subr.bf16.mxu0 0
      %1285 = vmatpush1.bf16.msra.mxu0 0
      %1286 = vmatprep.subr.bf16.mxu0 0
      %1287 = vmatpush1.bf16.msra.mxu0 0
      %1288 = vmatprep.subr.bf16.mxu0 0
      %1289 = vmatpush1.bf16.msra.mxu0 0
      %1290 = vmatprep.mubr.bf16.mxu0 0
      %1291 = vmatmul.mubr.bf16.gmra.mrb[0].mxu0 %v1253
      %v1292 = vpop.f32.mrb[0].mxu0
      %v1293 = vadd.f32 0.0, %v1292
      %v1294 = vpop.f32.mrb[0].mxu0
      %v1295 = vpop.f32.mrb[0].mxu0
      %v1296 = vpop.f32.mrb[0].mxu0
      %1297 = vdwg.mxu0
      %v1299 = vsel %vm1133, %v1245, 0
      %v1301 = vsel %vm1255, %v567, 0
      %1303 = vmatprep.subr.bf16.mxu0 0
      %1304 = vmatpush1.bf16.msra.mxu0 %v1301
      %1305 = vmatprep.subr.bf16.mxu0 0
      %1306 = vmatpush1.bf16.msra.mxu0 0
      %1307 = vmatprep.subr.bf16.mxu0 0
      %1308 = vmatpush1.bf16.msra.mxu0 0
      %1309 = vmatprep.subr.bf16.mxu0 0
      %1310 = vmatpush1.bf16.msra.mxu0 0
      %1311 = vmatprep.subr.bf16.mxu0 0
      %1312 = vmatpush1.bf16.msra.mxu0 0
      %1313 = vmatprep.subr.bf16.mxu0 0
      %1314 = vmatpush1.bf16.msra.mxu0 0
      %1315 = vmatprep.subr.bf16.mxu0 0
      %1316 = vmatpush1.bf16.msra.mxu0 0
      %1317 = vmatprep.subr.bf16.mxu0 0
      %1318 = vmatpush1.bf16.msra.mxu0 0
      %1319 = vmatprep.subr.bf16.mxu0 0
      %1320 = vmatpush1.bf16.msra.mxu0 0
      %1321 = vmatprep.subr.bf16.mxu0 0
      %1322 = vmatpush1.bf16.msra.mxu0 0
      %1323 = vmatprep.subr.bf16.mxu0 0
      %1324 = vmatpush1.bf16.msra.mxu0 0
      %1325 = vmatprep.subr.bf16.mxu0 0
      %1326 = vmatpush1.bf16.msra.mxu0 0
      %1327 = vmatprep.subr.bf16.mxu0 0
      %1328 = vmatpush1.bf16.msra.mxu0 0
      %1329 = vmatprep.subr.bf16.mxu0 0
      %1330 = vmatpush1.bf16.msra.mxu0 0
      %1331 = vmatprep.subr.bf16.mxu0 0
      %1332 = vmatpush1.bf16.msra.mxu0 0
      %1333 = vmatprep.subr.bf16.mxu0 0
      %1334 = vmatpush1.bf16.msra.mxu0 0
      %1335 = vmatprep.mubr.bf16.mxu0 0
      %1336 = vmatmul.mubr.bf16.gmra.mrb[0].mxu0 %v1299
      %v1337 = vpop.f32.mrb[0].mxu0
      %v1338 = vadd.f32 0.0, %v1337
      %v1339 = vpop.f32.mrb[0].mxu0
      %v1340 = vpop.f32.mrb[0].mxu0
      %v1341 = vpop.f32.mrb[0].mxu0
      %1342 = vdwg.mxu0
      %v1344 = vsel %vm1133, %v1246, 0
      %v1346 = vsel %vm1255, %v568, 0
      %1348 = vmatprep.subr.bf16.mxu0 0
      %1349 = vmatpush1.bf16.msra.mxu0 %v1346
      %1350 = vmatprep.subr.bf16.mxu0 0
      %1351 = vmatpush1.bf16.msra.mxu0 0
      %1352 = vmatprep.subr.bf16.mxu0 0
      %1353 = vmatpush1.bf16.msra.mxu0 0
      %1354 = vmatprep.subr.bf16.mxu0 0
      %1355 = vmatpush1.bf16.msra.mxu0 0
      %1356 = vmatprep.subr.bf16.mxu0 0
      %1357 = vmatpush1.bf16.msra.mxu0 0
      %1358 = vmatprep.subr.bf16.mxu0 0
      %1359 = vmatpush1.bf16.msra.mxu0 0
      %1360 = vmatprep.subr.bf16.mxu0 0
      %1361 = vmatpush1.bf16.msra.mxu0 0
      %1362 = vmatprep.subr.bf16.mxu0 0
      %1363 = vmatpush1.bf16.msra.mxu0 0
      %1364 = vmatprep.subr.bf16.mxu0 0
      %1365 = vmatpush1.bf16.msra.mxu0 0
      %1366 = vmatprep.subr.bf16.mxu0 0
      %1367 = vmatpush1.bf16.msra.mxu0 0
      %1368 = vmatprep.subr.bf16.mxu0 0
      %1369 = vmatpush1.bf16.msra.mxu0 0
      %1370 = vmatprep.subr.bf16.mxu0 0
      %1371 = vmatpush1.bf16.msra.mxu0 0
      %1372 = vmatprep.subr.bf16.mxu0 0
      %1373 = vmatpush1.bf16.msra.mxu0 0
      %1374 = vmatprep.subr.bf16.mxu0 0
      %1375 = vmatpush1.bf16.msra.mxu0 0
      %1376 = vmatprep.subr.bf16.mxu0 0
      %1377 = vmatpush1.bf16.msra.mxu0 0
      %1378 = vmatprep.subr.bf16.mxu0 0
      %1379 = vmatpush1.bf16.msra.mxu0 0
      %1380 = vmatprep.mubr.bf16.mxu0 0
      %1381 = vmatmul.mubr.bf16.gmra.mrb[0].mxu0 %v1344
      %v1382 = vpop.f32.mrb[0].mxu0
      %v1383 = vadd.f32 0.0, %v1382
      %v1384 = vpop.f32.mrb[0].mxu0
      %v1385 = vpop.f32.mrb[0].mxu0
      %v1386 = vpop.f32.mrb[0].mxu0
      %1387 = vdwg.mxu0
      %v1389 = vsel %vm1133, %v1247, 0
      %v1391 = vsel %vm1255, %v569, 0
      %1393 = vmatprep.subr.bf16.mxu0 0
      %1394 = vmatpush1.bf16.msra.mxu0 %v1391
      %1395 = vmatprep.subr.bf16.mxu0 0
      %1396 = vmatpush1.bf16.msra.mxu0 0
      %1397 = vmatprep.subr.bf16.mxu0 0
      %1398 = vmatpush1.bf16.msra.mxu0 0
      %1399 = vmatprep.subr.bf16.mxu0 0
      %1400 = vmatpush1.bf16.msra.mxu0 0
      %1401 = vmatprep.subr.bf16.mxu0 0
      %1402 = vmatpush1.bf16.msra.mxu0 0
      %1403 = vmatprep.subr.bf16.mxu0 0
      %1404 = vmatpush1.bf16.msra.mxu0 0
      %1405 = vmatprep.subr.bf16.mxu0 0
      %1406 = vmatpush1.bf16.msra.mxu0 0
      %1407 = vmatprep.subr.bf16.mxu0 0
      %1408 = vmatpush1.bf16.msra.mxu0 0
      %1409 = vmatprep.subr.bf16.mxu0 0
      %1410 = vmatpush1.bf16.msra.mxu0 0
      %1411 = vmatprep.subr.bf16.mxu0 0
      %1412 = vmatpush1.bf16.msra.mxu0 0
      %1413 = vmatprep.subr.bf16.mxu0 0
      %1414 = vmatpush1.bf16.msra.mxu0 0
      %1415 = vmatprep.subr.bf16.mxu0 0
      %1416 = vmatpush1.bf16.msra.mxu0 0
      %1417 = vmatprep.subr.bf16.mxu0 0
      %1418 = vmatpush1.bf16.msra.mxu0 0
      %1419 = vmatprep.subr.bf16.mxu0 0
      %1420 = vmatpush1.bf16.msra.mxu0 0
      %1421 = vmatprep.subr.bf16.mxu0 0
      %1422 = vmatpush1.bf16.msra.mxu0 0
      %1423 = vmatprep.subr.bf16.mxu0 0
      %1424 = vmatpush1.bf16.msra.mxu0 0
      %1425 = vmatprep.mubr.bf16.mxu0 0
      %1426 = vmatmul.mubr.bf16.gmra.mrb[0].mxu0 %v1389
      %v1427 = vpop.f32.mrb[0].mxu0
      %v1428 = vadd.f32 0.0, %v1427
      %v1429 = vpop.f32.mrb[0].mxu0
      %v1430 = vpop.f32.mrb[0].mxu0
      %v1431 = vpop.f32.mrb[0].mxu0
      %1432 = vdwg.mxu0
      %v1434 = vsel %vm1133, %v1248, 0
      %v1436 = vsel %vm1255, %v570, 0
      %1438 = vmatprep.subr.bf16.mxu0 0
      %1439 = vmatpush1.bf16.msra.mxu0 %v1436
      %1440 = vmatprep.subr.bf16.mxu0 0
      %1441 = vmatpush1.bf16.msra.mxu0 0
      %1442 = vmatprep.subr.bf16.mxu0 0
      %1443 = vmatpush1.bf16.msra.mxu0 0
      %1444 = vmatprep.subr.bf16.mxu0 0
      %1445 = vmatpush1.bf16.msra.mxu0 0
      %1446 = vmatprep.subr.bf16.mxu0 0
      %1447 = vmatpush1.bf16.msra.mxu0 0
      %1448 = vmatprep.subr.bf16.mxu0 0
      %1449 = vmatpush1.bf16.msra.mxu0 0
      %1450 = vmatprep.subr.bf16.mxu0 0
      %1451 = vmatpush1.bf16.msra.mxu0 0
      %1452 = vmatprep.subr.bf16.mxu0 0
      %1453 = vmatpush1.bf16.msra.mxu0 0
      %1454 = vmatprep.subr.bf16.mxu0 0
      %1455 = vmatpush1.bf16.msra.mxu0 0
      %1456 = vmatprep.subr.bf16.mxu0 0
      %1457 = vmatpush1.bf16.msra.mxu0 0
      %1458 = vmatprep.subr.bf16.mxu0 0
      %1459 = vmatpush1.bf16.msra.mxu0 0
      %1460 = vmatprep.subr.bf16.mxu0 0
      %1461 = vmatpush1.bf16.msra.mxu0 0
      %1462 = vmatprep.subr.bf16.mxu0 0
      %1463 = vmatpush1.bf16.msra.mxu0 0
      %1464 = vmatprep.subr.bf16.mxu0 0
      %1465 = vmatpush1.bf16.msra.mxu0 0
      %1466 = vmatprep.subr.bf16.mxu0 0
      %1467 = vmatpush1.bf16.msra.mxu0 0
      %1468 = vmatprep.subr.bf16.mxu0 0
      %1469 = vmatpush1.bf16.msra.mxu0 0
      %1470 = vmatprep.mubr.bf16.mxu0 0
      %1471 = vmatmul.mubr.bf16.gmra.mrb[0].mxu0 %v1434
      %v1472 = vpop.f32.mrb[0].mxu0
      %v1473 = vadd.f32 0.0, %v1472
      %v1474 = vpop.f32.mrb[0].mxu0
      %v1475 = vpop.f32.mrb[0].mxu0
      %v1476 = vpop.f32.mrb[0].mxu0
      %1477 = vdwg.mxu0
      %v1479 = vsel %vm1133, %v1249, 0
      %v1481 = vsel %vm1255, %v571, 0
      %1483 = vmatprep.subr.bf16.mxu0 0
      %1484 = vmatpush1.bf16.msra.mxu0 %v1481
      %1485 = vmatprep.subr.bf16.mxu0 0
      %1486 = vmatpush1.bf16.msra.mxu0 0
      %1487 = vmatprep.subr.bf16.mxu0 0
      %1488 = vmatpush1.bf16.msra.mxu0 0
      %1489 = vmatprep.subr.bf16.mxu0 0
      %1490 = vmatpush1.bf16.msra.mxu0 0
      %1491 = vmatprep.subr.bf16.mxu0 0
      %1492 = vmatpush1.bf16.msra.mxu0 0
      %1493 = vmatprep.subr.bf16.mxu0 0
      %1494 = vmatpush1.bf16.msra.mxu0 0
      %1495 = vmatprep.subr.bf16.mxu0 0
      %1496 = vmatpush1.bf16.msra.mxu0 0
      %1497 = vmatprep.subr.bf16.mxu0 0
      %1498 = vmatpush1.bf16.msra.mxu0 0
      %1499 = vmatprep.subr.bf16.mxu0 0
      %1500 = vmatpush1.bf16.msra.mxu0 0
      %1501 = vmatprep.subr.bf16.mxu0 0
      %1502 = vmatpush1.bf16.msra.mxu0 0
      %1503 = vmatprep.subr.bf16.mxu0 0
      %1504 = vmatpush1.bf16.msra.mxu0 0
      %1505 = vmatprep.subr.bf16.mxu0 0
      %1506 = vmatpush1.bf16.msra.mxu0 0
      %1507 = vmatprep.subr.bf16.mxu0 0
      %1508 = vmatpush1.bf16.msra.mxu0 0
      %1509 = vmatprep.subr.bf16.mxu0 0
      %1510 = vmatpush1.bf16.msra.mxu0 0
      %1511 = vmatprep.subr.bf16.mxu0 0
      %1512 = vmatpush1.bf16.msra.mxu0 0
      %1513 = vmatprep.subr.bf16.mxu0 0
      %1514 = vmatpush1.bf16.msra.mxu0 0
      %1515 = vmatprep.mubr.bf16.mxu0 0
      %1516 = vmatmul.mubr.bf16.gmra.mrb[0].mxu0 %v1479
      %v1517 = vpop.f32.mrb[0].mxu0
      %v1518 = vadd.f32 0.0, %v1517
      %v1519 = vpop.f32.mrb[0].mxu0
      %v1520 = vpop.f32.mrb[0].mxu0
      %v1521 = vpop.f32.mrb[0].mxu0
      %1522 = vdwg.mxu0
      %v1524 = vsel %vm1133, %v1250, 0
      %v1526 = vsel %vm1255, %v572, 0
      %1528 = vmatprep.subr.bf16.mxu0 0
      %1529 = vmatpush1.bf16.msra.mxu0 %v1526
      %1530 = vmatprep.subr.bf16.mxu0 0
      %1531 = vmatpush1.bf16.msra.mxu0 0
      %1532 = vmatprep.subr.bf16.mxu0 0
      %1533 = vmatpush1.bf16.msra.mxu0 0
      %1534 = vmatprep.subr.bf16.mxu0 0
      %1535 = vmatpush1.bf16.msra.mxu0 0
      %1536 = vmatprep.subr.bf16.mxu0 0
      %1537 = vmatpush1.bf16.msra.mxu0 0
      %1538 = vmatprep.subr.bf16.mxu0 0
      %1539 = vmatpush1.bf16.msra.mxu0 0
      %1540 = vmatprep.subr.bf16.mxu0 0
      %1541 = vmatpush1.bf16.msra.mxu0 0
      %1542 = vmatprep.subr.bf16.mxu0 0
      %1543 = vmatpush1.bf16.msra.mxu0 0
      %1544 = vmatprep.subr.bf16.mxu0 0
      %1545 = vmatpush1.bf16.msra.mxu0 0
      %1546 = vmatprep.subr.bf16.mxu0 0
      %1547 = vmatpush1.bf16.msra.mxu0 0
      %1548 = vmatprep.subr.bf16.mxu0 0
      %1549 = vmatpush1.bf16.msra.mxu0 0
      %1550 = vmatprep.subr.bf16.mxu0 0
      %1551 = vmatpush1.bf16.msra.mxu0 0
      %1552 = vmatprep.subr.bf16.mxu0 0
      %1553 = vmatpush1.bf16.msra.mxu0 0
      %1554 = vmatprep.subr.bf16.mxu0 0
      %1555 = vmatpush1.bf16.msra.mxu0 0
      %1556 = vmatprep.subr.bf16.mxu0 0
      %1557 = vmatpush1.bf16.msra.mxu0 0
      %1558 = vmatprep.subr.bf16.mxu0 0
      %1559 = vmatpush1.bf16.msra.mxu0 0
      %1560 = vmatprep.mubr.bf16.mxu0 0
      %1561 = vmatmul.mubr.bf16.gmra.mrb[0].mxu0 %v1524
      %v1562 = vpop.f32.mrb[0].mxu0
      %v1563 = vadd.f32 0.0, %v1562
      %v1564 = vpop.f32.mrb[0].mxu0
      %v1565 = vpop.f32.mrb[0].mxu0
      %v1566 = vpop.f32.mrb[0].mxu0
      %1567 = vdwg.mxu0
      %v1569 = vsel %vm1133, %v1251, 0
      %v1571 = vsel %vm1255, %v573, 0
      %1573 = vmatprep.subr.bf16.mxu0 0
      %1574 = vmatpush1.bf16.msra.mxu0 %v1571
      %1575 = vmatprep.subr.bf16.mxu0 0
      %1576 = vmatpush1.bf16.msra.mxu0 0
      %1577 = vmatprep.subr.bf16.mxu0 0
      %1578 = vmatpush1.bf16.msra.mxu0 0
      %1579 = vmatprep.subr.bf16.mxu0 0
      %1580 = vmatpush1.bf16.msra.mxu0 0
      %1581 = vmatprep.subr.bf16.mxu0 0
      %1582 = vmatpush1.bf16.msra.mxu0 0
      %1583 = vmatprep.subr.bf16.mxu0 0
      %1584 = vmatpush1.bf16.msra.mxu0 0
      %1585 = vmatprep.subr.bf16.mxu0 0
      %1586 = vmatpush1.bf16.msra.mxu0 0
      %1587 = vmatprep.subr.bf16.mxu0 0
      %1588 = vmatpush1.bf16.msra.mxu0 0
      %1589 = vmatprep.subr.bf16.mxu0 0
      %1590 = vmatpush1.bf16.msra.mxu0 0
      %1591 = vmatprep.subr.bf16.mxu0 0
      %1592 = vmatpush1.bf16.msra.mxu0 0
      %1593 = vmatprep.subr.bf16.mxu0 0
      %1594 = vmatpush1.bf16.msra.mxu0 0
      %1595 = vmatprep.subr.bf16.mxu0 0
      %1596 = vmatpush1.bf16.msra.mxu0 0
      %1597 = vmatprep.subr.bf16.mxu0 0
      %1598 = vmatpush1.bf16.msra.mxu0 0
      %1599 = vmatprep.subr.bf16.mxu0 0
      %1600 = vmatpush1.bf16.msra.mxu0 0
      %1601 = vmatprep.subr.bf16.mxu0 0
      %1602 = vmatpush1.bf16.msra.mxu0 0
      %1603 = vmatprep.subr.bf16.mxu0 0
      %1604 = vmatpush1.bf16.msra.mxu0 0
      %1605 = vmatprep.mubr.bf16.mxu0 0
      %1606 = vmatmul.mubr.bf16.gmra.mrb[0].mxu0 %v1569
      %v1607 = vpop.f32.mrb[0].mxu0
      %v1608 = vadd.f32 0.0, %v1607
      %v1609 = vpop.f32.mrb[0].mxu0
      %v1610 = vpop.f32.mrb[0].mxu0
      %v1611 = vpop.f32.mrb[0].mxu0
      %1612 = vdwg.mxu0
      %v1613 = vpack.c.bf16 %v1293, %v1293
      %v1614 = vpack.c.bf16 %v1338, %v1338
      %v1615 = vpack.c.bf16 %v1383, %v1383
      %v1616 = vpack.c.bf16 %v1428, %v1428
      %v1617 = vpack.c.bf16 %v1473, %v1473
      %v1618 = vpack.c.bf16 %v1518, %v1518
      %v1619 = vpack.c.bf16 %v1563, %v1563
      %v1620 = vpack.c.bf16 %v1608, %v1608
      %v1621 = vld [vmem:[%s10] sm:$0xf]
      %v1622 = vld [vmem:[%s10 + $0x4] sm:$0xf]
      %v1623 = vld [vmem:[%s10 + $0x8] sm:$0xf]
      %v1624 = vld [vmem:[%s10 + $0xc] sm:$0xf]
      %v1625 = vld [vmem:[#allocation25] sm:$0x1]
      %v1627 = vlaneseq
      %v1628 = vshrl.u32 %v1627, 7
      %v1629 = vsub.s32 0, %v1628
      %v1630 = vrot.slane %v1625, %v1629
      %v1640 = vunpack.c.l.b16 %v1613
      %v1641 = vunpack.c.l.b16 %v1614
      %v1642 = vunpack.c.l.b16 %v1615
      %v1643 = vunpack.c.l.b16 %v1616
      %v1644 = vunpack.c.l.b16 %v1617
      %v1645 = vunpack.c.l.b16 %v1618
      %v1646 = vunpack.c.l.b16 %v1619
      %v1647 = vunpack.c.l.b16 %v1620
      %v1648 = vrot.slane %v1641, 7
      %v1649 = vsel %vm1112, %v1648, %v1640
      %v1650 = vrot.slane %v1642, 6
      %v1651 = vsel %vm1115, %v1650, %v1649
      %v1652 = vrot.slane %v1643, 5
      %v1653 = vsel %vm1118, %v1652, %v1651
      %v1654 = vrot.slane %v1644, 4
      %v1655 = vsel %vm1121, %v1654, %v1653
      %v1656 = vrot.slane %v1645, 3
      %v1657 = vsel %vm1124, %v1656, %v1655
      %v1658 = vrot.slane %v1646, 2
      %v1659 = vsel %vm1127, %v1658, %v1657
      %v1660 = vrot.slane %v1647, 1
      %v1661 = vsel %vm1130, %v1660, %v1659
      %v1662 = vpack.c.b16 %v1661, %v1661
      %v1667 = vunpack.c.l.b16 %v1621
      %v1668 = vunpack.c.l.b16 %v1622
      %v1669 = vunpack.c.l.b16 %v1623
      %v1670 = vunpack.c.l.b16 %v1624
      %v1671 = vpack.c.b16 %v1668, %v1667
      %v1672 = vpack.c.b16 %v1670, %v1669
      %v1676 = vsel %vm285, %v1662, 0
      %1678 = vmatprep.subr.bf16.mxu0 0
      %1679 = vmatpush1.bf16.msra.mxu0 %v1671
      %1680 = vmatprep.subr.bf16.mxu0 0
      %1681 = vmatpush1.bf16.msra.mxu0 %v1672
      %1682 = vmatprep.subr.bf16.mxu0 0
      %1683 = vmatpush1.bf16.msra.mxu0 0
      %1684 = vmatprep.subr.bf16.mxu0 0
      %1685 = vmatpush1.bf16.msra.mxu0 0
      %1686 = vmatprep.subr.bf16.mxu0 0
      %1687 = vmatpush1.bf16.msra.mxu0 0
      %1688 = vmatprep.subr.bf16.mxu0 0
      %1689 = vmatpush1.bf16.msra.mxu0 0
      %1690 = vmatprep.subr.bf16.mxu0 0
      %1691 = vmatpush1.bf16.msra.mxu0 0
      %1692 = vmatprep.subr.bf16.mxu0 0
      %1693 = vmatpush1.bf16.msra.mxu0 0
      %1694 = vmatprep.subr.bf16.mxu0 0
      %1695 = vmatpush1.bf16.msra.mxu0 0
      %1696 = vmatprep.subr.bf16.mxu0 0
      %1697 = vmatpush1.bf16.msra.mxu0 0
      %1698 = vmatprep.subr.bf16.mxu0 0
      %1699 = vmatpush1.bf16.msra.mxu0 0
      %1700 = vmatprep.subr.bf16.mxu0 0
      %1701 = vmatpush1.bf16.msra.mxu0 0
      %1702 = vmatprep.subr.bf16.mxu0 0
      %1703 = vmatpush1.bf16.msra.mxu0 0
      %1704 = vmatprep.subr.bf16.mxu0 0
      %1705 = vmatpush1.bf16.msra.mxu0 0
      %1706 = vmatprep.subr.bf16.mxu0 0
      %1707 = vmatpush1.bf16.msra.mxu0 0
      %1708 = vmatprep.subr.bf16.mxu0 0
      %1709 = vmatpush1.bf16.msra.mxu0 0
      %1710 = vmatprep.mubr.bf16.mxu0 0
      %1711 = vmatmul.mubr.bf16.gmra.mrb[0].mxu0 %v1676
      %v1712 = vpop.f32.mrb[0].mxu0
      %v1713 = vadd.f32 %v1630, %v1712
      %v1714 = vpop.f32.mrb[0].mxu0
      %v1715 = vpop.f32.mrb[0].mxu0
      %v1716 = vpop.f32.mrb[0].mxu0
      %1717 = vdwg.mxu0
      %v1718 = vld [vmem:[#allocation23] sm:$0xf]
      %v1719 = vld [vmem:[#allocation23 + $0x4] sm:$0xf]
      %v1720 = vld [vmem:[#allocation23 + $0x8] sm:$0xf]
      %v1721 = vld [vmem:[#allocation23 + $0xc] sm:$0xf]
      %v1722 = vld [vmem:[#allocation26] sm:$0x1]
      %v1724 = vlaneseq
      %v1725 = vshrl.u32 %v1724, 7
      %v1726 = vsub.s32 0, %v1725
      %v1727 = vrot.slane %v1722, %v1726
      %v1733 = vunpack.c.l.b16 %v1718
      %v1734 = vunpack.c.l.b16 %v1719
      %v1735 = vunpack.c.l.b16 %v1720
      %v1736 = vunpack.c.l.b16 %v1721
      %v1737 = vpack.c.b16 %v1734, %v1733
      %v1738 = vpack.c.b16 %v1736, %v1735
      %1741 = vmatprep.subr.bf16.mxu0 0
      %1742 = vmatpush1.bf16.msra.mxu0 %v1737
      %1743 = vmatprep.subr.bf16.mxu0 0
      %1744 = vmatpush1.bf16.msra.mxu0 %v1738
      %1745 = vmatprep.subr.bf16.mxu0 0
      %1746 = vmatpush1.bf16.msra.mxu0 0
      %1747 = vmatprep.subr.bf16.mxu0 0
      %1748 = vmatpush1.bf16.msra.mxu0 0
      %1749 = vmatprep.subr.bf16.mxu0 0
      %1750 = vmatpush1.bf16.msra.mxu0 0
      %1751 = vmatprep.subr.bf16.mxu0 0
      %1752 = vmatpush1.bf16.msra.mxu0 0
      %1753 = vmatprep.subr.bf16.mxu0 0
      %1754 = vmatpush1.bf16.msra.mxu0 0
      %1755 = vmatprep.subr.bf16.mxu0 0
      %1756 = vmatpush1.bf16.msra.mxu0 0
      %1757 = vmatprep.subr.bf16.mxu0 0
      %1758 = vmatpush1.bf16.msra.mxu0 0
      %1759 = vmatprep.subr.bf16.mxu0 0
      %1760 = vmatpush1.bf16.msra.mxu0 0
      %1761 = vmatprep.subr.bf16.mxu0 0
      %1762 = vmatpush1.bf16.msra.mxu0 0
      %1763 = vmatprep.subr.bf16.mxu0 0
      %1764 = vmatpush1.bf16.msra.mxu0 0
      %1765 = vmatprep.subr.bf16.mxu0 0
      %1766 = vmatpush1.bf16.msra.mxu0 0
      %1767 = vmatprep.subr.bf16.mxu0 0
      %1768 = vmatpush1.bf16.msra.mxu0 0
      %1769 = vmatprep.subr.bf16.mxu0 0
      %1770 = vmatpush1.bf16.msra.mxu0 0
      %1771 = vmatprep.subr.bf16.mxu0 0
      %1772 = vmatpush1.bf16.msra.mxu0 0
      %1773 = vmatprep.mubr.bf16.mxu0 0
      %1774 = vmatmul.mubr.bf16.gmra.mrb[0].mxu0 %v595
      %v1775 = vpop.f32.mrb[0].mxu0
      %v1776 = vadd.f32 %v1727, %v1775
      %v1777 = vpop.f32.mrb[0].mxu0
      %v1778 = vpop.f32.mrb[0].mxu0
      %v1779 = vpop.f32.mrb[0].mxu0
      %1780 = vdwg.mxu0
      %v1781 = vadd.f32 %v1713, %v1776
      %v1782 = vxor.u32 %v1781, 2147483648
      %v1783 = vmul.f32 %v1782, 1.442695
      %v1784 = vpow.pop %v1783
      %v1785 = vadd.f32 %v1784, 1.0
      %v1786 = vrcp.pop %v1785
      %v1787 = vmul.f32 1.0, %v1786
      %1789 = vrot.lane.b32.xlu0 %v1776, 64
      %v1790 = vpop.permute.xlu0 %1789
      %v1792 = vmul.f32 %v1787, %v1790
      %1794 = vrot.lane.b32.xlu0 %v1792, 64
      %v1795 = vpop.permute.xlu0 %1794
      %v1797 = vadd.f32 %v1713, %v1795
      %v1798 = vtanh.pop %v1797
      %v1799 = vsub.f32 1.0, %v1787
      %1801 = vrot.lane.b32.xlu0 %v1798, 96
      %v1802 = vpop.permute.xlu0 %1801
      %v1804 = vmul.f32 %v1799, %v1802
      %v1805 = vmul.f32 %v1787, %v556
      %v1806 = vadd.f32 %v1804, %v1805
      %v1807 = vld [vmem:[#allocation16] sm:$0xff]
      %v1808 = vld [vmem:[#allocation14] sm:$0xff]
      %v1809 = vld [vmem:[#allocation14 + $0x8] sm:$0xff]
      %v1810 = vld [vmem:[#allocation14 + $0x10] sm:$0xff]
      %v1811 = vld [vmem:[#allocation14 + $0x18] sm:$0xff]
      %v1812 = vld [vmem:[#allocation14 + $0x20] sm:$0xff]
      %v1813 = vld [vmem:[#allocation14 + $0x28] sm:$0xff]
      %v1814 = vld [vmem:[#allocation14 + $0x30] sm:$0xff]
      %v1815 = vld [vmem:[#allocation14 + $0x38] sm:$0xff]
      %v1816 = vpack.c.bf16 %v1808, %v1808
      %v1817 = vpack.c.bf16 %v1809, %v1809
      %v1818 = vpack.c.bf16 %v1810, %v1810
      %v1819 = vpack.c.bf16 %v1811, %v1811
      %v1820 = vpack.c.bf16 %v1812, %v1812
      %v1821 = vpack.c.bf16 %v1813, %v1813
      %v1822 = vpack.c.bf16 %v1814, %v1814
      %v1823 = vpack.c.bf16 %v1815, %v1815
      %v1824 = vpack.c.bf16 %v1806, %v1806
      %v1825 = vld [vmem:[#allocation28] sm:$0xf]
      %v1826 = vld [vmem:[#allocation28 + $0x4] sm:$0xf]
      %v1827 = vld [vmem:[#allocation28 + $0x8] sm:$0xf]
      %v1828 = vld [vmem:[#allocation28 + $0xc] sm:$0xf]
      %1830 = vrot.lane.b32.xlu0 %v1824, 96
      %v1831 = vpop.permute.xlu0 %1830
      %v1836 = vunpack.c.l.b16 %v1825
      %v1837 = vunpack.c.l.b16 %v1826
      %v1838 = vunpack.c.l.b16 %v1827
      %v1839 = vunpack.c.l.b16 %v1828
      %v1840 = vpack.c.b16 %v1837, %v1836
      %v1841 = vpack.c.b16 %v1839, %v1838
      %v1845 = vsel %vm285, %v1831, 0
      %1847 = vmatprep.subr.bf16.mxu0 0
      %1848 = vmatpush1.bf16.msra.mxu0 %v1840
      %1849 = vmatprep.subr.bf16.mxu0 0
      %1850 = vmatpush1.bf16.msra.mxu0 %v1841
      %1851 = vmatprep.subr.bf16.mxu0 0
      %1852 = vmatpush1.bf16.msra.mxu0 0
      %1853 = vmatprep.subr.bf16.mxu0 0
      %1854 = vmatpush1.bf16.msra.mxu0 0
      %1855 = vmatprep.subr.bf16.mxu0 0
      %1856 = vmatpush1.bf16.msra.mxu0 0
      %1857 = vmatprep.subr.bf16.mxu0 0
      %1858 = vmatpush1.bf16.msra.mxu0 0
      %1859 = vmatprep.subr.bf16.mxu0 0
      %1860 = vmatpush1.bf16.msra.mxu0 0
      %1861 = vmatprep.subr.bf16.mxu0 0
      %1862 = vmatpush1.bf16.msra.mxu0 0
      %1863 = vmatprep.subr.bf16.mxu0 0
      %1864 = vmatpush1.bf16.msra.mxu0 0
      %1865 = vmatprep.subr.bf16.mxu0 0
      %1866 = vmatpush1.bf16.msra.mxu0 0
      %1867 = vmatprep.subr.bf16.mxu0 0
      %1868 = vmatpush1.bf16.msra.mxu0 0
      %1869 = vmatprep.subr.bf16.mxu0 0
      %1870 = vmatpush1.bf16.msra.mxu0 0
      %1871 = vmatprep.subr.bf16.mxu0 0
      %1872 = vmatpush1.bf16.msra.mxu0 0
      %1873 = vmatprep.subr.bf16.mxu0 0
      %1874 = vmatpush1.bf16.msra.mxu0 0
      %1875 = vmatprep.subr.bf16.mxu0 0
      %1876 = vmatpush1.bf16.msra.mxu0 0
      %1877 = vmatprep.subr.bf16.mxu0 0
      %1878 = vmatpush1.bf16.msra.mxu0 0
      %1879 = vmatprep.mubr.bf16.mxu0 0
      %1880 = vmatmul.mubr.bf16.gmra.mrb[0].mxu0 %v1845
      %v1881 = vpop.f32.mrb[0].mxu0
      %v1882 = vadd.f32 0.0, %v1881
      %v1883 = vpop.f32.mrb[0].mxu0
      %v1884 = vpop.f32.mrb[0].mxu0
      %v1885 = vpop.f32.mrb[0].mxu0
      %1886 = vdwg.mxu0
      %v1887 = vpack.c.bf16 %v1882, %v1882
      %v1890 = vunpack.c.l.s4 1966171168
      %v1891 = vunpack.c.0.s8 %v1890
      %v1892 = vlaneseq
      %v1893 = vshrl.u32 %v1892, 7
      %v1894 = vsub.s32 %v1891, %v1893
      %v1895 = vrot.slane %v1887, %v1894
      %v1896 = vcombine.high %v1895, %v1895
      %v1898 = vunpack.c.l.s4 1966171168
      %v1899 = vunpack.c.0.s8 %v1898
      %v1900 = vlaneseq
      %v1901 = vshrl.u32 %v1900, 7
      %v1902 = vsub.s32 %v1899, %v1901
      %v1903 = vrot.slane %v1895, %v1902
      %v1905 = vunpack.c.l.s4 1966171168
      %v1906 = vunpack.c.0.s8 %v1905
      %v1907 = vlaneseq
      %v1908 = vshrl.u32 %v1907, 7
      %v1909 = vsub.s32 %v1906, %v1908
      %v1910 = vrot.slane %v1896, %v1909
      %v1911 = vcombine.high %v1903, %v1903
      %v1912 = vcombine.high %v1910, %v1910
      %v1913 = vunpack.i.l.s16 %v1903
      %v1914 = vunpack.i.h.s16 %v1903
      %v1915 = vunpack.i.l.s16 %v1910
      %v1916 = vunpack.i.h.s16 %v1910
      %v1917 = vunpack.i.l.s16 %v1911
      %v1918 = vunpack.i.h.s16 %v1911
      %v1919 = vunpack.i.l.s16 %v1912
      %v1920 = vunpack.i.h.s16 %v1912
      %v1921 = vpack.i.b16 %v1913, %v1913
      %v1922 = vlaneseq
      %v1923 = vshrl.u32 %v1922, 7
      %v1924 = vsub.s32 0, %v1923
      %v1925 = vrot.slane %v1921, %v1924
      %v1927 = vsel %vm285, %v1925, 0
      %v1930 = vsel %vm285, %v1816, 0
      %1932 = vmatprep.subr.bf16.mxu0 0
      %1933 = vmatpush1.bf16.xpose.msra.mxu0 %v1930
      %1934 = vmatprep.subr.bf16.mxu0 0
      %1935 = vmatpush1.bf16.xpose.msra.mxu0 0
      %1936 = vmatprep.subr.bf16.mxu0 0
      %1937 = vmatpush1.bf16.xpose.msra.mxu0 0
      %1938 = vmatprep.subr.bf16.mxu0 0
      %1939 = vmatpush1.bf16.xpose.msra.mxu0 0
      %1940 = vmatprep.subr.bf16.mxu0 0
      %1941 = vmatpush1.bf16.xpose.msra.mxu0 0
      %1942 = vmatprep.subr.bf16.mxu0 0
      %1943 = vmatpush1.bf16.xpose.msra.mxu0 0
      %1944 = vmatprep.subr.bf16.mxu0 0
      %1945 = vmatpush1.bf16.xpose.msra.mxu0 0
      %1946 = vmatprep.subr.bf16.mxu0 0
      %1947 = vmatpush1.bf16.xpose.msra.mxu0 0
      %1948 = vmatprep.subr.bf16.mxu0 0
      %1949 = vmatpush1.bf16.xpose.msra.mxu0 0
      %1950 = vmatprep.subr.bf16.mxu0 0
      %1951 = vmatpush1.bf16.xpose.msra.mxu0 0
      %1952 = vmatprep.subr.bf16.mxu0 0
      %1953 = vmatpush1.bf16.xpose.msra.mxu0 0
      %1954 = vmatprep.subr.bf16.mxu0 0
      %1955 = vmatpush1.bf16.xpose.msra.mxu0 0
      %1956 = vmatprep.subr.bf16.mxu0 0
      %1957 = vmatpush1.bf16.xpose.msra.mxu0 0
      %1958 = vmatprep.subr.bf16.mxu0 0
      %1959 = vmatpush1.bf16.xpose.msra.mxu0 0
      %1960 = vmatprep.subr.bf16.mxu0 0
      %1961 = vmatpush1.bf16.xpose.msra.mxu0 0
      %1962 = vmatprep.subr.bf16.mxu0 0
      %1963 = vmatpush1.bf16.xpose.msra.mxu0 0
      %1964 = vmatprep.mubr.bf16.mxu0 0
      %1965 = vmatmul.mubr.bf16.gmra.mrb[0].mxu0 %v1927
      %v1966 = vpop.f32.mrb[0].mxu0
      %v1967 = vadd.f32 0.0, %v1966
      %v1968 = vpop.f32.mrb[0].mxu0
      %v1969 = vpop.f32.mrb[0].mxu0
      %v1970 = vpop.f32.mrb[0].mxu0
      %1971 = vdwg.mxu0
      %v1972 = vpack.i.b16 %v1914, %v1914
      %v1973 = vlaneseq
      %v1974 = vshrl.u32 %v1973, 7
      %v1975 = vsub.s32 0, %v1974
      %v1976 = vrot.slane %v1972, %v1975
      %v1978 = vsel %vm285, %v1976, 0
      %v1981 = vsel %vm285, %v1817, 0
      %1983 = vmatprep.subr.bf16.mxu0 0
      %1984 = vmatpush1.bf16.xpose.msra.mxu0 %v1981
      %1985 = vmatprep.subr.bf16.mxu0 0
      %1986 = vmatpush1.bf16.xpose.msra.mxu0 0
      %1987 = vmatprep.subr.bf16.mxu0 0
      %1988 = vmatpush1.bf16.xpose.msra.mxu0 0
      %1989 = vmatprep.subr.bf16.mxu0 0
      %1990 = vmatpush1.bf16.xpose.msra.mxu0 0
      %1991 = vmatprep.subr.bf16.mxu0 0
      %1992 = vmatpush1.bf16.xpose.msra.mxu0 0
      %1993 = vmatprep.subr.bf16.mxu0 0
      %1994 = vmatpush1.bf16.xpose.msra.mxu0 0
      %1995 = vmatprep.subr.bf16.mxu0 0
      %1996 = vmatpush1.bf16.xpose.msra.mxu0 0
      %1997 = vmatprep.subr.bf16.mxu0 0
      %1998 = vmatpush1.bf16.xpose.msra.mxu0 0
      %1999 = vmatprep.subr.bf16.mxu0 0
      %2000 = vmatpush1.bf16.xpose.msra.mxu0 0
      %2001 = vmatprep.subr.bf16.mxu0 0
      %2002 = vmatpush1.bf16.xpose.msra.mxu0 0
      %2003 = vmatprep.subr.bf16.mxu0 0
      %2004 = vmatpush1.bf16.xpose.msra.mxu0 0
      %2005 = vmatprep.subr.bf16.mxu0 0
      %2006 = vmatpush1.bf16.xpose.msra.mxu0 0
      %2007 = vmatprep.subr.bf16.mxu0 0
      %2008 = vmatpush1.bf16.xpose.msra.mxu0 0
      %2009 = vmatprep.subr.bf16.mxu0 0
      %2010 = vmatpush1.bf16.xpose.msra.mxu0 0
      %2011 = vmatprep.subr.bf16.mxu0 0
      %2012 = vmatpush1.bf16.xpose.msra.mxu0 0
      %2013 = vmatprep.subr.bf16.mxu0 0
      %2014 = vmatpush1.bf16.xpose.msra.mxu0 0
      %2015 = vmatprep.mubr.bf16.mxu0 0
      %2016 = vmatmul.mubr.bf16.gmra.mrb[0].mxu0 %v1978
      %v2017 = vpop.f32.mrb[0].mxu0
      %v2018 = vadd.f32 0.0, %v2017
      %v2019 = vpop.f32.mrb[0].mxu0
      %v2020 = vpop.f32.mrb[0].mxu0
      %v2021 = vpop.f32.mrb[0].mxu0
      %2022 = vdwg.mxu0
      %v2023 = vpack.i.b16 %v1915, %v1915
      %v2024 = vlaneseq
      %v2025 = vshrl.u32 %v2024, 7
      %v2026 = vsub.s32 0, %v2025
      %v2027 = vrot.slane %v2023, %v2026
      %v2029 = vsel %vm285, %v2027, 0
      %v2032 = vsel %vm285, %v1818, 0
      %2034 = vmatprep.subr.bf16.mxu0 0
      %2035 = vmatpush1.bf16.xpose.msra.mxu0 %v2032
      %2036 = vmatprep.subr.bf16.mxu0 0
      %2037 = vmatpush1.bf16.xpose.msra.mxu0 0
      %2038 = vmatprep.subr.bf16.mxu0 0
      %2039 = vmatpush1.bf16.xpose.msra.mxu0 0
      %2040 = vmatprep.subr.bf16.mxu0 0
      %2041 = vmatpush1.bf16.xpose.msra.mxu0 0
      %2042 = vmatprep.subr.bf16.mxu0 0
      %2043 = vmatpush1.bf16.xpose.msra.mxu0 0
      %2044 = vmatprep.subr.bf16.mxu0 0
      %2045 = vmatpush1.bf16.xpose.msra.mxu0 0
      %2046 = vmatprep.subr.bf16.mxu0 0
      %2047 = vmatpush1.bf16.xpose.msra.mxu0 0
      %2048 = vmatprep.subr.bf16.mxu0 0
      %2049 = vmatpush1.bf16.xpose.msra.mxu0 0
      %2050 = vmatprep.subr.bf16.mxu0 0
      %2051 = vmatpush1.bf16.xpose.msra.mxu0 0
      %2052 = vmatprep.subr.bf16.mxu0 0
      %2053 = vmatpush1.bf16.xpose.msra.mxu0 0
      %2054 = vmatprep.subr.bf16.mxu0 0
      %2055 = vmatpush1.bf16.xpose.msra.mxu0 0
      %2056 = vmatprep.subr.bf16.mxu0 0
      %2057 = vmatpush1.bf16.xpose.msra.mxu0 0
      %2058 = vmatprep.subr.bf16.mxu0 0
      %2059 = vmatpush1.bf16.xpose.msra.mxu0 0
      %2060 = vmatprep.subr.bf16.mxu0 0
      %2061 = vmatpush1.bf16.xpose.msra.mxu0 0
      %2062 = vmatprep.subr.bf16.mxu0 0
      %2063 = vmatpush1.bf16.xpose.msra.mxu0 0
      %2064 = vmatprep.subr.bf16.mxu0 0
      %2065 = vmatpush1.bf16.xpose.msra.mxu0 0
      %2066 = vmatprep.mubr.bf16.mxu0 0
      %2067 = vmatmul.mubr.bf16.gmra.mrb[0].mxu0 %v2029
      %v2068 = vpop.f32.mrb[0].mxu0
      %v2069 = vadd.f32 0.0, %v2068
      %v2070 = vpop.f32.mrb[0].mxu0
      %v2071 = vpop.f32.mrb[0].mxu0
      %v2072 = vpop.f32.mrb[0].mxu0
      %2073 = vdwg.mxu0
      %v2074 = vpack.i.b16 %v1916, %v1916
      %v2075 = vlaneseq
      %v2076 = vshrl.u32 %v2075, 7
      %v2077 = vsub.s32 0, %v2076
      %v2078 = vrot.slane %v2074, %v2077
      %v2080 = vsel %vm285, %v2078, 0
      %v2083 = vsel %vm285, %v1819, 0
      %2085 = vmatprep.subr.bf16.mxu0 0
      %2086 = vmatpush1.bf16.xpose.msra.mxu0 %v2083
      %2087 = vmatprep.subr.bf16.mxu0 0
      %2088 = vmatpush1.bf16.xpose.msra.mxu0 0
      %2089 = vmatprep.subr.bf16.mxu0 0
      %2090 = vmatpush1.bf16.xpose.msra.mxu0 0
      %2091 = vmatprep.subr.bf16.mxu0 0
      %2092 = vmatpush1.bf16.xpose.msra.mxu0 0
      %2093 = vmatprep.subr.bf16.mxu0 0
      %2094 = vmatpush1.bf16.xpose.msra.mxu0 0
      %2095 = vmatprep.subr.bf16.mxu0 0
      %2096 = vmatpush1.bf16.xpose.msra.mxu0 0
      %2097 = vmatprep.subr.bf16.mxu0 0
      %2098 = vmatpush1.bf16.xpose.msra.mxu0 0
      %2099 = vmatprep.subr.bf16.mxu0 0
      %2100 = vmatpush1.bf16.xpose.msra.mxu0 0
      %2101 = vmatprep.subr.bf16.mxu0 0
      %2102 = vmatpush1.bf16.xpose.msra.mxu0 0
      %2103 = vmatprep.subr.bf16.mxu0 0
      %2104 = vmatpush1.bf16.xpose.msra.mxu0 0
      %2105 = vmatprep.subr.bf16.mxu0 0
      %2106 = vmatpush1.bf16.xpose.msra.mxu0 0
      %2107 = vmatprep.subr.bf16.mxu0 0
      %2108 = vmatpush1.bf16.xpose.msra.mxu0 0
      %2109 = vmatprep.subr.bf16.mxu0 0
      %2110 = vmatpush1.bf16.xpose.msra.mxu0 0
      %2111 = vmatprep.subr.bf16.mxu0 0
      %2112 = vmatpush1.bf16.xpose.msra.mxu0 0
      %2113 = vmatprep.subr.bf16.mxu0 0
      %2114 = vmatpush1.bf16.xpose.msra.mxu0 0
      %2115 = vmatprep.subr.bf16.mxu0 0
      %2116 = vmatpush1.bf16.xpose.msra.mxu0 0
      %2117 = vmatprep.mubr.bf16.mxu0 0
      %2118 = vmatmul.mubr.bf16.gmra.mrb[0].mxu0 %v2080
      %v2119 = vpop.f32.mrb[0].mxu0
      %v2120 = vadd.f32 0.0, %v2119
      %v2121 = vpop.f32.mrb[0].mxu0
      %v2122 = vpop.f32.mrb[0].mxu0
      %v2123 = vpop.f32.mrb[0].mxu0
      %2124 = vdwg.mxu0
      %v2125 = vpack.i.b16 %v1917, %v1917
      %v2126 = vlaneseq
      %v2127 = vshrl.u32 %v2126, 7
      %v2128 = vsub.s32 0, %v2127
      %v2129 = vrot.slane %v2125, %v2128
      %v2131 = vsel %vm285, %v2129, 0
      %v2134 = vsel %vm285, %v1820, 0
      %2136 = vmatprep.subr.bf16.mxu0 0
      %2137 = vmatpush1.bf16.xpose.msra.mxu0 %v2134
      %2138 = vmatprep.subr.bf16.mxu0 0
      %2139 = vmatpush1.bf16.xpose.msra.mxu0 0
      %2140 = vmatprep.subr.bf16.mxu0 0
      %2141 = vmatpush1.bf16.xpose.msra.mxu0 0
      %2142 = vmatprep.subr.bf16.mxu0 0
      %2143 = vmatpush1.bf16.xpose.msra.mxu0 0
      %2144 = vmatprep.subr.bf16.mxu0 0
      %2145 = vmatpush1.bf16.xpose.msra.mxu0 0
      %2146 = vmatprep.subr.bf16.mxu0 0
      %2147 = vmatpush1.bf16.xpose.msra.mxu0 0
      %2148 = vmatprep.subr.bf16.mxu0 0
      %2149 = vmatpush1.bf16.xpose.msra.mxu0 0
      %2150 = vmatprep.subr.bf16.mxu0 0
      %2151 = vmatpush1.bf16.xpose.msra.mxu0 0
      %2152 = vmatprep.subr.bf16.mxu0 0
      %2153 = vmatpush1.bf16.xpose.msra.mxu0 0
      %2154 = vmatprep.subr.bf16.mxu0 0
      %2155 = vmatpush1.bf16.xpose.msra.mxu0 0
      %2156 = vmatprep.subr.bf16.mxu0 0
      %2157 = vmatpush1.bf16.xpose.msra.mxu0 0
      %2158 = vmatprep.subr.bf16.mxu0 0
      %2159 = vmatpush1.bf16.xpose.msra.mxu0 0
      %2160 = vmatprep.subr.bf16.mxu0 0
      %2161 = vmatpush1.bf16.xpose.msra.mxu0 0
      %2162 = vmatprep.subr.bf16.mxu0 0
      %2163 = vmatpush1.bf16.xpose.msra.mxu0 0
      %2164 = vmatprep.subr.bf16.mxu0 0
      %2165 = vmatpush1.bf16.xpose.msra.mxu0 0
      %2166 = vmatprep.subr.bf16.mxu0 0
      %2167 = vmatpush1.bf16.xpose.msra.mxu0 0
      %2168 = vmatprep.mubr.bf16.mxu0 0
      %2169 = vmatmul.mubr.bf16.gmra.mrb[0].mxu0 %v2131
      %v2170 = vpop.f32.mrb[0].mxu0
      %v2171 = vadd.f32 0.0, %v2170
      %v2172 = vpop.f32.mrb[0].mxu0
      %v2173 = vpop.f32.mrb[0].mxu0
      %v2174 = vpop.f32.mrb[0].mxu0
      %2175 = vdwg.mxu0
      %v2176 = vpack.i.b16 %v1918, %v1918
      %v2177 = vlaneseq
      %v2178 = vshrl.u32 %v2177, 7
      %v2179 = vsub.s32 0, %v2178
      %v2180 = vrot.slane %v2176, %v2179
      %v2182 = vsel %vm285, %v2180, 0
      %v2185 = vsel %vm285, %v1821, 0
      %2187 = vmatprep.subr.bf16.mxu0 0
      %2188 = vmatpush1.bf16.xpose.msra.mxu0 %v2185
      %2189 = vmatprep.subr.bf16.mxu0 0
      %2190 = vmatpush1.bf16.xpose.msra.mxu0 0
      %2191 = vmatprep.subr.bf16.mxu0 0
      %2192 = vmatpush1.bf16.xpose.msra.mxu0 0
      %2193 = vmatprep.subr.bf16.mxu0 0
      %2194 = vmatpush1.bf16.xpose.msra.mxu0 0
      %2195 = vmatprep.subr.bf16.mxu0 0
      %2196 = vmatpush1.bf16.xpose.msra.mxu0 0
      %2197 = vmatprep.subr.bf16.mxu0 0
      %2198 = vmatpush1.bf16.xpose.msra.mxu0 0
      %2199 = vmatprep.subr.bf16.mxu0 0
      %2200 = vmatpush1.bf16.xpose.msra.mxu0 0
      %2201 = vmatprep.subr.bf16.mxu0 0
      %2202 = vmatpush1.bf16.xpose.msra.mxu0 0
      %2203 = vmatprep.subr.bf16.mxu0 0
      %2204 = vmatpush1.bf16.xpose.msra.mxu0 0
      %2205 = vmatprep.subr.bf16.mxu0 0
      %2206 = vmatpush1.bf16.xpose.msra.mxu0 0
      %2207 = vmatprep.subr.bf16.mxu0 0
      %2208 = vmatpush1.bf16.xpose.msra.mxu0 0
      %2209 = vmatprep.subr.bf16.mxu0 0
      %2210 = vmatpush1.bf16.xpose.msra.mxu0 0
      %2211 = vmatprep.subr.bf16.mxu0 0
      %2212 = vmatpush1.bf16.xpose.msra.mxu0 0
      %2213 = vmatprep.subr.bf16.mxu0 0
      %2214 = vmatpush1.bf16.xpose.msra.mxu0 0
      %2215 = vmatprep.subr.bf16.mxu0 0
      %2216 = vmatpush1.bf16.xpose.msra.mxu0 0
      %2217 = vmatprep.subr.bf16.mxu0 0
      %2218 = vmatpush1.bf16.xpose.msra.mxu0 0
      %2219 = vmatprep.mubr.bf16.mxu0 0
      %2220 = vmatmul.mubr.bf16.gmra.mrb[0].mxu0 %v2182
      %v2221 = vpop.f32.mrb[0].mxu0
      %v2222 = vadd.f32 0.0, %v2221
      %v2223 = vpop.f32.mrb[0].mxu0
      %v2224 = vpop.f32.mrb[0].mxu0
      %v2225 = vpop.f32.mrb[0].mxu0
      %2226 = vdwg.mxu0
      %v2227 = vpack.i.b16 %v1919, %v1919
      %v2228 = vlaneseq
      %v2229 = vshrl.u32 %v2228, 7
      %v2230 = vsub.s32 0, %v2229
      %v2231 = vrot.slane %v2227, %v2230
      %v2233 = vsel %vm285, %v2231, 0
      %v2236 = vsel %vm285, %v1822, 0
      %2238 = vmatprep.subr.bf16.mxu0 0
      %2239 = vmatpush1.bf16.xpose.msra.mxu0 %v2236
      %2240 = vmatprep.subr.bf16.mxu0 0
      %2241 = vmatpush1.bf16.xpose.msra.mxu0 0
      %2242 = vmatprep.subr.bf16.mxu0 0
      %2243 = vmatpush1.bf16.xpose.msra.mxu0 0
      %2244 = vmatprep.subr.bf16.mxu0 0
      %2245 = vmatpush1.bf16.xpose.msra.mxu0 0
      %2246 = vmatprep.subr.bf16.mxu0 0
      %2247 = vmatpush1.bf16.xpose.msra.mxu0 0
      %2248 = vmatprep.subr.bf16.mxu0 0
      %2249 = vmatpush1.bf16.xpose.msra.mxu0 0
      %2250 = vmatprep.subr.bf16.mxu0 0
      %2251 = vmatpush1.bf16.xpose.msra.mxu0 0
      %2252 = vmatprep.subr.bf16.mxu0 0
      %2253 = vmatpush1.bf16.xpose.msra.mxu0 0
      %2254 = vmatprep.subr.bf16.mxu0 0
      %2255 = vmatpush1.bf16.xpose.msra.mxu0 0
      %2256 = vmatprep.subr.bf16.mxu0 0
      %2257 = vmatpush1.bf16.xpose.msra.mxu0 0
      %2258 = vmatprep.subr.bf16.mxu0 0
      %2259 = vmatpush1.bf16.xpose.msra.mxu0 0
      %2260 = vmatprep.subr.bf16.mxu0 0
      %2261 = vmatpush1.bf16.xpose.msra.mxu0 0
      %2262 = vmatprep.subr.bf16.mxu0 0
      %2263 = vmatpush1.bf16.xpose.msra.mxu0 0
      %2264 = vmatprep.subr.bf16.mxu0 0
      %2265 = vmatpush1.bf16.xpose.msra.mxu0 0
      %2266 = vmatprep.subr.bf16.mxu0 0
      %2267 = vmatpush1.bf16.xpose.msra.mxu0 0
      %2268 = vmatprep.subr.bf16.mxu0 0
      %2269 = vmatpush1.bf16.xpose.msra.mxu0 0
      %2270 = vmatprep.mubr.bf16.mxu0 0
      %2271 = vmatmul.mubr.bf16.gmra.mrb[0].mxu0 %v2233
      %v2272 = vpop.f32.mrb[0].mxu0
      %v2273 = vadd.f32 0.0, %v2272
      %v2274 = vpop.f32.mrb[0].mxu0
      %v2275 = vpop.f32.mrb[0].mxu0
      %v2276 = vpop.f32.mrb[0].mxu0
      %2277 = vdwg.mxu0
      %v2278 = vpack.i.b16 %v1920, %v1920
      %v2279 = vlaneseq
      %v2280 = vshrl.u32 %v2279, 7
      %v2281 = vsub.s32 0, %v2280
      %v2282 = vrot.slane %v2278, %v2281
      %v2284 = vsel %vm285, %v2282, 0
      %v2287 = vsel %vm285, %v1823, 0
      %2289 = vmatprep.subr.bf16.mxu0 0
      %2290 = vmatpush1.bf16.xpose.msra.mxu0 %v2287
      %2291 = vmatprep.subr.bf16.mxu0 0
      %2292 = vmatpush1.bf16.xpose.msra.mxu0 0
      %2293 = vmatprep.subr.bf16.mxu0 0
      %2294 = vmatpush1.bf16.xpose.msra.mxu0 0
      %2295 = vmatprep.subr.bf16.mxu0 0
      %2296 = vmatpush1.bf16.xpose.msra.mxu0 0
      %2297 = vmatprep.subr.bf16.mxu0 0
      %2298 = vmatpush1.bf16.xpose.msra.mxu0 0
      %2299 = vmatprep.subr.bf16.mxu0 0
      %2300 = vmatpush1.bf16.xpose.msra.mxu0 0
      %2301 = vmatprep.subr.bf16.mxu0 0
      %2302 = vmatpush1.bf16.xpose.msra.mxu0 0
      %2303 = vmatprep.subr.bf16.mxu0 0
      %2304 = vmatpush1.bf16.xpose.msra.mxu0 0
      %2305 = vmatprep.subr.bf16.mxu0 0
      %2306 = vmatpush1.bf16.xpose.msra.mxu0 0
      %2307 = vmatprep.subr.bf16.mxu0 0
      %2308 = vmatpush1.bf16.xpose.msra.mxu0 0
      %2309 = vmatprep.subr.bf16.mxu0 0
      %2310 = vmatpush1.bf16.xpose.msra.mxu0 0
      %2311 = vmatprep.subr.bf16.mxu0 0
      %2312 = vmatpush1.bf16.xpose.msra.mxu0 0
      %2313 = vmatprep.subr.bf16.mxu0 0
      %2314 = vmatpush1.bf16.xpose.msra.mxu0 0
      %2315 = vmatprep.subr.bf16.mxu0 0
      %2316 = vmatpush1.bf16.xpose.msra.mxu0 0
      %2317 = vmatprep.subr.bf16.mxu0 0
      %2318 = vmatpush1.bf16.xpose.msra.mxu0 0
      %2319 = vmatprep.subr.bf16.mxu0 0
      %2320 = vmatpush1.bf16.xpose.msra.mxu0 0
      %2321 = vmatprep.mubr.bf16.mxu0 0
      %2322 = vmatmul.mubr.bf16.gmra.mrb[0].mxu0 %v2284
      %v2323 = vpop.f32.mrb[0].mxu0
      %v2324 = vadd.f32 0.0, %v2323
      %v2325 = vpop.f32.mrb[0].mxu0
      %v2326 = vpop.f32.mrb[0].mxu0
      %v2327 = vpop.f32.mrb[0].mxu0
      %2328 = vdwg.mxu0
      %v2330 = vrot.slane %v1807, 1
      %v2331 = vrot.slane %v1807, 2
      %v2332 = vrot.slane %v1807, 3
      %v2333 = vrot.slane %v1807, 4
      %v2334 = vrot.slane %v1807, 5
      %v2335 = vrot.slane %v1807, 6
      %v2336 = vrot.slane %v1807, 7
      %v2345 = vmul.f32 %v1967, %v1807
      %v2346 = vmul.f32 %v2018, %v2330
      %v2347 = vmul.f32 %v2069, %v2331
      %v2348 = vmul.f32 %v2120, %v2332
      %v2349 = vmul.f32 %v2171, %v2333
      %v2350 = vmul.f32 %v2222, %v2334
      %v2351 = vmul.f32 %v2273, %v2335
      %v2352 = vmul.f32 %v2324, %v2336
      %v2361 = vrot.slane %v2346, 7
      %v2362 = vsel %vm1112, %v2361, %v2345
      %v2363 = vrot.slane %v2347, 6
      %v2364 = vsel %vm1115, %v2363, %v2362
      %v2365 = vrot.slane %v2348, 5
      %v2366 = vsel %vm1118, %v2365, %v2364
      %v2367 = vrot.slane %v2349, 4
      %v2368 = vsel %vm1121, %v2367, %v2366
      %v2369 = vrot.slane %v2350, 3
      %v2370 = vsel %vm1124, %v2369, %v2368
      %v2371 = vrot.slane %v2351, 2
      %v2372 = vsel %vm1127, %v2371, %v2370
      %v2373 = vrot.slane %v2352, 1
      %v2374 = vsel %vm1130, %v2373, %v2372
      %v2376 = vsel %vm1133, %v2374, -inf
      %2377 = vmax.xlane.f32.xlu0 %v2376
      %v2378 = vpop.xlane.xlu0 %2377
      %v2380 = vrot.slane %v2378, 1
      %v2381 = vrot.slane %v2378, 2
      %v2382 = vrot.slane %v2378, 3
      %v2383 = vrot.slane %v2378, 4
      %v2384 = vrot.slane %v2378, 5
      %v2385 = vrot.slane %v2378, 6
      %v2386 = vrot.slane %v2378, 7
      %v2395 = vsub.f32 %v2345, %v2378
      %v2396 = vsub.f32 %v2346, %v2380
      %v2397 = vsub.f32 %v2347, %v2381
      %v2398 = vsub.f32 %v2348, %v2382
      %v2399 = vsub.f32 %v2349, %v2383
      %v2400 = vsub.f32 %v2350, %v2384
      %v2401 = vsub.f32 %v2351, %v2385
      %v2402 = vsub.f32 %v2352, %v2386
      %v2403 = vmul.f32 %v2395, 1.442695
      %v2404 = vpow.pop %v2403
      %v2405 = vmul.f32 %v2396, 1.442695
      %v2406 = vpow.pop %v2405
      %v2407 = vmul.f32 %v2397, 1.442695
      %v2408 = vpow.pop %v2407
      %v2409 = vmul.f32 %v2398, 1.442695
      %v2410 = vpow.pop %v2409
      %v2411 = vmul.f32 %v2399, 1.442695
      %v2412 = vpow.pop %v2411
      %v2413 = vmul.f32 %v2400, 1.442695
      %v2414 = vpow.pop %v2413
      %v2415 = vmul.f32 %v2401, 1.442695
      %v2416 = vpow.pop %v2415
      %v2417 = vmul.f32 %v2402, 1.442695
      %v2418 = vpow.pop %v2417
      %v2419 = vmul.f32 %v2404, %v1807
      %v2420 = vmul.f32 %v2406, %v2330
      %v2421 = vmul.f32 %v2408, %v2331
      %v2422 = vmul.f32 %v2410, %v2332
      %v2423 = vmul.f32 %v2412, %v2333
      %v2424 = vmul.f32 %v2414, %v2334
      %v2425 = vmul.f32 %v2416, %v2335
      %v2426 = vmul.f32 %v2418, %v2336
      %v2435 = vrot.slane %v2420, 7
      %v2436 = vsel %vm1112, %v2435, %v2419
      %v2437 = vrot.slane %v2421, 6
      %v2438 = vsel %vm1115, %v2437, %v2436
      %v2439 = vrot.slane %v2422, 5
      %v2440 = vsel %vm1118, %v2439, %v2438
      %v2441 = vrot.slane %v2423, 4
      %v2442 = vsel %vm1121, %v2441, %v2440
      %v2443 = vrot.slane %v2424, 3
      %v2444 = vsel %vm1124, %v2443, %v2442
      %v2445 = vrot.slane %v2425, 2
      %v2446 = vsel %vm1127, %v2445, %v2444
      %v2447 = vrot.slane %v2426, 1
      %v2448 = vsel %vm1130, %v2447, %v2446
      %v2450 = vsel %vm1133, %v2448, 0.0
      %2451 = vadd.xlane.f32.xlu0 %v2450
      %v2452 = vpop.xlane.xlu0 %2451
      %v2453 = vadd.f32 %v2452, 1e-06
      %v2455 = vrot.slane %v2453, 1
      %v2456 = vrot.slane %v2453, 2
      %v2457 = vrot.slane %v2453, 3
      %v2458 = vrot.slane %v2453, 4
      %v2459 = vrot.slane %v2453, 5
      %v2460 = vrot.slane %v2453, 6
      %v2461 = vrot.slane %v2453, 7
      %v2470 = vrcp.pop %v2453
      %v2471 = vmul.f32 %v2419, %v2470
      %v2472 = vrcp.pop %v2455
      %v2473 = vmul.f32 %v2420, %v2472
      %v2474 = vrcp.pop %v2456
      %v2475 = vmul.f32 %v2421, %v2474
      %v2476 = vrcp.pop %v2457
      %v2477 = vmul.f32 %v2422, %v2476
      %v2478 = vrcp.pop %v2458
      %v2479 = vmul.f32 %v2423, %v2478
      %v2480 = vrcp.pop %v2459
      %v2481 = vmul.f32 %v2424, %v2480
      %v2482 = vrcp.pop %v2460
      %v2483 = vmul.f32 %v2425, %v2482
      %v2484 = vrcp.pop %v2461
      %v2485 = vmul.f32 %v2426, %v2484
      %v2486 = vpack.c.bf16 %v2471, %v2471
      %v2487 = vpack.c.bf16 %v2473, %v2473
      %v2488 = vpack.c.bf16 %v2475, %v2475
      %v2489 = vpack.c.bf16 %v2477, %v2477
      %v2490 = vpack.c.bf16 %v2479, %v2479
      %v2491 = vpack.c.bf16 %v2481, %v2481
      %v2492 = vpack.c.bf16 %v2483, %v2483
      %v2493 = vpack.c.bf16 %v2485, %v2485
      %v2495 = vsel %vm1133, %v2486, 0
      %v2497 = vsel %vm1255, %v1816, 0
      %2499 = vmatprep.subr.bf16.mxu0 0
      %2500 = vmatpush1.bf16.msra.mxu0 %v2497
      %2501 = vmatprep.subr.bf16.mxu0 0
      %2502 = vmatpush1.bf16.msra.mxu0 0
      %2503 = vmatprep.subr.bf16.mxu0 0
      %2504 = vmatpush1.bf16.msra.mxu0 0
      %2505 = vmatprep.subr.bf16.mxu0 0
      %2506 = vmatpush1.bf16.msra.mxu0 0
      %2507 = vmatprep.subr.bf16.mxu0 0
      %2508 = vmatpush1.bf16.msra.mxu0 0
      %2509 = vmatprep.subr.bf16.mxu0 0
      %2510 = vmatpush1.bf16.msra.mxu0 0
      %2511 = vmatprep.subr.bf16.mxu0 0
      %2512 = vmatpush1.bf16.msra.mxu0 0
      %2513 = vmatprep.subr.bf16.mxu0 0
      %2514 = vmatpush1.bf16.msra.mxu0 0
      %2515 = vmatprep.subr.bf16.mxu0 0
      %2516 = vmatpush1.bf16.msra.mxu0 0
      %2517 = vmatprep.subr.bf16.mxu0 0
      %2518 = vmatpush1.bf16.msra.mxu0 0
      %2519 = vmatprep.subr.bf16.mxu0 0
      %2520 = vmatpush1.bf16.msra.mxu0 0
      %2521 = vmatprep.subr.bf16.mxu0 0
      %2522 = vmatpush1.bf16.msra.mxu0 0
      %2523 = vmatprep.subr.bf16.mxu0 0
      %2524 = vmatpush1.bf16.msra.mxu0 0
      %2525 = vmatprep.subr.bf16.mxu0 0
      %2526 = vmatpush1.bf16.msra.mxu0 0
      %2527 = vmatprep.subr.bf16.mxu0 0
      %2528 = vmatpush1.bf16.msra.mxu0 0
      %2529 = vmatprep.subr.bf16.mxu0 0
      %2530 = vmatpush1.bf16.msra.mxu0 0
      %2531 = vmatprep.mubr.bf16.mxu0 0
      %2532 = vmatmul.mubr.bf16.gmra.mrb[0].mxu0 %v2495
      %v2533 = vpop.f32.mrb[0].mxu0
      %v2534 = vadd.f32 0.0, %v2533
      %v2535 = vpop.f32.mrb[0].mxu0
      %v2536 = vpop.f32.mrb[0].mxu0
      %v2537 = vpop.f32.mrb[0].mxu0
      %2538 = vdwg.mxu0
      %v2540 = vsel %vm1133, %v2487, 0
      %v2542 = vsel %vm1255, %v1817, 0
      %2544 = vmatprep.subr.bf16.mxu0 0
      %2545 = vmatpush1.bf16.msra.mxu0 %v2542
      %2546 = vmatprep.subr.bf16.mxu0 0
      %2547 = vmatpush1.bf16.msra.mxu0 0
      %2548 = vmatprep.subr.bf16.mxu0 0
      %2549 = vmatpush1.bf16.msra.mxu0 0
      %2550 = vmatprep.subr.bf16.mxu0 0
      %2551 = vmatpush1.bf16.msra.mxu0 0
      %2552 = vmatprep.subr.bf16.mxu0 0
      %2553 = vmatpush1.bf16.msra.mxu0 0
      %2554 = vmatprep.subr.bf16.mxu0 0
      %2555 = vmatpush1.bf16.msra.mxu0 0
      %2556 = vmatprep.subr.bf16.mxu0 0
      %2557 = vmatpush1.bf16.msra.mxu0 0
      %2558 = vmatprep.subr.bf16.mxu0 0
      %2559 = vmatpush1.bf16.msra.mxu0 0
      %2560 = vmatprep.subr.bf16.mxu0 0
      %2561 = vmatpush1.bf16.msra.mxu0 0
      %2562 = vmatprep.subr.bf16.mxu0 0
      %2563 = vmatpush1.bf16.msra.mxu0 0
      %2564 = vmatprep.subr.bf16.mxu0 0
      %2565 = vmatpush1.bf16.msra.mxu0 0
      %2566 = vmatprep.subr.bf16.mxu0 0
      %2567 = vmatpush1.bf16.msra.mxu0 0
      %2568 = vmatprep.subr.bf16.mxu0 0
      %2569 = vmatpush1.bf16.msra.mxu0 0
      %2570 = vmatprep.subr.bf16.mxu0 0
      %2571 = vmatpush1.bf16.msra.mxu0 0
      %2572 = vmatprep.subr.bf16.mxu0 0
      %2573 = vmatpush1.bf16.msra.mxu0 0
      %2574 = vmatprep.subr.bf16.mxu0 0
      %2575 = vmatpush1.bf16.msra.mxu0 0
      %2576 = vmatprep.mubr.bf16.mxu0 0
      %2577 = vmatmul.mubr.bf16.gmra.mrb[0].mxu0 %v2540
      %v2578 = vpop.f32.mrb[0].mxu0
      %v2579 = vadd.f32 0.0, %v2578
      %v2580 = vpop.f32.mrb[0].mxu0
      %v2581 = vpop.f32.mrb[0].mxu0
      %v2582 = vpop.f32.mrb[0].mxu0
      %2583 = vdwg.mxu0
      %v2585 = vsel %vm1133, %v2488, 0
      %v2587 = vsel %vm1255, %v1818, 0
      %2589 = vmatprep.subr.bf16.mxu0 0
      %2590 = vmatpush1.bf16.msra.mxu0 %v2587
      %2591 = vmatprep.subr.bf16.mxu0 0
      %2592 = vmatpush1.bf16.msra.mxu0 0
      %2593 = vmatprep.subr.bf16.mxu0 0
      %2594 = vmatpush1.bf16.msra.mxu0 0
      %2595 = vmatprep.subr.bf16.mxu0 0
      %2596 = vmatpush1.bf16.msra.mxu0 0
      %2597 = vmatprep.subr.bf16.mxu0 0
      %2598 = vmatpush1.bf16.msra.mxu0 0
      %2599 = vmatprep.subr.bf16.mxu0 0
      %2600 = vmatpush1.bf16.msra.mxu0 0
      %2601 = vmatprep.subr.bf16.mxu0 0
      %2602 = vmatpush1.bf16.msra.mxu0 0
      %2603 = vmatprep.subr.bf16.mxu0 0
      %2604 = vmatpush1.bf16.msra.mxu0 0
      %2605 = vmatprep.subr.bf16.mxu0 0
      %2606 = vmatpush1.bf16.msra.mxu0 0
      %2607 = vmatprep.subr.bf16.mxu0 0
      %2608 = vmatpush1.bf16.msra.mxu0 0
      %2609 = vmatprep.subr.bf16.mxu0 0
      %2610 = vmatpush1.bf16.msra.mxu0 0
      %2611 = vmatprep.subr.bf16.mxu0 0
      %2612 = vmatpush1.bf16.msra.mxu0 0
      %2613 = vmatprep.subr.bf16.mxu0 0
      %2614 = vmatpush1.bf16.msra.mxu0 0
      %2615 = vmatprep.subr.bf16.mxu0 0
      %2616 = vmatpush1.bf16.msra.mxu0 0
      %2617 = vmatprep.subr.bf16.mxu0 0
      %2618 = vmatpush1.bf16.msra.mxu0 0
      %2619 = vmatprep.subr.bf16.mxu0 0
      %2620 = vmatpush1.bf16.msra.mxu0 0
      %2621 = vmatprep.mubr.bf16.mxu0 0
      %2622 = vmatmul.mubr.bf16.gmra.mrb[0].mxu0 %v2585
      %v2623 = vpop.f32.mrb[0].mxu0
      %v2624 = vadd.f32 0.0, %v2623
      %v2625 = vpop.f32.mrb[0].mxu0
      %v2626 = vpop.f32.mrb[0].mxu0
      %v2627 = vpop.f32.mrb[0].mxu0
      %2628 = vdwg.mxu0
      %v2630 = vsel %vm1133, %v2489, 0
      %v2632 = vsel %vm1255, %v1819, 0
      %2634 = vmatprep.subr.bf16.mxu0 0
      %2635 = vmatpush1.bf16.msra.mxu0 %v2632
      %2636 = vmatprep.subr.bf16.mxu0 0
      %2637 = vmatpush1.bf16.msra.mxu0 0
      %2638 = vmatprep.subr.bf16.mxu0 0
      %2639 = vmatpush1.bf16.msra.mxu0 0
      %2640 = vmatprep.subr.bf16.mxu0 0
      %2641 = vmatpush1.bf16.msra.mxu0 0
      %2642 = vmatprep.subr.bf16.mxu0 0
      %2643 = vmatpush1.bf16.msra.mxu0 0
      %2644 = vmatprep.subr.bf16.mxu0 0
      %2645 = vmatpush1.bf16.msra.mxu0 0
      %2646 = vmatprep.subr.bf16.mxu0 0
      %2647 = vmatpush1.bf16.msra.mxu0 0
      %2648 = vmatprep.subr.bf16.mxu0 0
      %2649 = vmatpush1.bf16.msra.mxu0 0
      %2650 = vmatprep.subr.bf16.mxu0 0
      %2651 = vmatpush1.bf16.msra.mxu0 0
      %2652 = vmatprep.subr.bf16.mxu0 0
      %2653 = vmatpush1.bf16.msra.mxu0 0
      %2654 = vmatprep.subr.bf16.mxu0 0
      %2655 = vmatpush1.bf16.msra.mxu0 0
      %2656 = vmatprep.subr.bf16.mxu0 0
      %2657 = vmatpush1.bf16.msra.mxu0 0
      %2658 = vmatprep.subr.bf16.mxu0 0
      %2659 = vmatpush1.bf16.msra.mxu0 0
      %2660 = vmatprep.subr.bf16.mxu0 0
      %2661 = vmatpush1.bf16.msra.mxu0 0
      %2662 = vmatprep.subr.bf16.mxu0 0
      %2663 = vmatpush1.bf16.msra.mxu0 0
      %2664 = vmatprep.subr.bf16.mxu0 0
      %2665 = vmatpush1.bf16.msra.mxu0 0
      %2666 = vmatprep.mubr.bf16.mxu0 0
      %2667 = vmatmul.mubr.bf16.gmra.mrb[0].mxu0 %v2630
      %v2668 = vpop.f32.mrb[0].mxu0
      %v2669 = vadd.f32 0.0, %v2668
      %v2670 = vpop.f32.mrb[0].mxu0
      %v2671 = vpop.f32.mrb[0].mxu0
      %v2672 = vpop.f32.mrb[0].mxu0
      %2673 = vdwg.mxu0
      %v2675 = vsel %vm1133, %v2490, 0
      %v2677 = vsel %vm1255, %v1820, 0
      %2679 = vmatprep.subr.bf16.mxu0 0
      %2680 = vmatpush1.bf16.msra.mxu0 %v2677
      %2681 = vmatprep.subr.bf16.mxu0 0
      %2682 = vmatpush1.bf16.msra.mxu0 0
      %2683 = vmatprep.subr.bf16.mxu0 0
      %2684 = vmatpush1.bf16.msra.mxu0 0
      %2685 = vmatprep.subr.bf16.mxu0 0
      %2686 = vmatpush1.bf16.msra.mxu0 0
      %2687 = vmatprep.subr.bf16.mxu0 0
      %2688 = vmatpush1.bf16.msra.mxu0 0
      %2689 = vmatprep.subr.bf16.mxu0 0
      %2690 = vmatpush1.bf16.msra.mxu0 0
      %2691 = vmatprep.subr.bf16.mxu0 0
      %2692 = vmatpush1.bf16.msra.mxu0 0
      %2693 = vmatprep.subr.bf16.mxu0 0
      %2694 = vmatpush1.bf16.msra.mxu0 0
      %2695 = vmatprep.subr.bf16.mxu0 0
      %2696 = vmatpush1.bf16.msra.mxu0 0
      %2697 = vmatprep.subr.bf16.mxu0 0
      %2698 = vmatpush1.bf16.msra.mxu0 0
      %2699 = vmatprep.subr.bf16.mxu0 0
      %2700 = vmatpush1.bf16.msra.mxu0 0
      %2701 = vmatprep.subr.bf16.mxu0 0
      %2702 = vmatpush1.bf16.msra.mxu0 0
      %2703 = vmatprep.subr.bf16.mxu0 0
      %2704 = vmatpush1.bf16.msra.mxu0 0
      %2705 = vmatprep.subr.bf16.mxu0 0
      %2706 = vmatpush1.bf16.msra.mxu0 0
      %2707 = vmatprep.subr.bf16.mxu0 0
      %2708 = vmatpush1.bf16.msra.mxu0 0
      %2709 = vmatprep.subr.bf16.mxu0 0
      %2710 = vmatpush1.bf16.msra.mxu0 0
      %2711 = vmatprep.mubr.bf16.mxu0 0
      %2712 = vmatmul.mubr.bf16.gmra.mrb[0].mxu0 %v2675
      %v2713 = vpop.f32.mrb[0].mxu0
      %v2714 = vadd.f32 0.0, %v2713
      %v2715 = vpop.f32.mrb[0].mxu0
      %v2716 = vpop.f32.mrb[0].mxu0
      %v2717 = vpop.f32.mrb[0].mxu0
      %2718 = vdwg.mxu0
      %v2720 = vsel %vm1133, %v2491, 0
      %v2722 = vsel %vm1255, %v1821, 0
      %2724 = vmatprep.subr.bf16.mxu0 0
      %2725 = vmatpush1.bf16.msra.mxu0 %v2722
      %2726 = vmatprep.subr.bf16.mxu0 0
      %2727 = vmatpush1.bf16.msra.mxu0 0
      %2728 = vmatprep.subr.bf16.mxu0 0
      %2729 = vmatpush1.bf16.msra.mxu0 0
      %2730 = vmatprep.subr.bf16.mxu0 0
      %2731 = vmatpush1.bf16.msra.mxu0 0
      %2732 = vmatprep.subr.bf16.mxu0 0
      %2733 = vmatpush1.bf16.msra.mxu0 0
      %2734 = vmatprep.subr.bf16.mxu0 0
      %2735 = vmatpush1.bf16.msra.mxu0 0
      %2736 = vmatprep.subr.bf16.mxu0 0
      %2737 = vmatpush1.bf16.msra.mxu0 0
      %2738 = vmatprep.subr.bf16.mxu0 0
      %2739 = vmatpush1.bf16.msra.mxu0 0
      %2740 = vmatprep.subr.bf16.mxu0 0
      %2741 = vmatpush1.bf16.msra.mxu0 0
      %2742 = vmatprep.subr.bf16.mxu0 0
      %2743 = vmatpush1.bf16.msra.mxu0 0
      %2744 = vmatprep.subr.bf16.mxu0 0
      %2745 = vmatpush1.bf16.msra.mxu0 0
      %2746 = vmatprep.subr.bf16.mxu0 0
      %2747 = vmatpush1.bf16.msra.mxu0 0
      %2748 = vmatprep.subr.bf16.mxu0 0
      %2749 = vmatpush1.bf16.msra.mxu0 0
      %2750 = vmatprep.subr.bf16.mxu0 0
      %2751 = vmatpush1.bf16.msra.mxu0 0
      %2752 = vmatprep.subr.bf16.mxu0 0
      %2753 = vmatpush1.bf16.msra.mxu0 0
      %2754 = vmatprep.subr.bf16.mxu0 0
      %2755 = vmatpush1.bf16.msra.mxu0 0
      %2756 = vmatprep.mubr.bf16.mxu0 0
      %2757 = vmatmul.mubr.bf16.gmra.mrb[0].mxu0 %v2720
      %v2758 = vpop.f32.mrb[0].mxu0
      %v2759 = vadd.f32 0.0, %v2758
      %v2760 = vpop.f32.mrb[0].mxu0
      %v2761 = vpop.f32.mrb[0].mxu0
      %v2762 = vpop.f32.mrb[0].mxu0
      %2763 = vdwg.mxu0
      %v2765 = vsel %vm1133, %v2492, 0
      %v2767 = vsel %vm1255, %v1822, 0
      %2769 = vmatprep.subr.bf16.mxu0 0
      %2770 = vmatpush1.bf16.msra.mxu0 %v2767
      %2771 = vmatprep.subr.bf16.mxu0 0
      %2772 = vmatpush1.bf16.msra.mxu0 0
      %2773 = vmatprep.subr.bf16.mxu0 0
      %2774 = vmatpush1.bf16.msra.mxu0 0
      %2775 = vmatprep.subr.bf16.mxu0 0
      %2776 = vmatpush1.bf16.msra.mxu0 0
      %2777 = vmatprep.subr.bf16.mxu0 0
      %2778 = vmatpush1.bf16.msra.mxu0 0
      %2779 = vmatprep.subr.bf16.mxu0 0
      %2780 = vmatpush1.bf16.msra.mxu0 0
      %2781 = vmatprep.subr.bf16.mxu0 0
      %2782 = vmatpush1.bf16.msra.mxu0 0
      %2783 = vmatprep.subr.bf16.mxu0 0
      %2784 = vmatpush1.bf16.msra.mxu0 0
      %2785 = vmatprep.subr.bf16.mxu0 0
      %2786 = vmatpush1.bf16.msra.mxu0 0
      %2787 = vmatprep.subr.bf16.mxu0 0
      %2788 = vmatpush1.bf16.msra.mxu0 0
      %2789 = vmatprep.subr.bf16.mxu0 0
      %2790 = vmatpush1.bf16.msra.mxu0 0
      %2791 = vmatprep.subr.bf16.mxu0 0
      %2792 = vmatpush1.bf16.msra.mxu0 0
      %2793 = vmatprep.subr.bf16.mxu0 0
      %2794 = vmatpush1.bf16.msra.mxu0 0
      %2795 = vmatprep.subr.bf16.mxu0 0
      %2796 = vmatpush1.bf16.msra.mxu0 0
      %2797 = vmatprep.subr.bf16.mxu0 0
      %2798 = vmatpush1.bf16.msra.mxu0 0
      %2799 = vmatprep.subr.bf16.mxu0 0
      %2800 = vmatpush1.bf16.msra.mxu0 0
      %2801 = vmatprep.mubr.bf16.mxu0 0
      %2802 = vmatmul.mubr.bf16.gmra.mrb[0].mxu0 %v2765
      %v2803 = vpop.f32.mrb[0].mxu0
      %v2804 = vadd.f32 0.0, %v2803
      %v2805 = vpop.f32.mrb[0].mxu0
      %v2806 = vpop.f32.mrb[0].mxu0
      %v2807 = vpop.f32.mrb[0].mxu0
      %2808 = vdwg.mxu0
      %v2810 = vsel %vm1133, %v2493, 0
      %v2812 = vsel %vm1255, %v1823, 0
      %2814 = vmatprep.subr.bf16.mxu0 0
      %2815 = vmatpush1.bf16.msra.mxu0 %v2812
      %2816 = vmatprep.subr.bf16.mxu0 0
      %2817 = vmatpush1.bf16.msra.mxu0 0
      %2818 = vmatprep.subr.bf16.mxu0 0
      %2819 = vmatpush1.bf16.msra.mxu0 0
      %2820 = vmatprep.subr.bf16.mxu0 0
      %2821 = vmatpush1.bf16.msra.mxu0 0
      %2822 = vmatprep.subr.bf16.mxu0 0
      %2823 = vmatpush1.bf16.msra.mxu0 0
      %2824 = vmatprep.subr.bf16.mxu0 0
      %2825 = vmatpush1.bf16.msra.mxu0 0
      %2826 = vmatprep.subr.bf16.mxu0 0
      %2827 = vmatpush1.bf16.msra.mxu0 0
      %2828 = vmatprep.subr.bf16.mxu0 0
      %2829 = vmatpush1.bf16.msra.mxu0 0
      %2830 = vmatprep.subr.bf16.mxu0 0
      %2831 = vmatpush1.bf16.msra.mxu0 0
      %2832 = vmatprep.subr.bf16.mxu0 0
      %2833 = vmatpush1.bf16.msra.mxu0 0
      %2834 = vmatprep.subr.bf16.mxu0 0
      %2835 = vmatpush1.bf16.msra.mxu0 0
      %2836 = vmatprep.subr.bf16.mxu0 0
      %2837 = vmatpush1.bf16.msra.mxu0 0
      %2838 = vmatprep.subr.bf16.mxu0 0
      %2839 = vmatpush1.bf16.msra.mxu0 0
      %2840 = vmatprep.subr.bf16.mxu0 0
      %2841 = vmatpush1.bf16.msra.mxu0 0
      %2842 = vmatprep.subr.bf16.mxu0 0
      %2843 = vmatpush1.bf16.msra.mxu0 0
      %2844 = vmatprep.subr.bf16.mxu0 0
      %2845 = vmatpush1.bf16.msra.mxu0 0
      %2846 = vmatprep.mubr.bf16.mxu0 0
      %2847 = vmatmul.mubr.bf16.gmra.mrb[0].mxu0 %v2810
      %v2848 = vpop.f32.mrb[0].mxu0
      %v2849 = vadd.f32 0.0, %v2848
      %v2850 = vpop.f32.mrb[0].mxu0
      %v2851 = vpop.f32.mrb[0].mxu0
      %v2852 = vpop.f32.mrb[0].mxu0
      %2853 = vdwg.mxu0
      %v2854 = vld [vmem:[#allocation29] sm:$0xf]
      %v2855 = vld [vmem:[#allocation29 + $0x4] sm:$0xf]
      %v2856 = vld [vmem:[#allocation29 + $0x8] sm:$0xf]
      %v2857 = vld [vmem:[#allocation29 + $0xc] sm:$0xf]
      %v2858 = vpack.c.bf16 %v2534, %v2534
      %v2859 = vpack.c.bf16 %v2579, %v2579
      %v2860 = vpack.c.bf16 %v2624, %v2624
      %v2861 = vpack.c.bf16 %v2669, %v2669
      %v2862 = vpack.c.bf16 %v2714, %v2714
      %v2863 = vpack.c.bf16 %v2759, %v2759
      %v2864 = vpack.c.bf16 %v2804, %v2804
      %v2865 = vpack.c.bf16 %v2849, %v2849
      %v2866 = vld [vmem:[%s17] sm:$0xf]
      %v2867 = vld [vmem:[%s17 + $0x4] sm:$0xf]
      %v2868 = vld [vmem:[%s17 + $0x8] sm:$0xf]
      %v2869 = vld [vmem:[%s17 + $0xc] sm:$0xf]
      %v2878 = vunpack.c.l.b16 %v2858
      %v2879 = vunpack.c.l.b16 %v2859
      %v2880 = vunpack.c.l.b16 %v2860
      %v2881 = vunpack.c.l.b16 %v2861
      %v2882 = vunpack.c.l.b16 %v2862
      %v2883 = vunpack.c.l.b16 %v2863
      %v2884 = vunpack.c.l.b16 %v2864
      %v2885 = vunpack.c.l.b16 %v2865
      %v2886 = vrot.slane %v2879, 7
      %v2887 = vsel %vm1112, %v2886, %v2878
      %v2888 = vrot.slane %v2880, 6
      %v2889 = vsel %vm1115, %v2888, %v2887
      %v2890 = vrot.slane %v2881, 5
      %v2891 = vsel %vm1118, %v2890, %v2889
      %v2892 = vrot.slane %v2882, 4
      %v2893 = vsel %vm1121, %v2892, %v2891
      %v2894 = vrot.slane %v2883, 3
      %v2895 = vsel %vm1124, %v2894, %v2893
      %v2896 = vrot.slane %v2884, 2
      %v2897 = vsel %vm1127, %v2896, %v2895
      %v2898 = vrot.slane %v2885, 1
      %v2899 = vsel %vm1130, %v2898, %v2897
      %v2900 = vpack.c.b16 %v2899, %v2899
      %v2905 = vunpack.c.l.b16 %v2866
      %v2906 = vunpack.c.l.b16 %v2867
      %v2907 = vunpack.c.l.b16 %v2868
      %v2908 = vunpack.c.l.b16 %v2869
      %v2909 = vpack.c.b16 %v2906, %v2905
      %v2910 = vpack.c.b16 %v2908, %v2907
      %v2914 = vsel %vm285, %v2900, 0
      %2916 = vmatprep.subr.bf16.mxu0 0
      %2917 = vmatpush1.bf16.msra.mxu0 %v2909
      %2918 = vmatprep.subr.bf16.mxu0 0
      %2919 = vmatpush1.bf16.msra.mxu0 %v2910
      %2920 = vmatprep.subr.bf16.mxu0 0
      %2921 = vmatpush1.bf16.msra.mxu0 0
      %2922 = vmatprep.subr.bf16.mxu0 0
      %2923 = vmatpush1.bf16.msra.mxu0 0
      %2924 = vmatprep.subr.bf16.mxu0 0
      %2925 = vmatpush1.bf16.msra.mxu0 0
      %2926 = vmatprep.subr.bf16.mxu0 0
      %2927 = vmatpush1.bf16.msra.mxu0 0
      %2928 = vmatprep.subr.bf16.mxu0 0
      %2929 = vmatpush1.bf16.msra.mxu0 0
      %2930 = vmatprep.subr.bf16.mxu0 0
      %2931 = vmatpush1.bf16.msra.mxu0 0
      %2932 = vmatprep.subr.bf16.mxu0 0
      %2933 = vmatpush1.bf16.msra.mxu0 0
      %2934 = vmatprep.subr.bf16.mxu0 0
      %2935 = vmatpush1.bf16.msra.mxu0 0
      %2936 = vmatprep.subr.bf16.mxu0 0
      %2937 = vmatpush1.bf16.msra.mxu0 0
      %2938 = vmatprep.subr.bf16.mxu0 0
      %2939 = vmatpush1.bf16.msra.mxu0 0
      %2940 = vmatprep.subr.bf16.mxu0 0
      %2941 = vmatpush1.bf16.msra.mxu0 0
      %2942 = vmatprep.subr.bf16.mxu0 0
      %2943 = vmatpush1.bf16.msra.mxu0 0
      %2944 = vmatprep.subr.bf16.mxu0 0
      %2945 = vmatpush1.bf16.msra.mxu0 0
      %2946 = vmatprep.subr.bf16.mxu0 0
      %2947 = vmatpush1.bf16.msra.mxu0 0
      %2948 = vmatprep.mubr.bf16.mxu0 0
      %2949 = vmatmul.mubr.bf16.gmra.mrb[0].mxu0 %v2914
      %v2950 = vpop.f32.mrb[0].mxu0
      %v2951 = vadd.f32 0.0, %v2950
      %v2952 = vpop.f32.mrb[0].mxu0
      %v2953 = vpop.f32.mrb[0].mxu0
      %v2954 = vpop.f32.mrb[0].mxu0
      %2955 = vdwg.mxu0
      %v2960 = vunpack.c.l.b16 %v2854
      %v2961 = vunpack.c.l.b16 %v2855
      %v2962 = vunpack.c.l.b16 %v2856
      %v2963 = vunpack.c.l.b16 %v2857
      %v2964 = vpack.c.b16 %v2961, %v2960
      %v2965 = vpack.c.b16 %v2963, %v2962
      %2968 = vmatprep.subr.bf16.mxu0 0
      %2969 = vmatpush1.bf16.msra.mxu0 %v2964
      %2970 = vmatprep.subr.bf16.mxu0 0
      %2971 = vmatpush1.bf16.msra.mxu0 %v2965
      %2972 = vmatprep.subr.bf16.mxu0 0
      %2973 = vmatpush1.bf16.msra.mxu0 0
      %2974 = vmatprep.subr.bf16.mxu0 0
      %2975 = vmatpush1.bf16.msra.mxu0 0
      %2976 = vmatprep.subr.bf16.mxu0 0
      %2977 = vmatpush1.bf16.msra.mxu0 0
      %2978 = vmatprep.subr.bf16.mxu0 0
      %2979 = vmatpush1.bf16.msra.mxu0 0
      %2980 = vmatprep.subr.bf16.mxu0 0
      %2981 = vmatpush1.bf16.msra.mxu0 0
      %2982 = vmatprep.subr.bf16.mxu0 0
      %2983 = vmatpush1.bf16.msra.mxu0 0
      %2984 = vmatprep.subr.bf16.mxu0 0
      %2985 = vmatpush1.bf16.msra.mxu0 0
      %2986 = vmatprep.subr.bf16.mxu0 0
      %2987 = vmatpush1.bf16.msra.mxu0 0
      %2988 = vmatprep.subr.bf16.mxu0 0
      %2989 = vmatpush1.bf16.msra.mxu0 0
      %2990 = vmatprep.subr.bf16.mxu0 0
      %2991 = vmatpush1.bf16.msra.mxu0 0
      %2992 = vmatprep.subr.bf16.mxu0 0
      %2993 = vmatpush1.bf16.msra.mxu0 0
      %2994 = vmatprep.subr.bf16.mxu0 0
      %2995 = vmatpush1.bf16.msra.mxu0 0
      %2996 = vmatprep.subr.bf16.mxu0 0
      %2997 = vmatpush1.bf16.msra.mxu0 0
      %2998 = vmatprep.subr.bf16.mxu0 0
      %2999 = vmatpush1.bf16.msra.mxu0 0
      %3000 = vmatprep.mubr.bf16.mxu0 0
      %3001 = vmatmul.mubr.bf16.gmra.mrb[0].mxu0 %v1845
      %v3002 = vpop.f32.mrb[0].mxu0
      %v3003 = vadd.f32 %v2951, %v3002
      %v3004 = vpop.f32.mrb[0].mxu0
      %v3005 = vpop.f32.mrb[0].mxu0
      %v3006 = vpop.f32.mrb[0].mxu0
      %3007 = vdwg.mxu0
      %v3008 = vld [vmem:[%s18] sm:$0x1]
      %v3010 = vlaneseq
      %v3011 = vshrl.u32 %v3010, 7
      %v3012 = vsub.s32 0, %v3011
      %v3013 = vrot.slane %v3008, %v3012
      %v3015 = vadd.f32 %v3003, %v3013
      %3017 = vrot.lane.b32.xlu0 %v1806, 96
      %v3018 = vpop.permute.xlu0 %3017
      %3020 = vst.msk [vmem:[#allocation2] sm:$0xff] %vm285, %v3018
      %v3029 = vrot.slane %v2579, 7
      %v3030 = vsel %vm1112, %v3029, %v2534
      %v3031 = vrot.slane %v2624, 6
      %v3032 = vsel %vm1115, %v3031, %v3030
      %v3033 = vrot.slane %v2669, 5
      %v3034 = vsel %vm1118, %v3033, %v3032
      %v3035 = vrot.slane %v2714, 4
      %v3036 = vsel %vm1121, %v3035, %v3034
      %v3037 = vrot.slane %v2759, 3
      %v3038 = vsel %vm1124, %v3037, %v3036
      %v3039 = vrot.slane %v2804, 2
      %v3040 = vsel %vm1127, %v3039, %v3038
      %v3041 = vrot.slane %v2849, 1
      %v3042 = vsel %vm1130, %v3041, %v3040
      %3044 = vst.msk [vmem:[#allocation3] sm:$0xff] %vm285, %v3042
      %3045 = vst.msk [vmem:[#allocation4] sm:$0xff] %vm285, %v3015
      %v3054 = vrot.slane %v2473, 7
      %v3055 = vsel %vm1112, %v3054, %v2471
      %v3056 = vrot.slane %v2475, 6
      %v3057 = vsel %vm1115, %v3056, %v3055
      %v3058 = vrot.slane %v2477, 5
      %v3059 = vsel %vm1118, %v3058, %v3057
      %v3060 = vrot.slane %v2479, 4
      %v3061 = vsel %vm1121, %v3060, %v3059
      %v3062 = vrot.slane %v2481, 3
      %v3063 = vsel %vm1124, %v3062, %v3061
      %v3064 = vrot.slane %v2483, 2
      %v3065 = vsel %vm1127, %v3064, %v3063
      %v3066 = vrot.slane %v2485, 1
      %v3067 = vsel %vm1130, %v3066, %v3065
      %3069 = vst.msk [vmem:[#allocation5] sm:$0xff] %vm1133, %v3067
      %vm3070 = vcmask 7168
      %3071 = vst.msk [vmem:[#allocation6] sm:$0xff] %vm3070, -1e+37
      %3072 = vst.msk [vmem:[#allocation7] sm:$0xff] %vm3070, 0.0
    $region149: #{tpu_custom_call.1} parent=1 // pred_fallthru
      _
    %v3073 = vld [vmem:[#allocation4] sm:$0xff]
    %v3074 = vpack.c.bf16 %v3073, %v3073
    %v3075 = vld [vmem:[#allocation31] sm:$0xf]
    %v3076 = vld [vmem:[#allocation31 + $0x4] sm:$0xf]
    %v3077 = vld [vmem:[#allocation31 + $0x8] sm:$0xf]
    %v3078 = vld [vmem:[#allocation31 + $0xc] sm:$0xf]
    %v3079 = vld [vmem:[%s20] sm:$0x1]
    %v3081 = vlaneseq
    %v3082 = vshrl.u32 %v3081, 7
    %v3083 = vsub.s32 0, %v3082
    %v3084 = vrot.slane %v3079, %v3083
    %v3090 = vunpack.c.l.b16 %v3075
    %v3091 = vunpack.c.l.b16 %v3076
    %v3092 = vunpack.c.l.b16 %v3077
    %v3093 = vunpack.c.l.b16 %v3078
    %v3094 = vpack.c.b16 %v3091, %v3090
    %v3095 = vpack.c.b16 %v3093, %v3092
    %vm3098 = vcmask 261120
    %v3100 = vsel %vm3098, %v3074, 0
    %3102 = vmatprep.subr.bf16.mxu0 0
    %3103 = vmatpush1.bf16.msra.mxu0 %v3094
    %3104 = vmatprep.subr.bf16.mxu0 0
    %3105 = vmatpush1.bf16.msra.mxu0 %v3095
    %3106 = vmatprep.subr.bf16.mxu0 0
    %3107 = vmatpush1.bf16.msra.mxu0 0
    %3108 = vmatprep.subr.bf16.mxu0 0
    %3109 = vmatpush1.bf16.msra.mxu0 0
    %3110 = vmatprep.subr.bf16.mxu0 0
    %3111 = vmatpush1.bf16.msra.mxu0 0
    %3112 = vmatprep.subr.bf16.mxu0 0
    %3113 = vmatpush1.bf16.msra.mxu0 0
    %3114 = vmatprep.subr.bf16.mxu0 0
    %3115 = vmatpush1.bf16.msra.mxu0 0
    %3116 = vmatprep.subr.bf16.mxu0 0
    %3117 = vmatpush1.bf16.msra.mxu0 0
    %3118 = vmatprep.subr.bf16.mxu0 0
    %3119 = vmatpush1.bf16.msra.mxu0 0
    %3120 = vmatprep.subr.bf16.mxu0 0
    %3121 = vmatpush1.bf16.msra.mxu0 0
    %3122 = vmatprep.subr.bf16.mxu0 0
    %3123 = vmatpush1.bf16.msra.mxu0 0
    %3124 = vmatprep.subr.bf16.mxu0 0
    %3125 = vmatpush1.bf16.msra.mxu0 0
    %3126 = vmatprep.subr.bf16.mxu0 0
    %3127 = vmatpush1.bf16.msra.mxu0 0
    %3128 = vmatprep.subr.bf16.mxu0 0
    %3129 = vmatpush1.bf16.msra.mxu0 0
    %3130 = vmatprep.subr.bf16.mxu0 0
    %3131 = vmatpush1.bf16.msra.mxu0 0
    %3132 = vmatprep.subr.bf16.mxu0 0
    %3133 = vmatpush1.bf16.msra.mxu0 0
    %3134 = vmatprep.mubr.bf16.mxu0 0
    %3135 = vmatmul.mubr.bf16.gmra.mrb[0].mxu0 %v3100
    %v3136 = vpop.f32.mrb[0].mxu0
    %v3137 = vadd.f32 %v3084, %v3136
    %v3138 = vpop.f32.mrb[0].mxu0
    %v3139 = vpop.f32.mrb[0].mxu0
    %v3140 = vpop.f32.mrb[0].mxu0
    %3141 = vdwg.mxu0
    %v3142 = vld [vmem:[#allocation6] sm:$0xff]
    %3143 = vmax.xlane.f32.xlu0 %v3137
    %v3144 = vpop.xlane.xlu0 %3143
    %v3145 = vmax.f32 %v3142, %v3144
    %v3146 = vsub.f32 %v3142, %v3145
    %v3147 = vmul.f32 %v3146, 1.442695
    %v3148 = vpow.pop %v3147
    %v3149 = vld [vmem:[#allocation7] sm:$0xff]
    %v3150 = vmul.f32 %v3148, %v3149
    %3152 = vset.pattern.permute.xlu0 0
    %3153 = vperm.xlu0 %3152, %v3145
    %v3154 = vpop.permute.xlu0 %3153
    %v3156 = vsub.f32 %v3137, %v3154
    %v3157 = vmul.f32 %v3156, 1.442695
    %v3158 = vpow.pop %v3157
    %3159 = vadd.xlane.f32.xlu0 %v3158
    %v3160 = vpop.xlane.xlu0 %3159
    %v3161 = vadd.f32 %v3150, %v3160
    %vm3162 = vcmask 7168
    %3163 = vst.msk [vmem:[#allocation7] sm:$0xff] %vm3162, %v3161
    %3164 = vst.msk [vmem:[#allocation6] sm:$0xff] %vm3162, %v3145
    // Predicated region
    $region150: #{tpu_custom_call.1} parent=1 // pred_check
      %p3165 = pneg %p257
    $region151: #{tpu_custom_call.1} parent=1 // pred_check_branch
      %3167 = sbr.rel (%p3165) target = $region153
    $region152: #{tpu_custom_call.1} parent=1 // pred_region
      %v3168 = vld [vmem:[#allocation2] sm:$0xff]
      %3169 = vst.msk [vmem:[#allocation32] sm:$0xff] %vm3098, %v3168
      %v3170 = vld [vmem:[#allocation3] sm:$0xff]
      %3172 = vrot.lane.b32.xlu0 %v3170, 32
      %v3173 = vpop.permute.xlu0 %3172
      %vm3175 = vcmask 523520
      %3176 = vst.msk [vmem:[#allocation32] sm:$0xff] %vm3175, %v3173
      %v3177 = vld [vmem:[#allocation4] sm:$0xff]
      %3179 = vrot.lane.b32.xlu0 %v3177, 64
      %v3180 = vpop.permute.xlu0 %3179
      %vm3182 = vcmask 785920
      %3183 = vst.msk [vmem:[#allocation32] sm:$0xff] %vm3182, %v3180
      %v3184 = vld [vmem:[#allocation5] sm:$0xff]
      %3186 = vrot.lane.b32.xlu0 %v3184, 96
      %v3187 = vpop.permute.xlu0 %3186
      %vm3189 = vcmask 851712
      %3190 = vst.msk [vmem:[#allocation32] sm:$0xff] %vm3189, %v3187
      %v3191 = vld [vmem:[#allocation6] sm:$0xff]
      %3193 = vrot.lane.b32.xlu0 %v3191, 104
      %v3194 = vpop.permute.xlu0 %3193
      %vm3196 = vcmask 859968
      %3197 = vst.msk [vmem:[#allocation32] sm:$0xff] %vm3196, %v3194
      %v3198 = vld [vmem:[#allocation7] sm:$0xff]
      %3200 = vrot.lane.b32.xlu0 %v3198, 105
      %v3201 = vpop.permute.xlu0 %3200
      %vm3203 = vcmask 868168
      %3204 = vst.msk [vmem:[#allocation32] sm:$0xff] %vm3203, %v3201
      %vm3205 = vcmask 1048400
      %3206 = vst.msk [vmem:[#allocation32] sm:$0xff] %vm3205, 0.0
    $region153: #{tpu_custom_call.1} parent=1 // pred_fallthru
      _
    // Predicated region
    $region154: #{tpu_custom_call.1} parent=1 // pred_check
      _
    $region155: #{tpu_custom_call.1} parent=1 // pred_check_branch
      %3208 = sbr.rel (0) target = $region157
    $region156: #{tpu_custom_call.1} parent=1 // pred_region
      %s3210 = ssub.s32 128, 128
      %3211 = vsyncadd [#allocation10], %s3210
      %s3213 = sshll.u32 [#allocation32], 4
      %s3214 = int_to_ptr.vmem [resolvable:$true] %s3213
      %3216 = dma.vmem_to_hbm [thread:$0]  %s3214, 128, %s21, [#allocation10]
    $region157: #{tpu_custom_call.1} parent=1 // pred_fallthru
      _
    // Predicated region
    $region158: #{tpu_custom_call.1} parent=1 // pred_check
      _
    $region159: #{tpu_custom_call.1} parent=1 // pred_check_branch
      %3218 = sbr.rel (0) target = $region161
    $region160: #{tpu_custom_call.1} parent=1 // pred_region
      %3219 = dma.done [#allocation10], 128
    $region161: #{tpu_custom_call.1} parent=1 // pred_fallthru
      _
    %3220 = vsyncpa [#allocation9], 1
    %3221 = vsyncpa [#allocation12], 1
    %3222 = vsyncpa [#allocation15], 1
    %3223 = vsyncpa [#allocation18], 1
    %3224 = vsyncpa [#allocation21], 1
    %3225 = vsyncpa [#allocation24], 1
    %3226 = vsyncpa [#allocation27], 1
    %3227 = vsyncpa [#allocation30], 1
    %3228 = vsyncpa [#allocation10], 1

</llo_original>
